<compile_context>
chip_gen: v5e
topology: v5e:2x2
jax: 0.10.0
libtpu: 0.0.40
codegen_flags: <defaults>
</compile_context>

<pallas_src>
import jax
import jax.numpy as jnp
from jax.experimental import pallas as pl
from jax.experimental.pallas import tpu as pltpu

# ----------------------------- configuration ------------------------------
IMG_C, IMG_HW, PATCH = 3, 16, 4
N_PATCH = (IMG_HW // PATCH) ** 2            # 16 image "tokens"
PATCH_DIM = IMG_C * PATCH * PATCH           # 48
V_DIM, V_HEADS, V_MLP = 32, 4, 64           # vision tower
H_DIM, HEADS, MLP = 32, 4, 64               # language model
VOCAB = 64
PROMPT_LEN = 8
MAX_NEW_TOKENS = 4
PREFILL_LEN = N_PATCH + PROMPT_LEN          # 24
S_PAD = 32                                  # static padded sequence length
TEMPERATURE = 0.2
LN_EPS = 1e-5

_VMEM = pl.BlockSpec(memory_space=pltpu.MemorySpace.VMEM)
_SMEM = pl.BlockSpec(memory_space=pltpu.MemorySpace.SMEM)

_BLOCK_KEYS = ("ln1_g", "ln1_b", "qkv_w", "qkv_b", "out_w", "out_b",
               "ln2_g", "ln2_b", "fc1_w", "fc1_b", "fc2_w", "fc2_b")


# ----------------------- in-kernel building blocks -------------------------
def _layernorm(x, g, b):
    mu = jnp.mean(x, axis=-1, keepdims=True)
    var = jnp.mean(jnp.square(x - mu), axis=-1, keepdims=True)
    return (x - mu) * jax.lax.rsqrt(var + LN_EPS) * g + b


def _mha(qkv, mask, n_heads):
    # qkv: (S, 3D) merged slab; heads are static lane slices (no transposes).
    S, three_d = qkv.shape
    D = three_d // 3
    Dh = D // n_heads
    scale = 1.0 / (Dh ** 0.5)
    outs = []
    for h in range(n_heads):                 # static unroll (n_heads = 4)
        q = qkv[:, h * Dh:(h + 1) * Dh] * scale          # scale folded into Q
        k = qkv[:, D + h * Dh:D + (h + 1) * Dh]
        v = qkv[:, 2 * D + h * Dh:2 * D + (h + 1) * Dh]
        s = jax.lax.dot_general(q, k, (((1,), (1,)), ((), ())),
                                preferred_element_type=jnp.float32)
        if mask is not None:
            s = s + mask
        s = s - jnp.max(s, axis=-1, keepdims=True)
        e = jnp.exp(s)
        inv = pl.reciprocal(jnp.sum(e, axis=-1, keepdims=True), approx=True)
        p = e * inv
        outs.append(jnp.dot(p, v, preferred_element_type=jnp.float32))
    return jnp.concatenate(outs, axis=-1)


def _transformer_block(x, bp, mask, n_heads):
    (ln1_g, ln1_b, qkv_w, qkv_b, out_w, out_b,
     ln2_g, ln2_b, fc1_w, fc1_b, fc2_w, fc2_b) = bp
    # pre-LN self-attention
    h = _layernorm(x, ln1_g, ln1_b)
    qkv = jnp.dot(h, qkv_w, preferred_element_type=jnp.float32) + qkv_b
    att = _mha(qkv, mask, n_heads)
    x = x + jnp.dot(att, out_w, preferred_element_type=jnp.float32) + out_b
    # pre-LN MLP
    h = _layernorm(x, ln2_g, ln2_b)
    h = jax.nn.gelu(jnp.dot(h, fc1_w, preferred_element_type=jnp.float32)
                    + fc1_b, approximate=True)
    x = x + jnp.dot(h, fc2_w, preferred_element_type=jnp.float32) + fc2_b
    return x


# ------------------------------ fused kernels ------------------------------
def _vision_projector_kernel(*refs):
    # Fused: patch-embed + pos-emb -> ViT block -> post-LN -> 2-layer projector
    (patch_ref, pw, pb, pos,
     ln1_g, ln1_b, qkv_w, qkv_b, out_w, out_b,
     ln2_g, ln2_b, fc1_w, fc1_b, fc2_w, fc2_b,
     lnp_g, lnp_b, p1w, p1b, p2w, p2b, o_ref) = refs
    x = (jnp.dot(patch_ref[...], pw[...], preferred_element_type=jnp.float32)
         + pb[...] + pos[...])
    bp = (ln1_g[...], ln1_b[...], qkv_w[...], qkv_b[...], out_w[...],
          out_b[...], ln2_g[...], ln2_b[...], fc1_w[...], fc1_b[...],
          fc2_w[...], fc2_b[...])
    x = _transformer_block(x, bp, mask=None, n_heads=V_HEADS)
    x = _layernorm(x, lnp_g[...], lnp_b[...])
    h = jax.nn.gelu(jnp.dot(x, p1w[...], preferred_element_type=jnp.float32)
                    + p1b[...], approximate=True)
    o_ref[...] = (jnp.dot(h, p2w[...], preferred_element_type=jnp.float32)
                  + p2b[...])


def _lm_step_kernel(*refs):
    # Fused: decoder block -> final LN -> head logits of the last valid row.
    (len_ref, seq_ref,
     ln1_g, ln1_b, qkv_w, qkv_b, out_w, out_b,
     ln2_g, ln2_b, fc1_w, fc1_b, fc2_w, fc2_b,
     lnf_g, lnf_b, head_w, head_b, o_ref) = refs
    cur_len = len_ref[0]
    x = seq_ref[...]                                      # (S_PAD, H_DIM)
    S = x.shape[0]

    # causal + key-padding additive mask, built in-kernel (no HBM mask input)
    q_idx = jax.lax.broadcasted_iota(jnp.int32, (S, S), 0)
    k_idx = jax.lax.broadcasted_iota(jnp.int32, (S, S), 1)
    mask = jnp.where((k_idx <= q_idx) & (k_idx < cur_len),
                     0.0, -1e9).astype(jnp.float32)

    bp = (ln1_g[...], ln1_b[...], qkv_w[...], qkv_b[...], out_w[...],
          out_b[...], ln2_g[...], ln2_b[...], fc1_w[...], fc1_b[...],
          fc2_w[...], fc2_b[...])
    x = _transformer_block(x, bp, mask=mask, n_heads=HEADS)
    x = _layernorm(x, lnf_g[...], lnf_b[...])

    # head logits for the last valid position only (one-hot row select)
    row = jax.lax.broadcasted_iota(jnp.int32, (S, 1), 0)
    onehot = (row == cur_len - 1).astype(jnp.float32)
    x_last = jnp.sum(x * onehot, axis=0, keepdims=True)   # (1, H_DIM)
    o_ref[...] = (jnp.dot(x_last, head_w[...],
                          preferred_element_type=jnp.float32) + head_b[...])


# ------------------------------ kernel wrappers ----------------------------
def _block_args(bp):
    return [bp[k] for k in _BLOCK_KEYS]


def _vision_projector(p, patches):
    args = [patches, p["patch_w"], p["patch_b"], p["pos_emb"],
            *_block_args(p["vit"]),
            p["ln_post_g"], p["ln_post_b"],
            p["proj1_w"], p["proj1_b"], p["proj2_w"], p["proj2_b"]]
    return pl.pallas_call(
        _vision_projector_kernel,
        out_shape=jax.ShapeDtypeStruct((N_PATCH, H_DIM), jnp.float32),
        in_specs=[_VMEM] * len(args),
        out_specs=_VMEM,
    )(*args)


def _lm_step(p, seq, cur_len):
    d = p["dec"]
    args = [jnp.asarray(cur_len, dtype=jnp.int32).reshape(1),
            seq, *_block_args(d),
            p["ln_f_g"], p["ln_f_b"], p["head_w"], p["head_b"]]
    return pl.pallas_call(
        _lm_step_kernel,
        out_shape=jax.ShapeDtypeStruct((1, VOCAB), jnp.float32),
        in_specs=[_SMEM] + [_VMEM] * (len(args) - 1),
        out_specs=_VMEM,
    )(*args)


# ------------------------------ host-side glue ------------------------------
def _patchify(img_nchw):
    # NCHW -> (num_patches, C*P*P) row-major patches (PyTorch layout in).
    N, C, Himg, Wimg = img_nchw.shape
    x = img_nchw.reshape(N, C, Himg // PATCH, PATCH, Wimg // PATCH, PATCH)
    x = x.transpose(0, 2, 4, 1, 3, 5)
    x = x.reshape(N * (Himg // PATCH) * (Wimg // PATCH), C * PATCH * PATCH)
    return x.astype(jnp.float32)


def _generate(params, img_nchw, input_ids, sample_key):
    p = params
    # vision tower + multimodal projector: one fused kernel
    img_feats = _vision_projector(p, _patchify(img_nchw))     # (N_PATCH, H_DIM)

    # static padded sequence buffer: [image tokens | prompt tokens | generated]
    txt_emb = jnp.take(p["tok_emb"], input_ids, axis=0)        # (PROMPT_LEN, D)
    seq = jnp.zeros((S_PAD, H_DIM), jnp.float32)
    seq = seq.at[:N_PATCH].set(img_feats)
    seq = seq.at[N_PATCH:PREFILL_LEN].set(txt_emb)
    gen = jnp.zeros((MAX_NEW_TOKENS,), jnp.int32)

    # TODO(synk): a per-layer KV cache (input_output_aliases in-place update)
    # would avoid re-forwarding the 32-token padded buffer each step; at this
    # toy scale the fused full-step kernel is already launch-bound, so it is
    # omitted for simplicity.
    def body(step, carry):
        seq, gen = carry
        cur_len = PREFILL_LEN + step
        logits = _lm_step(p, seq, cur_len)                     # (1, VOCAB)
        nxt = jax.random.categorical(
            jax.random.fold_in(sample_key, step),
            logits[0] / TEMPERATURE).astype(jnp.int32)
        emb = jnp.take(p["tok_emb"], nxt, axis=0)              # (H_DIM,)
        seq = jax.lax.dynamic_update_slice(seq, emb[None, :], (cur_len, 0))
        gen = gen.at[step].set(nxt)
        return seq, gen

    _, gen = jax.lax.fori_loop(0, MAX_NEW_TOKENS, body, (seq, gen))
    return gen


# -------------------------- parameter initialization -----------------------
def init_params(key):
    def w(k, shape, scale=0.02):
        return scale * jax.random.normal(k, shape, jnp.float32)

    keys = iter(jax.random.split(key, 64))

    def block(dim, mlp):
        return {
            "ln1_g": jnp.ones((1, dim), jnp.float32),
            "ln1_b": jnp.zeros((1, dim), jnp.float32),
            "qkv_w": w(next(keys), (dim, 3 * dim)),
            "qkv_b": jnp.zeros((1, 3 * dim), jnp.float32),
            "out_w": w(next(keys), (dim, dim)),
            "out_b": jnp.zeros((1, dim), jnp.float32),
            "ln2_g": jnp.ones((1, dim), jnp.float32),
            "ln2_b": jnp.zeros((1, dim), jnp.float32),
            "fc1_w": w(next(keys), (dim, mlp)),
            "fc1_b": jnp.zeros((1, mlp), jnp.float32),
            "fc2_w": w(next(keys), (mlp, dim)),
            "fc2_b": jnp.zeros((1, dim), jnp.float32),
        }

    return {
        "patch_w": w(next(keys), (PATCH_DIM, V_DIM)),
        "patch_b": jnp.zeros((1, V_DIM), jnp.float32),
        "pos_emb": w(next(keys), (N_PATCH, V_DIM)),
        "vit": block(V_DIM, V_MLP),
        "ln_post_g": jnp.ones((1, V_DIM), jnp.float32),
        "ln_post_b": jnp.zeros((1, V_DIM), jnp.float32),
        "proj1_w": w(next(keys), (V_DIM, H_DIM)),
        "proj1_b": jnp.zeros((1, H_DIM), jnp.float32),
        "proj2_w": w(next(keys), (H_DIM, H_DIM)),
        "proj2_b": jnp.zeros((1, H_DIM), jnp.float32),
        "tok_emb": w(next(keys), (VOCAB, H_DIM)),
        "dec": block(H_DIM, MLP),
        "ln_f_g": jnp.ones((1, H_DIM), jnp.float32),
        "ln_f_b": jnp.zeros((1, H_DIM), jnp.float32),
        "head_w": w(next(keys), (H_DIM, VOCAB)),
        "head_b": jnp.zeros((1, VOCAB), jnp.float32),
    }


# ------------------------------- QLlava model -------------------------------
class QLlavaPallas:
    def __init__(self, params, sample_key):
        self.params = params
        self.sample_key = sample_key
        self._fwd = jax.jit(_generate)        # single jit: no per-step retrace

    def forward(self, img_nchw, input_ids):
        # TODO(synk): tokenizer string decode has no synthetic equivalent;
        # raw generated token ids are returned instead.
        return self._fwd(self.params, img_nchw, input_ids, self.sample_key)


# ----------------------------------- main -----------------------------------
if __name__ == "__main__":
    key = jax.random.PRNGKey(0)
    k_param, k_img, k_ids, k_sample = jax.random.split(key, 4)

    params = init_params(k_param)
    img = jax.random.normal(k_img, (1, IMG_C, IMG_HW, IMG_HW), jnp.float32)
    input_ids = jax.random.randint(k_ids, (PROMPT_LEN,), 0, VOCAB)

    model = QLlavaPallas(params, k_sample)
    out_ids = model.forward(img, input_ids)
    out_ids = jax.block_until_ready(out_ids)
    assert out_ids.shape == (MAX_NEW_TOKENS,)
    print("KERNEL_OK")
</pallas_src>

<mosaic_0001>
module attributes {stable_mosaic.version = 11 : i64} {
  func.func @_vision_projector_kernel(%arg0: memref<16x48xf32, #tpu.memory_space<vmem>>, %arg1: memref<48x32xf32, #tpu.memory_space<vmem>>, %arg2: memref<1x32xf32, #tpu.memory_space<vmem>>, %arg3: memref<16x32xf32, #tpu.memory_space<vmem>>, %arg4: memref<1x32xf32, #tpu.memory_space<vmem>>, %arg5: memref<1x32xf32, #tpu.memory_space<vmem>>, %arg6: memref<32x96xf32, #tpu.memory_space<vmem>>, %arg7: memref<1x96xf32, #tpu.memory_space<vmem>>, %arg8: memref<32x32xf32, #tpu.memory_space<vmem>>, %arg9: memref<1x32xf32, #tpu.memory_space<vmem>>, %arg10: memref<1x32xf32, #tpu.memory_space<vmem>>, %arg11: memref<1x32xf32, #tpu.memory_space<vmem>>, %arg12: memref<32x64xf32, #tpu.memory_space<vmem>>, %arg13: memref<1x64xf32, #tpu.memory_space<vmem>>, %arg14: memref<64x32xf32, #tpu.memory_space<vmem>>, %arg15: memref<1x32xf32, #tpu.memory_space<vmem>>, %arg16: memref<1x32xf32, #tpu.memory_space<vmem>>, %arg17: memref<1x32xf32, #tpu.memory_space<vmem>>, %arg18: memref<32x32xf32, #tpu.memory_space<vmem>>, %arg19: memref<1x32xf32, #tpu.memory_space<vmem>>, %arg20: memref<32x32xf32, #tpu.memory_space<vmem>>, %arg21: memref<1x32xf32, #tpu.memory_space<vmem>>, %arg22: memref<16x32xf32, #tpu.memory_space<vmem>>) attributes {dimension_semantics = [], scalar_prefetch = 0 : i64, scratch_operands = 0 : i64, tpu.core_type = #tpu.core_type<tc>} {
    %c0 = arith.constant 0 : index
    %c0_0 = arith.constant 0 : index
    %0 = vector.load %arg0[%c0, %c0_0] : memref<16x48xf32, #tpu.memory_space<vmem>>, vector<16x48xf32>
    %c0_1 = arith.constant 0 : index
    %c0_2 = arith.constant 0 : index
    %1 = vector.load %arg1[%c0_1, %c0_2] : memref<48x32xf32, #tpu.memory_space<vmem>>, vector<48x32xf32>
    %cst = arith.constant dense<0.000000e+00> : vector<16x32xf32>
    %2 = tpu.matmul %0, %1, %cst {dimension_numbers = #tpu.dot_dimension_numbers<[1], [0], [0], [1], [0, 0, 1, 1], [], []>} : vector<16x48xf32>, vector<48x32xf32>, vector<16x32xf32> -> vector<16x32xf32>
    %c0_3 = arith.constant 0 : index
    %c0_4 = arith.constant 0 : index
    %3 = vector.load %arg2[%c0_3, %c0_4] : memref<1x32xf32, #tpu.memory_space<vmem>>, vector<1x32xf32>
    %4 = vector.broadcast %3 : vector<1x32xf32> to vector<16x32xf32>
    %5 = arith.addf %2, %4 : vector<16x32xf32>
    %c0_5 = arith.constant 0 : index
    %c0_6 = arith.constant 0 : index
    %6 = vector.load %arg3[%c0_5, %c0_6] : memref<16x32xf32, #tpu.memory_space<vmem>>, vector<16x32xf32>
    %7 = arith.addf %5, %6 : vector<16x32xf32>
    %c0_7 = arith.constant 0 : index
    %c0_8 = arith.constant 0 : index
    %8 = vector.load %arg4[%c0_7, %c0_8] : memref<1x32xf32, #tpu.memory_space<vmem>>, vector<1x32xf32>
    %c0_9 = arith.constant 0 : index
    %c0_10 = arith.constant 0 : index
    %9 = vector.load %arg5[%c0_9, %c0_10] : memref<1x32xf32, #tpu.memory_space<vmem>>, vector<1x32xf32>
    %c0_11 = arith.constant 0 : index
    %c0_12 = arith.constant 0 : index
    %10 = vector.load %arg6[%c0_11, %c0_12] : memref<32x96xf32, #tpu.memory_space<vmem>>, vector<32x96xf32>
    %c0_13 = arith.constant 0 : index
    %c0_14 = arith.constant 0 : index
    %11 = vector.load %arg7[%c0_13, %c0_14] : memref<1x96xf32, #tpu.memory_space<vmem>>, vector<1x96xf32>
    %c0_15 = arith.constant 0 : index
    %c0_16 = arith.constant 0 : index
    %12 = vector.load %arg8[%c0_15, %c0_16] : memref<32x32xf32, #tpu.memory_space<vmem>>, vector<32x32xf32>
    %c0_17 = arith.constant 0 : index
    %c0_18 = arith.constant 0 : index
    %13 = vector.load %arg9[%c0_17, %c0_18] : memref<1x32xf32, #tpu.memory_space<vmem>>, vector<1x32xf32>
    %c0_19 = arith.constant 0 : index
    %c0_20 = arith.constant 0 : index
    %14 = vector.load %arg10[%c0_19, %c0_20] : memref<1x32xf32, #tpu.memory_space<vmem>>, vector<1x32xf32>
    %c0_21 = arith.constant 0 : index
    %c0_22 = arith.constant 0 : index
    %15 = vector.load %arg11[%c0_21, %c0_22] : memref<1x32xf32, #tpu.memory_space<vmem>>, vector<1x32xf32>
    %c0_23 = arith.constant 0 : index
    %c0_24 = arith.constant 0 : index
    %16 = vector.load %arg12[%c0_23, %c0_24] : memref<32x64xf32, #tpu.memory_space<vmem>>, vector<32x64xf32>
    %c0_25 = arith.constant 0 : index
    %c0_26 = arith.constant 0 : index
    %17 = vector.load %arg13[%c0_25, %c0_26] : memref<1x64xf32, #tpu.memory_space<vmem>>, vector<1x64xf32>
    %c0_27 = arith.constant 0 : index
    %c0_28 = arith.constant 0 : index
    %18 = vector.load %arg14[%c0_27, %c0_28] : memref<64x32xf32, #tpu.memory_space<vmem>>, vector<64x32xf32>
    %c0_29 = arith.constant 0 : index
    %c0_30 = arith.constant 0 : index
    %19 = vector.load %arg15[%c0_29, %c0_30] : memref<1x32xf32, #tpu.memory_space<vmem>>, vector<1x32xf32>
    %cst_31 = arith.constant dense<0.000000e+00> : vector<16xf32>
    %20 = vector.multi_reduction <add>, %7, %cst_31 [1] : vector<16x32xf32> to vector<16xf32>
    %21 = vector.shape_cast %20 : vector<16xf32> to vector<16x1xf32>
    %cst_32 = arith.constant 3.200000e+01 : f32
    %22 = vector.broadcast %cst_32 : f32 to vector<16x1xf32>
    %23 = arith.divf %21, %22 : vector<16x1xf32>
    %24 = vector.broadcast %23 : vector<16x1xf32> to vector<16x32xf32>
    %25 = arith.subf %7, %24 : vector<16x32xf32>
    %26 = arith.mulf %25, %25 : vector<16x32xf32>
    %cst_33 = arith.constant dense<0.000000e+00> : vector<16xf32>
    %27 = vector.multi_reduction <add>, %26, %cst_33 [1] : vector<16x32xf32> to vector<16xf32>
    %28 = vector.shape_cast %27 : vector<16xf32> to vector<16x1xf32>
    %cst_34 = arith.constant 3.200000e+01 : f32
    %29 = vector.broadcast %cst_34 : f32 to vector<16x1xf32>
    %30 = arith.divf %28, %29 : vector<16x1xf32>
    %31 = vector.broadcast %23 : vector<16x1xf32> to vector<16x32xf32>
    %32 = arith.subf %7, %31 : vector<16x32xf32>
    %cst_35 = arith.constant 9.99999974E-6 : f32
    %33 = vector.broadcast %cst_35 : f32 to vector<16x1xf32>
    %34 = arith.addf %30, %33 : vector<16x1xf32>
    %35 = math.rsqrt %34 : vector<16x1xf32>
    %36 = vector.broadcast %35 : vector<16x1xf32> to vector<16x32xf32>
    %37 = arith.mulf %32, %36 : vector<16x32xf32>
    %38 = vector.broadcast %8 : vector<1x32xf32> to vector<16x32xf32>
    %39 = arith.mulf %37, %38 : vector<16x32xf32>
    %40 = vector.broadcast %9 : vector<1x32xf32> to vector<16x32xf32>
    %41 = arith.addf %39, %40 : vector<16x32xf32>
    %cst_36 = arith.constant dense<0.000000e+00> : vector<16x96xf32>
    %42 = tpu.matmul %41, %10, %cst_36 {dimension_numbers = #tpu.dot_dimension_numbers<[1], [0], [0], [1], [0, 0, 1, 1], [], []>} : vector<16x32xf32>, vector<32x96xf32>, vector<16x96xf32> -> vector<16x96xf32>
    %43 = vector.broadcast %11 : vector<1x96xf32> to vector<16x96xf32>
    %44 = arith.addf %42, %43 : vector<16x96xf32>
    %45 = vector.extract_strided_slice %44 {offsets = [0, 0], sizes = [16, 8], strides = [1, 1]} : vector<16x96xf32> to vector<16x8xf32>
    %cst_37 = arith.constant 0.353553385 : f32
    %46 = vector.broadcast %cst_37 : f32 to vector<16x8xf32>
    %47 = arith.mulf %45, %46 : vector<16x8xf32>
    %48 = vector.extract_strided_slice %44 {offsets = [0, 32], sizes = [16, 8], strides = [1, 1]} : vector<16x96xf32> to vector<16x8xf32>
    %49 = vector.extract_strided_slice %44 {offsets = [0, 64], sizes = [16, 8], strides = [1, 1]} : vector<16x96xf32> to vector<16x8xf32>
    %cst_38 = arith.constant dense<0.000000e+00> : vector<16x16xf32>
    %50 = tpu.matmul %47, %48, %cst_38 {dimension_numbers = #tpu.dot_dimension_numbers<[1], [1], [0], [0], [0, 0, 1, 0], [], []>} : vector<16x8xf32>, vector<16x8xf32>, vector<16x16xf32> -> vector<16x16xf32>
    %cst_39 = arith.constant dense<0xFF800000> : vector<16xf32>
    %51 = vector.multi_reduction <maximumf>, %50, %cst_39 [1] : vector<16x16xf32> to vector<16xf32>
    %52 = vector.shape_cast %51 : vector<16xf32> to vector<16x1xf32>
    %53 = vector.broadcast %52 : vector<16x1xf32> to vector<16x16xf32>
    %54 = arith.subf %50, %53 : vector<16x16xf32>
    %55 = math.exp %54 : vector<16x16xf32>
    %cst_40 = arith.constant dense<0.000000e+00> : vector<16xf32>
    %56 = vector.multi_reduction <add>, %55, %cst_40 [1] : vector<16x16xf32> to vector<16xf32>
    %57 = vector.shape_cast %56 : vector<16xf32> to vector<16x1xf32>
    %58 = tpu.reciprocal %57 {approx = true} : vector<16x1xf32> -> vector<16x1xf32>
    %59 = vector.broadcast %58 : vector<16x1xf32> to vector<16x16xf32>
    %60 = arith.mulf %55, %59 : vector<16x16xf32>
    %cst_41 = arith.constant dense<0.000000e+00> : vector<16x8xf32>
    %61 = tpu.matmul %60, %49, %cst_41 {dimension_numbers = #tpu.dot_dimension_numbers<[1], [0], [0], [1], [0, 0, 1, 1], [], []>} : vector<16x16xf32>, vector<16x8xf32>, vector<16x8xf32> -> vector<16x8xf32>
    %62 = vector.extract_strided_slice %44 {offsets = [0, 8], sizes = [16, 8], strides = [1, 1]} : vector<16x96xf32> to vector<16x8xf32>
    %cst_42 = arith.constant 0.353553385 : f32
    %63 = vector.broadcast %cst_42 : f32 to vector<16x8xf32>
    %64 = arith.mulf %62, %63 : vector<16x8xf32>
    %65 = vector.extract_strided_slice %44 {offsets = [0, 40], sizes = [16, 8], strides = [1, 1]} : vector<16x96xf32> to vector<16x8xf32>
    %66 = vector.extract_strided_slice %44 {offsets = [0, 72], sizes = [16, 8], strides = [1, 1]} : vector<16x96xf32> to vector<16x8xf32>
    %cst_43 = arith.constant dense<0.000000e+00> : vector<16x16xf32>
    %67 = tpu.matmul %64, %65, %cst_43 {dimension_numbers = #tpu.dot_dimension_numbers<[1], [1], [0], [0], [0, 0, 1, 0], [], []>} : vector<16x8xf32>, vector<16x8xf32>, vector<16x16xf32> -> vector<16x16xf32>
    %cst_44 = arith.constant dense<0xFF800000> : vector<16xf32>
    %68 = vector.multi_reduction <maximumf>, %67, %cst_44 [1] : vector<16x16xf32> to vector<16xf32>
    %69 = vector.shape_cast %68 : vector<16xf32> to vector<16x1xf32>
    %70 = vector.broadcast %69 : vector<16x1xf32> to vector<16x16xf32>
    %71 = arith.subf %67, %70 : vector<16x16xf32>
    %72 = math.exp %71 : vector<16x16xf32>
    %cst_45 = arith.constant dense<0.000000e+00> : vector<16xf32>
    %73 = vector.multi_reduction <add>, %72, %cst_45 [1] : vector<16x16xf32> to vector<16xf32>
    %74 = vector.shape_cast %73 : vector<16xf32> to vector<16x1xf32>
    %75 = tpu.reciprocal %74 {approx = true} : vector<16x1xf32> -> vector<16x1xf32>
    %76 = vector.broadcast %75 : vector<16x1xf32> to vector<16x16xf32>
    %77 = arith.mulf %72, %76 : vector<16x16xf32>
    %cst_46 = arith.constant dense<0.000000e+00> : vector<16x8xf32>
    %78 = tpu.matmul %77, %66, %cst_46 {dimension_numbers = #tpu.dot_dimension_numbers<[1], [0], [0], [1], [0, 0, 1, 1], [], []>} : vector<16x16xf32>, vector<16x8xf32>, vector<16x8xf32> -> vector<16x8xf32>
    %79 = vector.extract_strided_slice %44 {offsets = [0, 16], sizes = [16, 8], strides = [1, 1]} : vector<16x96xf32> to vector<16x8xf32>
    %cst_47 = arith.constant 0.353553385 : f32
    %80 = vector.broadcast %cst_47 : f32 to vector<16x8xf32>
    %81 = arith.mulf %79, %80 : vector<16x8xf32>
    %82 = vector.extract_strided_slice %44 {offsets = [0, 48], sizes = [16, 8], strides = [1, 1]} : vector<16x96xf32> to vector<16x8xf32>
    %83 = vector.extract_strided_slice %44 {offsets = [0, 80], sizes = [16, 8], strides = [1, 1]} : vector<16x96xf32> to vector<16x8xf32>
    %cst_48 = arith.constant dense<0.000000e+00> : vector<16x16xf32>
    %84 = tpu.matmul %81, %82, %cst_48 {dimension_numbers = #tpu.dot_dimension_numbers<[1], [1], [0], [0], [0, 0, 1, 0], [], []>} : vector<16x8xf32>, vector<16x8xf32>, vector<16x16xf32> -> vector<16x16xf32>
    %cst_49 = arith.constant dense<0xFF800000> : vector<16xf32>
    %85 = vector.multi_reduction <maximumf>, %84, %cst_49 [1] : vector<16x16xf32> to vector<16xf32>
    %86 = vector.shape_cast %85 : vector<16xf32> to vector<16x1xf32>
    %87 = vector.broadcast %86 : vector<16x1xf32> to vector<16x16xf32>
    %88 = arith.subf %84, %87 : vector<16x16xf32>
    %89 = math.exp %88 : vector<16x16xf32>
    %cst_50 = arith.constant dense<0.000000e+00> : vector<16xf32>
    %90 = vector.multi_reduction <add>, %89, %cst_50 [1] : vector<16x16xf32> to vector<16xf32>
    %91 = vector.shape_cast %90 : vector<16xf32> to vector<16x1xf32>
    %92 = tpu.reciprocal %91 {approx = true} : vector<16x1xf32> -> vector<16x1xf32>
    %93 = vector.broadcast %92 : vector<16x1xf32> to vector<16x16xf32>
    %94 = arith.mulf %89, %93 : vector<16x16xf32>
    %cst_51 = arith.constant dense<0.000000e+00> : vector<16x8xf32>
    %95 = tpu.matmul %94, %83, %cst_51 {dimension_numbers = #tpu.dot_dimension_numbers<[1], [0], [0], [1], [0, 0, 1, 1], [], []>} : vector<16x16xf32>, vector<16x8xf32>, vector<16x8xf32> -> vector<16x8xf32>
    %96 = vector.extract_strided_slice %44 {offsets = [0, 24], sizes = [16, 8], strides = [1, 1]} : vector<16x96xf32> to vector<16x8xf32>
    %cst_52 = arith.constant 0.353553385 : f32
    %97 = vector.broadcast %cst_52 : f32 to vector<16x8xf32>
    %98 = arith.mulf %96, %97 : vector<16x8xf32>
    %99 = vector.extract_strided_slice %44 {offsets = [0, 56], sizes = [16, 8], strides = [1, 1]} : vector<16x96xf32> to vector<16x8xf32>
    %100 = vector.extract_strided_slice %44 {offsets = [0, 88], sizes = [16, 8], strides = [1, 1]} : vector<16x96xf32> to vector<16x8xf32>
    %cst_53 = arith.constant dense<0.000000e+00> : vector<16x16xf32>
    %101 = tpu.matmul %98, %99, %cst_53 {dimension_numbers = #tpu.dot_dimension_numbers<[1], [1], [0], [0], [0, 0, 1, 0], [], []>} : vector<16x8xf32>, vector<16x8xf32>, vector<16x16xf32> -> vector<16x16xf32>
    %cst_54 = arith.constant dense<0xFF800000> : vector<16xf32>
    %102 = vector.multi_reduction <maximumf>, %101, %cst_54 [1] : vector<16x16xf32> to vector<16xf32>
    %103 = vector.shape_cast %102 : vector<16xf32> to vector<16x1xf32>
    %104 = vector.broadcast %103 : vector<16x1xf32> to vector<16x16xf32>
    %105 = arith.subf %101, %104 : vector<16x16xf32>
    %106 = math.exp %105 : vector<16x16xf32>
    %cst_55 = arith.constant dense<0.000000e+00> : vector<16xf32>
    %107 = vector.multi_reduction <add>, %106, %cst_55 [1] : vector<16x16xf32> to vector<16xf32>
    %108 = vector.shape_cast %107 : vector<16xf32> to vector<16x1xf32>
    %109 = tpu.reciprocal %108 {approx = true} : vector<16x1xf32> -> vector<16x1xf32>
    %110 = vector.broadcast %109 : vector<16x1xf32> to vector<16x16xf32>
    %111 = arith.mulf %106, %110 : vector<16x16xf32>
    %cst_56 = arith.constant dense<0.000000e+00> : vector<16x8xf32>
    %112 = tpu.matmul %111, %100, %cst_56 {dimension_numbers = #tpu.dot_dimension_numbers<[1], [0], [0], [1], [0, 0, 1, 1], [], []>} : vector<16x16xf32>, vector<16x8xf32>, vector<16x8xf32> -> vector<16x8xf32>
    %113 = tpu.concatenate %61, %78, %95, %112 in 1 : vector<16x8xf32>, vector<16x8xf32>, vector<16x8xf32>, vector<16x8xf32> -> vector<16x32xf32>
    %cst_57 = arith.constant dense<0.000000e+00> : vector<16x32xf32>
    %114 = tpu.matmul %113, %12, %cst_57 {dimension_numbers = #tpu.dot_dimension_numbers<[1], [0], [0], [1], [0, 0, 1, 1], [], []>} : vector<16x32xf32>, vector<32x32xf32>, vector<16x32xf32> -> vector<16x32xf32>
    %115 = arith.addf %7, %114 : vector<16x32xf32>
    %116 = vector.broadcast %13 : vector<1x32xf32> to vector<16x32xf32>
    %117 = arith.addf %115, %116 : vector<16x32xf32>
    %cst_58 = arith.constant dense<0.000000e+00> : vector<16xf32>
    %118 = vector.multi_reduction <add>, %117, %cst_58 [1] : vector<16x32xf32> to vector<16xf32>
    %119 = vector.shape_cast %118 : vector<16xf32> to vector<16x1xf32>
    %cst_59 = arith.constant 3.200000e+01 : f32
    %120 = vector.broadcast %cst_59 : f32 to vector<16x1xf32>
    %121 = arith.divf %119, %120 : vector<16x1xf32>
    %122 = vector.broadcast %121 : vector<16x1xf32> to vector<16x32xf32>
    %123 = arith.subf %117, %122 : vector<16x32xf32>
    %124 = arith.mulf %123, %123 : vector<16x32xf32>
    %cst_60 = arith.constant dense<0.000000e+00> : vector<16xf32>
    %125 = vector.multi_reduction <add>, %124, %cst_60 [1] : vector<16x32xf32> to vector<16xf32>
    %126 = vector.shape_cast %125 : vector<16xf32> to vector<16x1xf32>
    %cst_61 = arith.constant 3.200000e+01 : f32
    %127 = vector.broadcast %cst_61 : f32 to vector<16x1xf32>
    %128 = arith.divf %126, %127 : vector<16x1xf32>
    %129 = vector.broadcast %121 : vector<16x1xf32> to vector<16x32xf32>
    %130 = arith.subf %117, %129 : vector<16x32xf32>
    %cst_62 = arith.constant 9.99999974E-6 : f32
    %131 = vector.broadcast %cst_62 : f32 to vector<16x1xf32>
    %132 = arith.addf %128, %131 : vector<16x1xf32>
    %133 = math.rsqrt %132 : vector<16x1xf32>
    %134 = vector.broadcast %133 : vector<16x1xf32> to vector<16x32xf32>
    %135 = arith.mulf %130, %134 : vector<16x32xf32>
    %136 = vector.broadcast %14 : vector<1x32xf32> to vector<16x32xf32>
    %137 = arith.mulf %135, %136 : vector<16x32xf32>
    %138 = vector.broadcast %15 : vector<1x32xf32> to vector<16x32xf32>
    %139 = arith.addf %137, %138 : vector<16x32xf32>
    %cst_63 = arith.constant dense<0.000000e+00> : vector<16x64xf32>
    %140 = tpu.matmul %139, %16, %cst_63 {dimension_numbers = #tpu.dot_dimension_numbers<[1], [0], [0], [1], [0, 0, 1, 1], [], []>} : vector<16x32xf32>, vector<32x64xf32>, vector<16x64xf32> -> vector<16x64xf32>
    %141 = vector.broadcast %17 : vector<1x64xf32> to vector<16x64xf32>
    %142 = arith.addf %140, %141 : vector<16x64xf32>
    %143 = arith.mulf %142, %142 : vector<16x64xf32>
    %144 = arith.mulf %142, %143 : vector<16x64xf32>
    %cst_64 = arith.constant 4.471500e-02 : f32
    %145 = vector.broadcast %cst_64 : f32 to vector<16x64xf32>
    %146 = arith.mulf %145, %144 : vector<16x64xf32>
    %147 = arith.addf %142, %146 : vector<16x64xf32>
    %cst_65 = arith.constant 0.797884583 : f32
    %148 = vector.broadcast %cst_65 : f32 to vector<16x64xf32>
    %149 = arith.mulf %148, %147 : vector<16x64xf32>
    %150 = math.tanh %149 : vector<16x64xf32>
    %cst_66 = arith.constant 1.000000e+00 : f32
    %151 = vector.broadcast %cst_66 : f32 to vector<16x64xf32>
    %152 = arith.addf %151, %150 : vector<16x64xf32>
    %cst_67 = arith.constant 5.000000e-01 : f32
    %153 = vector.broadcast %cst_67 : f32 to vector<16x64xf32>
    %154 = arith.mulf %153, %152 : vector<16x64xf32>
    %155 = arith.mulf %142, %154 : vector<16x64xf32>
    %cst_68 = arith.constant dense<0.000000e+00> : vector<16x32xf32>
    %156 = tpu.matmul %155, %18, %cst_68 {dimension_numbers = #tpu.dot_dimension_numbers<[1], [0], [0], [1], [0, 0, 1, 1], [], []>} : vector<16x64xf32>, vector<64x32xf32>, vector<16x32xf32> -> vector<16x32xf32>
    %157 = arith.addf %117, %156 : vector<16x32xf32>
    %158 = vector.broadcast %19 : vector<1x32xf32> to vector<16x32xf32>
    %159 = arith.addf %157, %158 : vector<16x32xf32>
    %c0_69 = arith.constant 0 : index
    %c0_70 = arith.constant 0 : index
    %160 = vector.load %arg16[%c0_69, %c0_70] : memref<1x32xf32, #tpu.memory_space<vmem>>, vector<1x32xf32>
    %c0_71 = arith.constant 0 : index
    %c0_72 = arith.constant 0 : index
    %161 = vector.load %arg17[%c0_71, %c0_72] : memref<1x32xf32, #tpu.memory_space<vmem>>, vector<1x32xf32>
    %cst_73 = arith.constant dense<0.000000e+00> : vector<16xf32>
    %162 = vector.multi_reduction <add>, %159, %cst_73 [1] : vector<16x32xf32> to vector<16xf32>
    %163 = vector.shape_cast %162 : vector<16xf32> to vector<16x1xf32>
    %cst_74 = arith.constant 3.200000e+01 : f32
    %164 = vector.broadcast %cst_74 : f32 to vector<16x1xf32>
    %165 = arith.divf %163, %164 : vector<16x1xf32>
    %166 = vector.broadcast %165 : vector<16x1xf32> to vector<16x32xf32>
    %167 = arith.subf %159, %166 : vector<16x32xf32>
    %168 = arith.mulf %167, %167 : vector<16x32xf32>
    %cst_75 = arith.constant dense<0.000000e+00> : vector<16xf32>
    %169 = vector.multi_reduction <add>, %168, %cst_75 [1] : vector<16x32xf32> to vector<16xf32>
    %170 = vector.shape_cast %169 : vector<16xf32> to vector<16x1xf32>
    %cst_76 = arith.constant 3.200000e+01 : f32
    %171 = vector.broadcast %cst_76 : f32 to vector<16x1xf32>
    %172 = arith.divf %170, %171 : vector<16x1xf32>
    %173 = vector.broadcast %165 : vector<16x1xf32> to vector<16x32xf32>
    %174 = arith.subf %159, %173 : vector<16x32xf32>
    %cst_77 = arith.constant 9.99999974E-6 : f32
    %175 = vector.broadcast %cst_77 : f32 to vector<16x1xf32>
    %176 = arith.addf %172, %175 : vector<16x1xf32>
    %177 = math.rsqrt %176 : vector<16x1xf32>
    %178 = vector.broadcast %177 : vector<16x1xf32> to vector<16x32xf32>
    %179 = arith.mulf %174, %178 : vector<16x32xf32>
    %180 = vector.broadcast %160 : vector<1x32xf32> to vector<16x32xf32>
    %181 = arith.mulf %179, %180 : vector<16x32xf32>
    %182 = vector.broadcast %161 : vector<1x32xf32> to vector<16x32xf32>
    %183 = arith.addf %181, %182 : vector<16x32xf32>
    %c0_78 = arith.constant 0 : index
    %c0_79 = arith.constant 0 : index
    %184 = vector.load %arg18[%c0_78, %c0_79] : memref<32x32xf32, #tpu.memory_space<vmem>>, vector<32x32xf32>
    %cst_80 = arith.constant dense<0.000000e+00> : vector<16x32xf32>
    %185 = tpu.matmul %183, %184, %cst_80 {dimension_numbers = #tpu.dot_dimension_numbers<[1], [0], [0], [1], [0, 0, 1, 1], [], []>} : vector<16x32xf32>, vector<32x32xf32>, vector<16x32xf32> -> vector<16x32xf32>
    %c0_81 = arith.constant 0 : index
    %c0_82 = arith.constant 0 : index
    %186 = vector.load %arg19[%c0_81, %c0_82] : memref<1x32xf32, #tpu.memory_space<vmem>>, vector<1x32xf32>
    %187 = vector.broadcast %186 : vector<1x32xf32> to vector<16x32xf32>
    %188 = arith.addf %185, %187 : vector<16x32xf32>
    %189 = arith.mulf %188, %188 : vector<16x32xf32>
    %190 = arith.mulf %188, %189 : vector<16x32xf32>
    %cst_83 = arith.constant 4.471500e-02 : f32
    %191 = vector.broadcast %cst_83 : f32 to vector<16x32xf32>
    %192 = arith.mulf %191, %190 : vector<16x32xf32>
    %193 = arith.addf %188, %192 : vector<16x32xf32>
    %cst_84 = arith.constant 0.797884583 : f32
    %194 = vector.broadcast %cst_84 : f32 to vector<16x32xf32>
    %195 = arith.mulf %194, %193 : vector<16x32xf32>
    %196 = math.tanh %195 : vector<16x32xf32>
    %cst_85 = arith.constant 1.000000e+00 : f32
    %197 = vector.broadcast %cst_85 : f32 to vector<16x32xf32>
    %198 = arith.addf %197, %196 : vector<16x32xf32>
    %cst_86 = arith.constant 5.000000e-01 : f32
    %199 = vector.broadcast %cst_86 : f32 to vector<16x32xf32>
    %200 = arith.mulf %199, %198 : vector<16x32xf32>
    %201 = arith.mulf %188, %200 : vector<16x32xf32>
    %c0_87 = arith.constant 0 : index
    %c0_88 = arith.constant 0 : index
    %202 = vector.load %arg20[%c0_87, %c0_88] : memref<32x32xf32, #tpu.memory_space<vmem>>, vector<32x32xf32>
    %cst_89 = arith.constant dense<0.000000e+00> : vector<16x32xf32>
    %203 = tpu.matmul %201, %202, %cst_89 {dimension_numbers = #tpu.dot_dimension_numbers<[1], [0], [0], [1], [0, 0, 1, 1], [], []>} : vector<16x32xf32>, vector<32x32xf32>, vector<16x32xf32> -> vector<16x32xf32>
    %c0_90 = arith.constant 0 : index
    %c0_91 = arith.constant 0 : index
    %204 = vector.load %arg21[%c0_90, %c0_91] : memref<1x32xf32, #tpu.memory_space<vmem>>, vector<1x32xf32>
    %205 = vector.broadcast %204 : vector<1x32xf32> to vector<16x32xf32>
    %206 = arith.addf %203, %205 : vector<16x32xf32>
    %c0_92 = arith.constant 0 : index
    %c0_93 = arith.constant 0 : index
    %207 = vector.load %arg22[%c0_92, %c0_93] : memref<16x32xf32, #tpu.memory_space<vmem>>, vector<16x32xf32>
    tpu.vector_store %arg22[%c0_92, %c0_93], %206 {strides = array<i32>} : memref<16x32xf32, #tpu.memory_space<vmem>>, vector<16x32xf32>,
    return
  }
}

module attributes {stable_mosaic.version = 11 : i64} {
  func.func @_lm_step_kernel(%arg0: memref<1xi32, #tpu.memory_space<smem>>, %arg1: memref<32x32xf32, #tpu.memory_space<vmem>>, %arg2: memref<1x32xf32, #tpu.memory_space<vmem>>, %arg3: memref<1x32xf32, #tpu.memory_space<vmem>>, %arg4: memref<32x96xf32, #tpu.memory_space<vmem>>, %arg5: memref<1x96xf32, #tpu.memory_space<vmem>>, %arg6: memref<32x32xf32, #tpu.memory_space<vmem>>, %arg7: memref<1x32xf32, #tpu.memory_space<vmem>>, %arg8: memref<1x32xf32, #tpu.memory_space<vmem>>, %arg9: memref<1x32xf32, #tpu.memory_space<vmem>>, %arg10: memref<32x64xf32, #tpu.memory_space<vmem>>, %arg11: memref<1x64xf32, #tpu.memory_space<vmem>>, %arg12: memref<64x32xf32, #tpu.memory_space<vmem>>, %arg13: memref<1x32xf32, #tpu.memory_space<vmem>>, %arg14: memref<1x32xf32, #tpu.memory_space<vmem>>, %arg15: memref<1x32xf32, #tpu.memory_space<vmem>>, %arg16: memref<32x64xf32, #tpu.memory_space<vmem>>, %arg17: memref<1x64xf32, #tpu.memory_space<vmem>>, %arg18: memref<1x64xf32, #tpu.memory_space<vmem>>) attributes {dimension_semantics = [], scalar_prefetch = 0 : i64, scratch_operands = 0 : i64, tpu.core_type = #tpu.core_type<tc>} {
    %c0 = arith.constant 0 : index
    %0 = memref.load %arg0[%c0] : memref<1xi32, #tpu.memory_space<smem>>
    %c0_0 = arith.constant 0 : index
    %c0_1 = arith.constant 0 : index
    %1 = vector.load %arg1[%c0_0, %c0_1] : memref<32x32xf32, #tpu.memory_space<vmem>>, vector<32x32xf32>
    %2 = tpu.iota {dimensions = array<i32: 0>} : vector<32x32xi32>
    %3 = tpu.iota {dimensions = array<i32: 1>} : vector<32x32xi32>
    %4 = arith.cmpi sle, %3, %2 : vector<32x32xi32>
    %5 = vector.broadcast %0 : i32 to vector<32x32xi32>
    %6 = arith.cmpi slt, %3, %5 : vector<32x32xi32>
    %7 = arith.andi %4, %6 : vector<32x32xi1>
    %cst = arith.constant 0.000000e+00 : f32
    %cst_2 = arith.constant -1.000000e+09 : f32
    %8 = vector.broadcast %cst : f32 to vector<32x32xf32>
    %9 = vector.broadcast %cst_2 : f32 to vector<32x32xf32>
    %10 = arith.select %7, %8, %9 : vector<32x32xi1>, vector<32x32xf32>
    %c0_3 = arith.constant 0 : index
    %c0_4 = arith.constant 0 : index
    %11 = vector.load %arg2[%c0_3, %c0_4] : memref<1x32xf32, #tpu.memory_space<vmem>>, vector<1x32xf32>
    %c0_5 = arith.constant 0 : index
    %c0_6 = arith.constant 0 : index
    %12 = vector.load %arg3[%c0_5, %c0_6] : memref<1x32xf32, #tpu.memory_space<vmem>>, vector<1x32xf32>
    %c0_7 = arith.constant 0 : index
    %c0_8 = arith.constant 0 : index
    %13 = vector.load %arg4[%c0_7, %c0_8] : memref<32x96xf32, #tpu.memory_space<vmem>>, vector<32x96xf32>
    %c0_9 = arith.constant 0 : index
    %c0_10 = arith.constant 0 : index
    %14 = vector.load %arg5[%c0_9, %c0_10] : memref<1x96xf32, #tpu.memory_space<vmem>>, vector<1x96xf32>
    %c0_11 = arith.constant 0 : index
    %c0_12 = arith.constant 0 : index
    %15 = vector.load %arg6[%c0_11, %c0_12] : memref<32x32xf32, #tpu.memory_space<vmem>>, vector<32x32xf32>
    %c0_13 = arith.constant 0 : index
    %c0_14 = arith.constant 0 : index
    %16 = vector.load %arg7[%c0_13, %c0_14] : memref<1x32xf32, #tpu.memory_space<vmem>>, vector<1x32xf32>
    %c0_15 = arith.constant 0 : index
    %c0_16 = arith.constant 0 : index
    %17 = vector.load %arg8[%c0_15, %c0_16] : memref<1x32xf32, #tpu.memory_space<vmem>>, vector<1x32xf32>
    %c0_17 = arith.constant 0 : index
    %c0_18 = arith.constant 0 : index
    %18 = vector.load %arg9[%c0_17, %c0_18] : memref<1x32xf32, #tpu.memory_space<vmem>>, vector<1x32xf32>
    %c0_19 = arith.constant 0 : index
    %c0_20 = arith.constant 0 : index
    %19 = vector.load %arg10[%c0_19, %c0_20] : memref<32x64xf32, #tpu.memory_space<vmem>>, vector<32x64xf32>
    %c0_21 = arith.constant 0 : index
    %c0_22 = arith.constant 0 : index
    %20 = vector.load %arg11[%c0_21, %c0_22] : memref<1x64xf32, #tpu.memory_space<vmem>>, vector<1x64xf32>
    %c0_23 = arith.constant 0 : index
    %c0_24 = arith.constant 0 : index
    %21 = vector.load %arg12[%c0_23, %c0_24] : memref<64x32xf32, #tpu.memory_space<vmem>>, vector<64x32xf32>
    %c0_25 = arith.constant 0 : index
    %c0_26 = arith.constant 0 : index
    %22 = vector.load %arg13[%c0_25, %c0_26] : memref<1x32xf32, #tpu.memory_space<vmem>>, vector<1x32xf32>
    %cst_27 = arith.constant dense<0.000000e+00> : vector<32xf32>
    %23 = vector.multi_reduction <add>, %1, %cst_27 [1] : vector<32x32xf32> to vector<32xf32>
    %24 = vector.shape_cast %23 : vector<32xf32> to vector<32x1xf32>
    %cst_28 = arith.constant 3.200000e+01 : f32
    %25 = vector.broadcast %cst_28 : f32 to vector<32x1xf32>
    %26 = arith.divf %24, %25 : vector<32x1xf32>
    %27 = vector.broadcast %26 : vector<32x1xf32> to vector<32x32xf32>
    %28 = arith.subf %1, %27 : vector<32x32xf32>
    %29 = arith.mulf %28, %28 : vector<32x32xf32>
    %cst_29 = arith.constant dense<0.000000e+00> : vector<32xf32>
    %30 = vector.multi_reduction <add>, %29, %cst_29 [1] : vector<32x32xf32> to vector<32xf32>
    %31 = vector.shape_cast %30 : vector<32xf32> to vector<32x1xf32>
    %cst_30 = arith.constant 3.200000e+01 : f32
    %32 = vector.broadcast %cst_30 : f32 to vector<32x1xf32>
    %33 = arith.divf %31, %32 : vector<32x1xf32>
    %34 = vector.broadcast %26 : vector<32x1xf32> to vector<32x32xf32>
    %35 = arith.subf %1, %34 : vector<32x32xf32>
    %cst_31 = arith.constant 9.99999974E-6 : f32
    %36 = vector.broadcast %cst_31 : f32 to vector<32x1xf32>
    %37 = arith.addf %33, %36 : vector<32x1xf32>
    %38 = math.rsqrt %37 : vector<32x1xf32>
    %39 = vector.broadcast %38 : vector<32x1xf32> to vector<32x32xf32>
    %40 = arith.mulf %35, %39 : vector<32x32xf32>
    %41 = vector.broadcast %11 : vector<1x32xf32> to vector<32x32xf32>
    %42 = arith.mulf %40, %41 : vector<32x32xf32>
    %43 = vector.broadcast %12 : vector<1x32xf32> to vector<32x32xf32>
    %44 = arith.addf %42, %43 : vector<32x32xf32>
    %cst_32 = arith.constant dense<0.000000e+00> : vector<32x96xf32>
    %45 = tpu.matmul %44, %13, %cst_32 {dimension_numbers = #tpu.dot_dimension_numbers<[1], [0], [0], [1], [0, 0, 1, 1], [], []>} : vector<32x32xf32>, vector<32x96xf32>, vector<32x96xf32> -> vector<32x96xf32>
    %46 = vector.broadcast %14 : vector<1x96xf32> to vector<32x96xf32>
    %47 = arith.addf %45, %46 : vector<32x96xf32>
    %48 = vector.extract_strided_slice %47 {offsets = [0, 0], sizes = [32, 8], strides = [1, 1]} : vector<32x96xf32> to vector<32x8xf32>
    %cst_33 = arith.constant 0.353553385 : f32
    %49 = vector.broadcast %cst_33 : f32 to vector<32x8xf32>
    %50 = arith.mulf %48, %49 : vector<32x8xf32>
    %51 = vector.extract_strided_slice %47 {offsets = [0, 32], sizes = [32, 8], strides = [1, 1]} : vector<32x96xf32> to vector<32x8xf32>
    %52 = vector.extract_strided_slice %47 {offsets = [0, 64], sizes = [32, 8], strides = [1, 1]} : vector<32x96xf32> to vector<32x8xf32>
    %cst_34 = arith.constant dense<0.000000e+00> : vector<32x32xf32>
    %53 = tpu.matmul %50, %51, %cst_34 {dimension_numbers = #tpu.dot_dimension_numbers<[1], [1], [0], [0], [0, 0, 1, 0], [], []>} : vector<32x8xf32>, vector<32x8xf32>, vector<32x32xf32> -> vector<32x32xf32>
    %54 = arith.addf %53, %10 : vector<32x32xf32>
    %cst_35 = arith.constant dense<0xFF800000> : vector<32xf32>
    %55 = vector.multi_reduction <maximumf>, %54, %cst_35 [1] : vector<32x32xf32> to vector<32xf32>
    %56 = vector.shape_cast %55 : vector<32xf32> to vector<32x1xf32>
    %57 = vector.broadcast %56 : vector<32x1xf32> to vector<32x32xf32>
    %58 = arith.subf %54, %57 : vector<32x32xf32>
    %59 = math.exp %58 : vector<32x32xf32>
    %cst_36 = arith.constant dense<0.000000e+00> : vector<32xf32>
    %60 = vector.multi_reduction <add>, %59, %cst_36 [1] : vector<32x32xf32> to vector<32xf32>
    %61 = vector.shape_cast %60 : vector<32xf32> to vector<32x1xf32>
    %62 = tpu.reciprocal %61 {approx = true} : vector<32x1xf32> -> vector<32x1xf32>
    %63 = vector.broadcast %62 : vector<32x1xf32> to vector<32x32xf32>
    %64 = arith.mulf %59, %63 : vector<32x32xf32>
    %cst_37 = arith.constant dense<0.000000e+00> : vector<32x8xf32>
    %65 = tpu.matmul %64, %52, %cst_37 {dimension_numbers = #tpu.dot_dimension_numbers<[1], [0], [0], [1], [0, 0, 1, 1], [], []>} : vector<32x32xf32>, vector<32x8xf32>, vector<32x8xf32> -> vector<32x8xf32>
    %66 = vector.extract_strided_slice %47 {offsets = [0, 8], sizes = [32, 8], strides = [1, 1]} : vector<32x96xf32> to vector<32x8xf32>
    %cst_38 = arith.constant 0.353553385 : f32
    %67 = vector.broadcast %cst_38 : f32 to vector<32x8xf32>
    %68 = arith.mulf %66, %67 : vector<32x8xf32>
    %69 = vector.extract_strided_slice %47 {offsets = [0, 40], sizes = [32, 8], strides = [1, 1]} : vector<32x96xf32> to vector<32x8xf32>
    %70 = vector.extract_strided_slice %47 {offsets = [0, 72], sizes = [32, 8], strides = [1, 1]} : vector<32x96xf32> to vector<32x8xf32>
    %cst_39 = arith.constant dense<0.000000e+00> : vector<32x32xf32>
    %71 = tpu.matmul %68, %69, %cst_39 {dimension_numbers = #tpu.dot_dimension_numbers<[1], [1], [0], [0], [0, 0, 1, 0], [], []>} : vector<32x8xf32>, vector<32x8xf32>, vector<32x32xf32> -> vector<32x32xf32>
    %72 = arith.addf %71, %10 : vector<32x32xf32>
    %cst_40 = arith.constant dense<0xFF800000> : vector<32xf32>
    %73 = vector.multi_reduction <maximumf>, %72, %cst_40 [1] : vector<32x32xf32> to vector<32xf32>
    %74 = vector.shape_cast %73 : vector<32xf32> to vector<32x1xf32>
    %75 = vector.broadcast %74 : vector<32x1xf32> to vector<32x32xf32>
    %76 = arith.subf %72, %75 : vector<32x32xf32>
    %77 = math.exp %76 : vector<32x32xf32>
    %cst_41 = arith.constant dense<0.000000e+00> : vector<32xf32>
    %78 = vector.multi_reduction <add>, %77, %cst_41 [1] : vector<32x32xf32> to vector<32xf32>
    %79 = vector.shape_cast %78 : vector<32xf32> to vector<32x1xf32>
    %80 = tpu.reciprocal %79 {approx = true} : vector<32x1xf32> -> vector<32x1xf32>
    %81 = vector.broadcast %80 : vector<32x1xf32> to vector<32x32xf32>
    %82 = arith.mulf %77, %81 : vector<32x32xf32>
    %cst_42 = arith.constant dense<0.000000e+00> : vector<32x8xf32>
    %83 = tpu.matmul %82, %70, %cst_42 {dimension_numbers = #tpu.dot_dimension_numbers<[1], [0], [0], [1], [0, 0, 1, 1], [], []>} : vector<32x32xf32>, vector<32x8xf32>, vector<32x8xf32> -> vector<32x8xf32>
    %84 = vector.extract_strided_slice %47 {offsets = [0, 16], sizes = [32, 8], strides = [1, 1]} : vector<32x96xf32> to vector<32x8xf32>
    %cst_43 = arith.constant 0.353553385 : f32
    %85 = vector.broadcast %cst_43 : f32 to vector<32x8xf32>
    %86 = arith.mulf %84, %85 : vector<32x8xf32>
    %87 = vector.extract_strided_slice %47 {offsets = [0, 48], sizes = [32, 8], strides = [1, 1]} : vector<32x96xf32> to vector<32x8xf32>
    %88 = vector.extract_strided_slice %47 {offsets = [0, 80], sizes = [32, 8], strides = [1, 1]} : vector<32x96xf32> to vector<32x8xf32>
    %cst_44 = arith.constant dense<0.000000e+00> : vector<32x32xf32>
    %89 = tpu.matmul %86, %87, %cst_44 {dimension_numbers = #tpu.dot_dimension_numbers<[1], [1], [0], [0], [0, 0, 1, 0], [], []>} : vector<32x8xf32>, vector<32x8xf32>, vector<32x32xf32> -> vector<32x32xf32>
    %90 = arith.addf %89, %10 : vector<32x32xf32>
    %cst_45 = arith.constant dense<0xFF800000> : vector<32xf32>
    %91 = vector.multi_reduction <maximumf>, %90, %cst_45 [1] : vector<32x32xf32> to vector<32xf32>
    %92 = vector.shape_cast %91 : vector<32xf32> to vector<32x1xf32>
    %93 = vector.broadcast %92 : vector<32x1xf32> to vector<32x32xf32>
    %94 = arith.subf %90, %93 : vector<32x32xf32>
    %95 = math.exp %94 : vector<32x32xf32>
    %cst_46 = arith.constant dense<0.000000e+00> : vector<32xf32>
    %96 = vector.multi_reduction <add>, %95, %cst_46 [1] : vector<32x32xf32> to vector<32xf32>
    %97 = vector.shape_cast %96 : vector<32xf32> to vector<32x1xf32>
    %98 = tpu.reciprocal %97 {approx = true} : vector<32x1xf32> -> vector<32x1xf32>
    %99 = vector.broadcast %98 : vector<32x1xf32> to vector<32x32xf32>
    %100 = arith.mulf %95, %99 : vector<32x32xf32>
    %cst_47 = arith.constant dense<0.000000e+00> : vector<32x8xf32>
    %101 = tpu.matmul %100, %88, %cst_47 {dimension_numbers = #tpu.dot_dimension_numbers<[1], [0], [0], [1], [0, 0, 1, 1], [], []>} : vector<32x32xf32>, vector<32x8xf32>, vector<32x8xf32> -> vector<32x8xf32>
    %102 = vector.extract_strided_slice %47 {offsets = [0, 24], sizes = [32, 8], strides = [1, 1]} : vector<32x96xf32> to vector<32x8xf32>
    %cst_48 = arith.constant 0.353553385 : f32
    %103 = vector.broadcast %cst_48 : f32 to vector<32x8xf32>
    %104 = arith.mulf %102, %103 : vector<32x8xf32>
    %105 = vector.extract_strided_slice %47 {offsets = [0, 56], sizes = [32, 8], strides = [1, 1]} : vector<32x96xf32> to vector<32x8xf32>
    %106 = vector.extract_strided_slice %47 {offsets = [0, 88], sizes = [32, 8], strides = [1, 1]} : vector<32x96xf32> to vector<32x8xf32>
    %cst_49 = arith.constant dense<0.000000e+00> : vector<32x32xf32>
    %107 = tpu.matmul %104, %105, %cst_49 {dimension_numbers = #tpu.dot_dimension_numbers<[1], [1], [0], [0], [0, 0, 1, 0], [], []>} : vector<32x8xf32>, vector<32x8xf32>, vector<32x32xf32> -> vector<32x32xf32>
    %108 = arith.addf %107, %10 : vector<32x32xf32>
    %cst_50 = arith.constant dense<0xFF800000> : vector<32xf32>
    %109 = vector.multi_reduction <maximumf>, %108, %cst_50 [1] : vector<32x32xf32> to vector<32xf32>
    %110 = vector.shape_cast %109 : vector<32xf32> to vector<32x1xf32>
    %111 = vector.broadcast %110 : vector<32x1xf32> to vector<32x32xf32>
    %112 = arith.subf %108, %111 : vector<32x32xf32>
    %113 = math.exp %112 : vector<32x32xf32>
    %cst_51 = arith.constant dense<0.000000e+00> : vector<32xf32>
    %114 = vector.multi_reduction <add>, %113, %cst_51 [1] : vector<32x32xf32> to vector<32xf32>
    %115 = vector.shape_cast %114 : vector<32xf32> to vector<32x1xf32>
    %116 = tpu.reciprocal %115 {approx = true} : vector<32x1xf32> -> vector<32x1xf32>
    %117 = vector.broadcast %116 : vector<32x1xf32> to vector<32x32xf32>
    %118 = arith.mulf %113, %117 : vector<32x32xf32>
    %cst_52 = arith.constant dense<0.000000e+00> : vector<32x8xf32>
    %119 = tpu.matmul %118, %106, %cst_52 {dimension_numbers = #tpu.dot_dimension_numbers<[1], [0], [0], [1], [0, 0, 1, 1], [], []>} : vector<32x32xf32>, vector<32x8xf32>, vector<32x8xf32> -> vector<32x8xf32>
    %120 = tpu.concatenate %65, %83, %101, %119 in 1 : vector<32x8xf32>, vector<32x8xf32>, vector<32x8xf32>, vector<32x8xf32> -> vector<32x32xf32>
    %cst_53 = arith.constant dense<0.000000e+00> : vector<32x32xf32>
    %121 = tpu.matmul %120, %15, %cst_53 {dimension_numbers = #tpu.dot_dimension_numbers<[1], [0], [0], [1], [0, 0, 1, 1], [], []>} : vector<32x32xf32>, vector<32x32xf32>, vector<32x32xf32> -> vector<32x32xf32>
    %122 = arith.addf %1, %121 : vector<32x32xf32>
    %123 = vector.broadcast %16 : vector<1x32xf32> to vector<32x32xf32>
    %124 = arith.addf %122, %123 : vector<32x32xf32>
    %cst_54 = arith.constant dense<0.000000e+00> : vector<32xf32>
    %125 = vector.multi_reduction <add>, %124, %cst_54 [1] : vector<32x32xf32> to vector<32xf32>
    %126 = vector.shape_cast %125 : vector<32xf32> to vector<32x1xf32>
    %cst_55 = arith.constant 3.200000e+01 : f32
    %127 = vector.broadcast %cst_55 : f32 to vector<32x1xf32>
    %128 = arith.divf %126, %127 : vector<32x1xf32>
    %129 = vector.broadcast %128 : vector<32x1xf32> to vector<32x32xf32>
    %130 = arith.subf %124, %129 : vector<32x32xf32>
    %131 = arith.mulf %130, %130 : vector<32x32xf32>
    %cst_56 = arith.constant dense<0.000000e+00> : vector<32xf32>
    %132 = vector.multi_reduction <add>, %131, %cst_56 [1] : vector<32x32xf32> to vector<32xf32>
    %133 = vector.shape_cast %132 : vector<32xf32> to vector<32x1xf32>
    %cst_57 = arith.constant 3.200000e+01 : f32
    %134 = vector.broadcast %cst_57 : f32 to vector<32x1xf32>
    %135 = arith.divf %133, %134 : vector<32x1xf32>
    %136 = vector.broadcast %128 : vector<32x1xf32> to vector<32x32xf32>
    %137 = arith.subf %124, %136 : vector<32x32xf32>
    %cst_58 = arith.constant 9.99999974E-6 : f32
    %138 = vector.broadcast %cst_58 : f32 to vector<32x1xf32>
    %139 = arith.addf %135, %138 : vector<32x1xf32>
    %140 = math.rsqrt %139 : vector<32x1xf32>
    %141 = vector.broadcast %140 : vector<32x1xf32> to vector<32x32xf32>
    %142 = arith.mulf %137, %141 : vector<32x32xf32>
    %143 = vector.broadcast %17 : vector<1x32xf32> to vector<32x32xf32>
    %144 = arith.mulf %142, %143 : vector<32x32xf32>
    %145 = vector.broadcast %18 : vector<1x32xf32> to vector<32x32xf32>
    %146 = arith.addf %144, %145 : vector<32x32xf32>
    %cst_59 = arith.constant dense<0.000000e+00> : vector<32x64xf32>
    %147 = tpu.matmul %146, %19, %cst_59 {dimension_numbers = #tpu.dot_dimension_numbers<[1], [0], [0], [1], [0, 0, 1, 1], [], []>} : vector<32x32xf32>, vector<32x64xf32>, vector<32x64xf32> -> vector<32x64xf32>
    %148 = vector.broadcast %20 : vector<1x64xf32> to vector<32x64xf32>
    %149 = arith.addf %147, %148 : vector<32x64xf32>
    %150 = arith.mulf %149, %149 : vector<32x64xf32>
    %151 = arith.mulf %149, %150 : vector<32x64xf32>
    %cst_60 = arith.constant 4.471500e-02 : f32
    %152 = vector.broadcast %cst_60 : f32 to vector<32x64xf32>
    %153 = arith.mulf %152, %151 : vector<32x64xf32>
    %154 = arith.addf %149, %153 : vector<32x64xf32>
    %cst_61 = arith.constant 0.797884583 : f32
    %155 = vector.broadcast %cst_61 : f32 to vector<32x64xf32>
    %156 = arith.mulf %155, %154 : vector<32x64xf32>
    %157 = math.tanh %156 : vector<32x64xf32>
    %cst_62 = arith.constant 1.000000e+00 : f32
    %158 = vector.broadcast %cst_62 : f32 to vector<32x64xf32>
    %159 = arith.addf %158, %157 : vector<32x64xf32>
    %cst_63 = arith.constant 5.000000e-01 : f32
    %160 = vector.broadcast %cst_63 : f32 to vector<32x64xf32>
    %161 = arith.mulf %160, %159 : vector<32x64xf32>
    %162 = arith.mulf %149, %161 : vector<32x64xf32>
    %cst_64 = arith.constant dense<0.000000e+00> : vector<32x32xf32>
    %163 = tpu.matmul %162, %21, %cst_64 {dimension_numbers = #tpu.dot_dimension_numbers<[1], [0], [0], [1], [0, 0, 1, 1], [], []>} : vector<32x64xf32>, vector<64x32xf32>, vector<32x32xf32> -> vector<32x32xf32>
    %164 = arith.addf %124, %163 : vector<32x32xf32>
    %165 = vector.broadcast %22 : vector<1x32xf32> to vector<32x32xf32>
    %166 = arith.addf %164, %165 : vector<32x32xf32>
    %c0_65 = arith.constant 0 : index
    %c0_66 = arith.constant 0 : index
    %167 = vector.load %arg14[%c0_65, %c0_66] : memref<1x32xf32, #tpu.memory_space<vmem>>, vector<1x32xf32>
    %c0_67 = arith.constant 0 : index
    %c0_68 = arith.constant 0 : index
    %168 = vector.load %arg15[%c0_67, %c0_68] : memref<1x32xf32, #tpu.memory_space<vmem>>, vector<1x32xf32>
    %cst_69 = arith.constant dense<0.000000e+00> : vector<32xf32>
    %169 = vector.multi_reduction <add>, %166, %cst_69 [1] : vector<32x32xf32> to vector<32xf32>
    %170 = vector.shape_cast %169 : vector<32xf32> to vector<32x1xf32>
    %cst_70 = arith.constant 3.200000e+01 : f32
    %171 = vector.broadcast %cst_70 : f32 to vector<32x1xf32>
    %172 = arith.divf %170, %171 : vector<32x1xf32>
    %173 = vector.broadcast %172 : vector<32x1xf32> to vector<32x32xf32>
    %174 = arith.subf %166, %173 : vector<32x32xf32>
    %175 = arith.mulf %174, %174 : vector<32x32xf32>
    %cst_71 = arith.constant dense<0.000000e+00> : vector<32xf32>
    %176 = vector.multi_reduction <add>, %175, %cst_71 [1] : vector<32x32xf32> to vector<32xf32>
    %177 = vector.shape_cast %176 : vector<32xf32> to vector<32x1xf32>
    %cst_72 = arith.constant 3.200000e+01 : f32
    %178 = vector.broadcast %cst_72 : f32 to vector<32x1xf32>
    %179 = arith.divf %177, %178 : vector<32x1xf32>
    %180 = vector.broadcast %172 : vector<32x1xf32> to vector<32x32xf32>
    %181 = arith.subf %166, %180 : vector<32x32xf32>
    %cst_73 = arith.constant 9.99999974E-6 : f32
    %182 = vector.broadcast %cst_73 : f32 to vector<32x1xf32>
    %183 = arith.addf %179, %182 : vector<32x1xf32>
    %184 = math.rsqrt %183 : vector<32x1xf32>
    %185 = vector.broadcast %184 : vector<32x1xf32> to vector<32x32xf32>
    %186 = arith.mulf %181, %185 : vector<32x32xf32>
    %187 = vector.broadcast %167 : vector<1x32xf32> to vector<32x32xf32>
    %188 = arith.mulf %186, %187 : vector<32x32xf32>
    %189 = vector.broadcast %168 : vector<1x32xf32> to vector<32x32xf32>
    %190 = arith.addf %188, %189 : vector<32x32xf32>
    %191 = tpu.iota {dimensions = array<i32: 0>} : vector<32x1xi32>
    %c1_i32 = arith.constant 1 : i32
    %192 = arith.subi %0, %c1_i32 : i32
    %193 = vector.broadcast %192 : i32 to vector<32x1xi32>
    %194 = arith.cmpi eq, %191, %193 : vector<32x1xi32>
    %195 = arith.extui %194 : vector<32x1xi1> to vector<32x1xi32>
    %196 = arith.sitofp %195 : vector<32x1xi32> to vector<32x1xf32>
    %197 = vector.broadcast %196 : vector<32x1xf32> to vector<32x32xf32>
    %198 = arith.mulf %190, %197 : vector<32x32xf32>
    %cst_74 = arith.constant dense<0.000000e+00> : vector<32xf32>
    %199 = vector.multi_reduction <add>, %198, %cst_74 [0] : vector<32x32xf32> to vector<32xf32>
    %200 = vector.shape_cast %199 : vector<32xf32> to vector<1x32xf32>
    %c0_75 = arith.constant 0 : index
    %c0_76 = arith.constant 0 : index
    %201 = vector.load %arg16[%c0_75, %c0_76] : memref<32x64xf32, #tpu.memory_space<vmem>>, vector<32x64xf32>
    %cst_77 = arith.constant dense<0.000000e+00> : vector<1x64xf32>
    %202 = tpu.matmul %200, %201, %cst_77 {dimension_numbers = #tpu.dot_dimension_numbers<[1], [0], [0], [1], [0, 0, 1, 1], [], []>} : vector<1x32xf32>, vector<32x64xf32>, vector<1x64xf32> -> vector<1x64xf32>
    %c0_78 = arith.constant 0 : index
    %c0_79 = arith.constant 0 : index
    %203 = vector.load %arg17[%c0_78, %c0_79] : memref<1x64xf32, #tpu.memory_space<vmem>>, vector<1x64xf32>
    %204 = arith.addf %202, %203 : vector<1x64xf32>
    %c0_80 = arith.constant 0 : index
    %c0_81 = arith.constant 0 : index
    %205 = vector.load %arg18[%c0_80, %c0_81] : memref<1x64xf32, #tpu.memory_space<vmem>>, vector<1x64xf32>
    tpu.vector_store %arg18[%c0_80, %c0_81], %204 {strides = array<i32>} : memref<1x64xf32, #tpu.memory_space<vmem>>, vector<1x64xf32>,
    return
  }
}

</mosaic_0001>

<llo_original>
// kernel: _generate.1
$region0: #{_generate.1}
  #allocation0 [shape = 'u32[]', space=smem, size = 0x4, offset = 0x4, fixed_abs, tag = 'smem constant byte address 0x4 - core index']
  #allocation1 [shape = 'u32[72,128]{1,0:T(1,128)}', space=vmem, size = 0x9000, scoped, tag = 'internal scratch']
  %s0 = inlined_call_operand.vmem [shape: f32[16,48], index: 0, kind: input, shape index: {}]
  %s1 = inlined_call_operand.vmem [shape: f32[48,32], index: 1, kind: input, shape index: {}]
  %s2 = inlined_call_operand.vmem [shape: f32[1,32], index: 2, kind: input, shape index: {}]
  %s3 = inlined_call_operand.vmem [shape: f32[16,32], index: 3, kind: input, shape index: {}]
  %s4 = inlined_call_operand.vmem [shape: f32[1,32], index: 4, kind: input, shape index: {}]
  %s5 = inlined_call_operand.vmem [shape: f32[1,32], index: 5, kind: input, shape index: {}]
  %s6 = inlined_call_operand.vmem [shape: f32[32,96], index: 6, kind: input, shape index: {}]
  %s7 = inlined_call_operand.vmem [shape: f32[1,96], index: 7, kind: input, shape index: {}]
  %s8 = inlined_call_operand.vmem [shape: f32[32,32], index: 8, kind: input, shape index: {}]
  %s9 = inlined_call_operand.vmem [shape: f32[1,32], index: 9, kind: input, shape index: {}]
  %s10 = inlined_call_operand.vmem [shape: f32[1,32], index: 10, kind: input, shape index: {}]
  %s11 = inlined_call_operand.vmem [shape: f32[1,32], index: 11, kind: input, shape index: {}]
  %s12 = inlined_call_operand.vmem [shape: f32[32,64], index: 12, kind: input, shape index: {}]
  %s13 = inlined_call_operand.vmem [shape: f32[1,64], index: 13, kind: input, shape index: {}]
  %s14 = inlined_call_operand.vmem [shape: f32[64,32], index: 14, kind: input, shape index: {}]
  %s15 = inlined_call_operand.vmem [shape: f32[1,32], index: 15, kind: input, shape index: {}]
  %s16 = inlined_call_operand.vmem [shape: f32[1,32], index: 16, kind: input, shape index: {}]
  %s17 = inlined_call_operand.vmem [shape: f32[1,32], index: 17, kind: input, shape index: {}]
  %s18 = inlined_call_operand.vmem [shape: f32[32,32], index: 18, kind: input, shape index: {}]
  %s19 = inlined_call_operand.vmem [shape: f32[1,32], index: 19, kind: input, shape index: {}]
  %s20 = inlined_call_operand.vmem [shape: f32[32,32], index: 20, kind: input, shape index: {}]
  %s21 = inlined_call_operand.vmem [shape: f32[1,32], index: 21, kind: input, shape index: {}]
  %s22 = inlined_call_operand.vmem [shape: f32[16,32], index: 22, kind: output, shape index: {}]
  %s23 = sld [smem:[#allocation0]]
  $region98: #{_generate.1} parent=0
    _
  %s25 = ssub.s32 1, %s23
  %s26 = scalar_select 0, %s25, %s23
  // Predicated region
  $region2: #{_generate.1} parent=0 // pred_check
    _
  $region3: #{_generate.1} parent=0 // pred_check_branch
    %28 = sbr.rel (0) target = $region5
  $region4: #{_generate.1} parent=0 // pred_region
    _
  $region5: #{_generate.1} parent=0 // pred_fallthru
    _
  // Predicated region
  $region6: #{_generate.1} parent=0 // pred_check
    _
  $region7: #{_generate.1} parent=0 // pred_check_branch
    %30 = sbr.rel (0) target = $region9
  $region8: #{_generate.1} parent=0 // pred_region
    _
  $region9: #{_generate.1} parent=0 // pred_fallthru
    _
  // Predicated region
  $region10: #{_generate.1} parent=0 // pred_check
    _
  $region11: #{_generate.1} parent=0 // pred_check_branch
    %32 = sbr.rel (0) target = $region13
  $region12: #{_generate.1} parent=0 // pred_region
    _
  $region13: #{_generate.1} parent=0 // pred_fallthru
    _
  // Predicated region
  $region14: #{_generate.1} parent=0 // pred_check
    _
  $region15: #{_generate.1} parent=0 // pred_check_branch
    %34 = sbr.rel (0) target = $region17
  $region16: #{_generate.1} parent=0 // pred_region
    _
  $region17: #{_generate.1} parent=0 // pred_fallthru
    _
  // Predicated region
  $region18: #{_generate.1} parent=0 // pred_check
    _
  $region19: #{_generate.1} parent=0 // pred_check_branch
    %36 = sbr.rel (0) target = $region21
  $region20: #{_generate.1} parent=0 // pred_region
    _
  $region21: #{_generate.1} parent=0 // pred_fallthru
    _
  // Predicated region
  $region22: #{_generate.1} parent=0 // pred_check
    _
  $region23: #{_generate.1} parent=0 // pred_check_branch
    %38 = sbr.rel (0) target = $region25
  $region24: #{_generate.1} parent=0 // pred_region
    _
  $region25: #{_generate.1} parent=0 // pred_fallthru
    _
  // Predicated region
  $region26: #{_generate.1} parent=0 // pred_check
    _
  $region27: #{_generate.1} parent=0 // pred_check_branch
    %40 = sbr.rel (0) target = $region29
  $region28: #{_generate.1} parent=0 // pred_region
    _
  $region29: #{_generate.1} parent=0 // pred_fallthru
    _
  // Predicated region
  $region30: #{_generate.1} parent=0 // pred_check
    _
  $region31: #{_generate.1} parent=0 // pred_check_branch
    %42 = sbr.rel (0) target = $region33
  $region32: #{_generate.1} parent=0 // pred_region
    _
  $region33: #{_generate.1} parent=0 // pred_fallthru
    _
  // Predicated region
  $region34: #{_generate.1} parent=0 // pred_check
    _
  $region35: #{_generate.1} parent=0 // pred_check_branch
    %44 = sbr.rel (0) target = $region37
  $region36: #{_generate.1} parent=0 // pred_region
    _
  $region37: #{_generate.1} parent=0 // pred_fallthru
    _
  // Predicated region
  $region38: #{_generate.1} parent=0 // pred_check
    _
  $region39: #{_generate.1} parent=0 // pred_check_branch
    %46 = sbr.rel (0) target = $region41
  $region40: #{_generate.1} parent=0 // pred_region
    _
  $region41: #{_generate.1} parent=0 // pred_fallthru
    _
  // Predicated region
  $region42: #{_generate.1} parent=0 // pred_check
    _
  $region43: #{_generate.1} parent=0 // pred_check_branch
    %48 = sbr.rel (0) target = $region45
  $region44: #{_generate.1} parent=0 // pred_region
    _
  $region45: #{_generate.1} parent=0 // pred_fallthru
    _
  // Predicated region
  $region46: #{_generate.1} parent=0 // pred_check
    _
  $region47: #{_generate.1} parent=0 // pred_check_branch
    %50 = sbr.rel (0) target = $region49
  $region48: #{_generate.1} parent=0 // pred_region
    _
  $region49: #{_generate.1} parent=0 // pred_fallthru
    _
  // Predicated region
  $region50: #{_generate.1} parent=0 // pred_check
    _
  $region51: #{_generate.1} parent=0 // pred_check_branch
    %52 = sbr.rel (0) target = $region53
  $region52: #{_generate.1} parent=0 // pred_region
    _
  $region53: #{_generate.1} parent=0 // pred_fallthru
    _
  // Predicated region
  $region54: #{_generate.1} parent=0 // pred_check
    _
  $region55: #{_generate.1} parent=0 // pred_check_branch
    %54 = sbr.rel (0) target = $region57
  $region56: #{_generate.1} parent=0 // pred_region
    _
  $region57: #{_generate.1} parent=0 // pred_fallthru
    _
  // Predicated region
  $region58: #{_generate.1} parent=0 // pred_check
    _
  $region59: #{_generate.1} parent=0 // pred_check_branch
    %56 = sbr.rel (0) target = $region61
  $region60: #{_generate.1} parent=0 // pred_region
    _
  $region61: #{_generate.1} parent=0 // pred_fallthru
    _
  // Predicated region
  $region62: #{_generate.1} parent=0 // pred_check
    _
  $region63: #{_generate.1} parent=0 // pred_check_branch
    %58 = sbr.rel (0) target = $region65
  $region64: #{_generate.1} parent=0 // pred_region
    _
  $region65: #{_generate.1} parent=0 // pred_fallthru
    _
  // Predicated region
  $region66: #{_generate.1} parent=0 // pred_check
    _
  $region67: #{_generate.1} parent=0 // pred_check_branch
    %60 = sbr.rel (0) target = $region69
  $region68: #{_generate.1} parent=0 // pred_region
    _
  $region69: #{_generate.1} parent=0 // pred_fallthru
    _
  // Predicated region
  $region70: #{_generate.1} parent=0 // pred_check
    _
  $region71: #{_generate.1} parent=0 // pred_check_branch
    %62 = sbr.rel (0) target = $region73
  $region72: #{_generate.1} parent=0 // pred_region
    _
  $region73: #{_generate.1} parent=0 // pred_fallthru
    _
  // Predicated region
  $region74: #{_generate.1} parent=0 // pred_check
    _
  $region75: #{_generate.1} parent=0 // pred_check_branch
    %64 = sbr.rel (0) target = $region77
  $region76: #{_generate.1} parent=0 // pred_region
    _
  $region77: #{_generate.1} parent=0 // pred_fallthru
    _
  // Predicated region
  $region78: #{_generate.1} parent=0 // pred_check
    _
  $region79: #{_generate.1} parent=0 // pred_check_branch
    %66 = sbr.rel (0) target = $region81
  $region80: #{_generate.1} parent=0 // pred_region
    _
  $region81: #{_generate.1} parent=0 // pred_fallthru
    _
  // Predicated region
  $region82: #{_generate.1} parent=0 // pred_check
    _
  $region83: #{_generate.1} parent=0 // pred_check_branch
    %68 = sbr.rel (0) target = $region85
  $region84: #{_generate.1} parent=0 // pred_region
    _
  $region85: #{_generate.1} parent=0 // pred_fallthru
    _
  // Predicated region
  $region86: #{_generate.1} parent=0 // pred_check
    _
  $region87: #{_generate.1} parent=0 // pred_check_branch
    %70 = sbr.rel (0) target = $region89
  $region88: #{_generate.1} parent=0 // pred_region
    _
  $region89: #{_generate.1} parent=0 // pred_fallthru
    _
  %v71 = vld [vmem:[%s0] sm:$0xff]
  %v72 = vld [vmem:[%s0 + $0x8] sm:$0xff]
  %v73 = vld [vmem:[%s1] sm:$0xff]
  %v74 = vld [vmem:[%s1 + $0x8] sm:$0xff]
  %v75 = vld [vmem:[%s1 + $0x10] sm:$0xff]
  %v76 = vld [vmem:[%s1 + $0x18] sm:$0xff]
  %v77 = vld [vmem:[%s1 + $0x20] sm:$0xff]
  %v78 = vld [vmem:[%s1 + $0x28] sm:$0xff]
  %v79 = vld [vmem:[%s2] sm:$0x1]
  %v81 = vperm.slane %v79, 0
  %vm83 = vcmask 392192
  %v85 = vsel %vm83, %v71, 0
  %v88 = vsel %vm83, %v72, 0
  %90 = vmatpush.msra.mxu0 0.0
  %91 = vmatpush.msra.mxu0 0.0
  %92 = vmatpush.msra.mxu0 0.0
  %93 = vmatpush.msra.mxu0 0.0
  %94 = vmatpush.msra.mxu0 0.0
  %95 = vmatpush.msra.mxu0 0.0
  %96 = vmatpush.msra.mxu0 0.0
  %97 = vmatpush.msra.mxu0 0.0
  %98 = vmatpush.msra.mxu0 0.0
  %99 = vmatpush.msra.mxu0 0.0
  %100 = vmatpush.msra.mxu0 %v78
  %101 = vmatpush.msra.mxu0 %v77
  %102 = vmatpush.msra.mxu0 %v76
  %103 = vmatpush.msra.mxu0 %v75
  %104 = vmatpush.msra.mxu0 %v74
  %105 = vmatpush.msra.mxu0 %v73
  %106 = vmatmul.f32.gmra.mxu0 %v85
  %v107 = vpop.f32.mrf.mxu0
  %v108 = vadd.f32 %v81, %v107
  %109 = vmatmul.f32.gmra.mxu0 %v88
  %v110 = vpop.f32.mrf.mxu0
  %v111 = vadd.f32 %v81, %v110
  %112 = vdwg.mxu0
  %v113 = vld [vmem:[%s3] sm:$0xff]
  %v114 = vld [vmem:[%s3 + $0x8] sm:$0xff]
  %v115 = vadd.f32 %v108, %v113
  %v116 = vadd.f32 %v111, %v114
  %v117 = vld [vmem:[%s4] sm:$0x1]
  %v118 = vld [vmem:[%s5] sm:$0x1]
  %v119 = vld [vmem:[%s6] sm:$0xff]
  %v120 = vld [vmem:[%s6 + $0x8] sm:$0xff]
  %v121 = vld [vmem:[%s6 + $0x10] sm:$0xff]
  %v122 = vld [vmem:[%s6 + $0x18] sm:$0xff]
  %v123 = vld [vmem:[%s7] sm:$0x1]
  %v124 = vld [vmem:[%s8] sm:$0xff]
  %v125 = vld [vmem:[%s8 + $0x8] sm:$0xff]
  %v126 = vld [vmem:[%s8 + $0x10] sm:$0xff]
  %v127 = vld [vmem:[%s8 + $0x18] sm:$0xff]
  %v128 = vld [vmem:[%s9] sm:$0x1]
  %v129 = vld [vmem:[%s10] sm:$0x1]
  %v130 = vld [vmem:[%s11] sm:$0x1]
  %v131 = vld [vmem:[%s12] sm:$0xff]
  %v132 = vld [vmem:[%s12 + $0x8] sm:$0xff]
  %v133 = vld [vmem:[%s12 + $0x10] sm:$0xff]
  %v134 = vld [vmem:[%s12 + $0x18] sm:$0xff]
  %v135 = vld [vmem:[%s13] sm:$0x1]
  %v136 = vld [vmem:[%s14] sm:$0xff]
  %v137 = vld [vmem:[%s14 + $0x8] sm:$0xff]
  %v138 = vld [vmem:[%s14 + $0x10] sm:$0xff]
  %v139 = vld [vmem:[%s14 + $0x18] sm:$0xff]
  %v140 = vld [vmem:[%s14 + $0x20] sm:$0xff]
  %v141 = vld [vmem:[%s14 + $0x28] sm:$0xff]
  %v142 = vld [vmem:[%s14 + $0x30] sm:$0xff]
  %v143 = vld [vmem:[%s14 + $0x38] sm:$0xff]
  %v144 = vld [vmem:[%s15] sm:$0x1]
  %vm145 = vcmask 261120
  %v146 = vsel %vm145, %v115, 0.0
  %147 = vadd.xlane.f32.xlu0 %v146
  %v148 = vpop.xlane.xlu0 %147
  %v149 = vsel %vm145, %v116, 0.0
  %150 = vadd.xlane.f32.xlu0 %v149
  %v151 = vpop.xlane.xlu0 %150
  %v152 = vrcp.pop 32.0
  %v153 = vmul.f32 32.0, %v152
  %v154 = vsub.f32 1.0, %v153
  %v155 = vmul.f32 %v152, %v154
  %v156 = vadd.f32 %v152, %v155
  %vm157 = vweird.f32 %v152
  %v158 = vsel %vm157, %v152, %v156
  %v159 = vmul.f32 %v148, %v158
  %v160 = vmul.f32 %v151, %v158
  %v161 = vsub.f32 %v115, %v159
  %v162 = vsub.f32 %v116, %v160
  %v163 = vmul.f32 %v161, %v161
  %v164 = vmul.f32 %v162, %v162
  %v165 = vsel %vm145, %v163, 0.0
  %166 = vadd.xlane.f32.xlu0 %v165
  %v167 = vpop.xlane.xlu0 %166
  %v168 = vsel %vm145, %v164, 0.0
  %169 = vadd.xlane.f32.xlu0 %v168
  %v170 = vpop.xlane.xlu0 %169
  %v171 = vmul.f32 %v167, %v158
  %v172 = vmul.f32 %v170, %v158
  %v173 = vadd.f32 %v171, 1e-05
  %v174 = vadd.f32 %v172, 1e-05
  %v175 = vrsqrt.pop %v173
  %v176 = vmul.f32 %v175, %v173
  %v177 = vmul.f32 %v176, %v175
  %v178 = vmul.f32 0.5, %v177
  %v179 = vsub.f32 1.5, %v178
  %v180 = vmul.f32 %v175, %v179
  %vm181 = vweird.f32 %v173
  %vm182 = vweird.f32 %v175
  %vm183 = vmor %vm181, %vm182
  %v184 = vsel %vm183, %v175, %v180
  %v185 = vrsqrt.pop %v174
  %v186 = vmul.f32 %v185, %v174
  %v187 = vmul.f32 %v186, %v185
  %v188 = vmul.f32 0.5, %v187
  %v189 = vsub.f32 1.5, %v188
  %v190 = vmul.f32 %v185, %v189
  %vm191 = vweird.f32 %v174
  %vm192 = vweird.f32 %v185
  %vm193 = vmor %vm191, %vm192
  %v194 = vsel %vm193, %v185, %v190
  %v195 = vmul.f32 %v161, %v184
  %v196 = vmul.f32 %v162, %v194
  %v198 = vperm.slane %v117, 0
  %v200 = vmul.f32 %v195, %v198
  %v201 = vmul.f32 %v196, %v198
  %v203 = vperm.slane %v118, 0
  %v205 = vadd.f32 %v200, %v203
  %v206 = vadd.f32 %v201, %v203
  %v208 = vperm.slane %v123, 0
  %v211 = vsel %vm145, %v205, 0
  %v214 = vsel %vm145, %v206, 0
  %216 = vmatpush.msra.mxu0 0.0
  %217 = vmatpush.msra.mxu0 0.0
  %218 = vmatpush.msra.mxu0 0.0
  %219 = vmatpush.msra.mxu0 0.0
  %220 = vmatpush.msra.mxu0 0.0
  %221 = vmatpush.msra.mxu0 0.0
  %222 = vmatpush.msra.mxu0 0.0
  %223 = vmatpush.msra.mxu0 0.0
  %224 = vmatpush.msra.mxu0 0.0
  %225 = vmatpush.msra.mxu0 0.0
  %226 = vmatpush.msra.mxu0 0.0
  %227 = vmatpush.msra.mxu0 0.0
  %228 = vmatpush.msra.mxu0 %v122
  %229 = vmatpush.msra.mxu0 %v121
  %230 = vmatpush.msra.mxu0 %v120
  %231 = vmatpush.msra.mxu0 %v119
  %232 = vmatmul.f32.gmra.mxu0 %v211
  %v233 = vpop.f32.mrf.mxu0
  %v234 = vadd.f32 %v208, %v233
  %235 = vmatmul.f32.gmra.mxu0 %v214
  %v236 = vpop.f32.mrf.mxu0
  %v237 = vadd.f32 %v208, %v236
  %238 = vdwg.mxu0
  %v239 = vmul.f32 %v234, 0.35355338
  %v240 = vmul.f32 %v237, 0.35355338
  %243 = vrot.lane.b32.xlu0 %v234, 96
  %v244 = vpop.permute.xlu0 %243
  %245 = vrot.lane.b32.xlu0 %v237, 96
  %v246 = vpop.permute.xlu0 %245
  %vm247 = vcmask 64512
  %v249 = vsel %vm247, %v239, 0
  %v252 = vsel %vm247, %v240, 0
  %v254 = vsel %vm247, %v244, 0
  %v256 = vsel %vm247, %v246, 0
  %258 = vmatpush.xpose.msra.mxu0 0.0
  %259 = vmatpush.xpose.msra.mxu0 0.0
  %260 = vmatpush.xpose.msra.mxu0 0.0
  %261 = vmatpush.xpose.msra.mxu0 0.0
  %262 = vmatpush.xpose.msra.mxu0 0.0
  %263 = vmatpush.xpose.msra.mxu0 0.0
  %264 = vmatpush.xpose.msra.mxu0 0.0
  %265 = vmatpush.xpose.msra.mxu0 0.0
  %266 = vmatpush.xpose.msra.mxu0 0.0
  %267 = vmatpush.xpose.msra.mxu0 0.0
  %268 = vmatpush.xpose.msra.mxu0 0.0
  %269 = vmatpush.xpose.msra.mxu0 0.0
  %270 = vmatpush.xpose.msra.mxu0 0.0
  %271 = vmatpush.xpose.msra.mxu0 0.0
  %272 = vmatpush.xpose.msra.mxu0 %v256
  %273 = vmatpush.xpose.msra.mxu0 %v254
  %274 = vmatmul.f32.gmra.mxu0 %v249
  %v275 = vpop.f32.mrf.mxu0
  %v276 = vadd.f32 0.0, %v275
  %277 = vmatmul.f32.gmra.mxu0 %v252
  %v278 = vpop.f32.mrf.mxu0
  %v279 = vadd.f32 0.0, %v278
  %280 = vdwg.mxu0
  %vm281 = vcmask 130048
  %v282 = vsel %vm281, %v276, -inf
  %283 = vmax.xlane.f32.xlu0 %v282
  %v284 = vpop.xlane.xlu0 %283
  %v285 = vsel %vm281, %v279, -inf
  %286 = vmax.xlane.f32.xlu0 %v285
  %v287 = vpop.xlane.xlu0 %286
  %v288 = vsub.f32 %v276, %v284
  %v289 = vsub.f32 %v279, %v287
  %v290 = vmul.f32 %v288, 1.442695
  %v291 = vpow.pop %v290
  %v292 = vmul.f32 %v289, 1.442695
  %v293 = vpow.pop %v292
  %v294 = vsel %vm281, %v291, 0.0
  %295 = vadd.xlane.f32.xlu0 %v294
  %v296 = vpop.xlane.xlu0 %295
  %v297 = vsel %vm281, %v293, 0.0
  %298 = vadd.xlane.f32.xlu0 %v297
  %v299 = vpop.xlane.xlu0 %298
  %v300 = vrcp.pop %v296
  %v301 = vrcp.pop %v299
  %v302 = vmul.f32 %v291, %v300
  %v303 = vmul.f32 %v293, %v301
  %304 = vrot.lane.b32.xlu0 %v234, 64
  %v305 = vpop.permute.xlu0 %304
  %306 = vrot.lane.b32.xlu0 %v237, 64
  %v307 = vpop.permute.xlu0 %306
  %v311 = vsel %vm281, %v302, 0
  %v314 = vsel %vm281, %v303, 0
  %316 = vmatpush.msra.mxu0 0.0
  %317 = vmatpush.msra.mxu0 0.0
  %318 = vmatpush.msra.mxu0 0.0
  %319 = vmatpush.msra.mxu0 0.0
  %320 = vmatpush.msra.mxu0 0.0
  %321 = vmatpush.msra.mxu0 0.0
  %322 = vmatpush.msra.mxu0 0.0
  %323 = vmatpush.msra.mxu0 0.0
  %324 = vmatpush.msra.mxu0 0.0
  %325 = vmatpush.msra.mxu0 0.0
  %326 = vmatpush.msra.mxu0 0.0
  %327 = vmatpush.msra.mxu0 0.0
  %328 = vmatpush.msra.mxu0 0.0
  %329 = vmatpush.msra.mxu0 0.0
  %330 = vmatpush.msra.mxu0 %v307
  %331 = vmatpush.msra.mxu0 %v305
  %332 = vmatmul.f32.gmra.mxu0 %v311
  %v333 = vpop.f32.mrf.mxu0
  %v334 = vadd.f32 0.0, %v333
  %335 = vmatmul.f32.gmra.mxu0 %v314
  %v336 = vpop.f32.mrf.mxu0
  %v337 = vadd.f32 0.0, %v336
  %338 = vdwg.mxu0
  %339 = vrot.lane.b32.xlu0 %v239, 120
  %v340 = vpop.permute.xlu0 %339
  %341 = vrot.lane.b32.xlu0 %v240, 120
  %v342 = vpop.permute.xlu0 %341
  %343 = vrot.lane.b32.xlu0 %v234, 88
  %v344 = vpop.permute.xlu0 %343
  %345 = vrot.lane.b32.xlu0 %v237, 88
  %v346 = vpop.permute.xlu0 %345
  %v347 = vsel %vm247, %v340, 0
  %v349 = vsel %vm247, %v342, 0
  %v351 = vsel %vm247, %v344, 0
  %v353 = vsel %vm247, %v346, 0
  %355 = vmatpush.xpose.msra.mxu0 0.0
  %356 = vmatpush.xpose.msra.mxu0 0.0
  %357 = vmatpush.xpose.msra.mxu0 0.0
  %358 = vmatpush.xpose.msra.mxu0 0.0
  %359 = vmatpush.xpose.msra.mxu0 0.0
  %360 = vmatpush.xpose.msra.mxu0 0.0
  %361 = vmatpush.xpose.msra.mxu0 0.0
  %362 = vmatpush.xpose.msra.mxu0 0.0
  %363 = vmatpush.xpose.msra.mxu0 0.0
  %364 = vmatpush.xpose.msra.mxu0 0.0
  %365 = vmatpush.xpose.msra.mxu0 0.0
  %366 = vmatpush.xpose.msra.mxu0 0.0
  %367 = vmatpush.xpose.msra.mxu0 0.0
  %368 = vmatpush.xpose.msra.mxu0 0.0
  %369 = vmatpush.xpose.msra.mxu0 %v353
  %370 = vmatpush.xpose.msra.mxu0 %v351
  %371 = vmatmul.f32.gmra.mxu0 %v347
  %v372 = vpop.f32.mrf.mxu0
  %v373 = vadd.f32 0.0, %v372
  %374 = vmatmul.f32.gmra.mxu0 %v349
  %v375 = vpop.f32.mrf.mxu0
  %v376 = vadd.f32 0.0, %v375
  %377 = vdwg.mxu0
  %v378 = vsel %vm281, %v373, -inf
  %379 = vmax.xlane.f32.xlu0 %v378
  %v380 = vpop.xlane.xlu0 %379
  %v381 = vsel %vm281, %v376, -inf
  %382 = vmax.xlane.f32.xlu0 %v381
  %v383 = vpop.xlane.xlu0 %382
  %v384 = vsub.f32 %v373, %v380
  %v385 = vsub.f32 %v376, %v383
  %v386 = vmul.f32 %v384, 1.442695
  %v387 = vpow.pop %v386
  %v388 = vmul.f32 %v385, 1.442695
  %v389 = vpow.pop %v388
  %v390 = vsel %vm281, %v387, 0.0
  %391 = vadd.xlane.f32.xlu0 %v390
  %v392 = vpop.xlane.xlu0 %391
  %v393 = vsel %vm281, %v389, 0.0
  %394 = vadd.xlane.f32.xlu0 %v393
  %v395 = vpop.xlane.xlu0 %394
  %v396 = vrcp.pop %v392
  %v397 = vrcp.pop %v395
  %v398 = vmul.f32 %v387, %v396
  %v399 = vmul.f32 %v389, %v397
  %400 = vrot.lane.b32.xlu0 %v234, 56
  %v401 = vpop.permute.xlu0 %400
  %402 = vrot.lane.b32.xlu0 %v237, 56
  %v403 = vpop.permute.xlu0 %402
  %v407 = vsel %vm281, %v398, 0
  %v410 = vsel %vm281, %v399, 0
  %412 = vmatpush.msra.mxu0 0.0
  %413 = vmatpush.msra.mxu0 0.0
  %414 = vmatpush.msra.mxu0 0.0
  %415 = vmatpush.msra.mxu0 0.0
  %416 = vmatpush.msra.mxu0 0.0
  %417 = vmatpush.msra.mxu0 0.0
  %418 = vmatpush.msra.mxu0 0.0
  %419 = vmatpush.msra.mxu0 0.0
  %420 = vmatpush.msra.mxu0 0.0
  %421 = vmatpush.msra.mxu0 0.0
  %422 = vmatpush.msra.mxu0 0.0
  %423 = vmatpush.msra.mxu0 0.0
  %424 = vmatpush.msra.mxu0 0.0
  %425 = vmatpush.msra.mxu0 0.0
  %426 = vmatpush.msra.mxu0 %v403
  %427 = vmatpush.msra.mxu0 %v401
  %428 = vmatmul.f32.gmra.mxu0 %v407
  %v429 = vpop.f32.mrf.mxu0
  %v430 = vadd.f32 0.0, %v429
  %431 = vmatmul.f32.gmra.mxu0 %v410
  %v432 = vpop.f32.mrf.mxu0
  %v433 = vadd.f32 0.0, %v432
  %434 = vdwg.mxu0
  %435 = vrot.lane.b32.xlu0 %v239, 112
  %v436 = vpop.permute.xlu0 %435
  %437 = vrot.lane.b32.xlu0 %v240, 112
  %v438 = vpop.permute.xlu0 %437
  %439 = vrot.lane.b32.xlu0 %v234, 80
  %v440 = vpop.permute.xlu0 %439
  %441 = vrot.lane.b32.xlu0 %v237, 80
  %v442 = vpop.permute.xlu0 %441
  %v443 = vsel %vm247, %v436, 0
  %v445 = vsel %vm247, %v438, 0
  %v447 = vsel %vm247, %v440, 0
  %v449 = vsel %vm247, %v442, 0
  %451 = vmatpush.xpose.msra.mxu0 0.0
  %452 = vmatpush.xpose.msra.mxu0 0.0
  %453 = vmatpush.xpose.msra.mxu0 0.0
  %454 = vmatpush.xpose.msra.mxu0 0.0
  %455 = vmatpush.xpose.msra.mxu0 0.0
  %456 = vmatpush.xpose.msra.mxu0 0.0
  %457 = vmatpush.xpose.msra.mxu0 0.0
  %458 = vmatpush.xpose.msra.mxu0 0.0
  %459 = vmatpush.xpose.msra.mxu0 0.0
  %460 = vmatpush.xpose.msra.mxu0 0.0
  %461 = vmatpush.xpose.msra.mxu0 0.0
  %462 = vmatpush.xpose.msra.mxu0 0.0
  %463 = vmatpush.xpose.msra.mxu0 0.0
  %464 = vmatpush.xpose.msra.mxu0 0.0
  %465 = vmatpush.xpose.msra.mxu0 %v449
  %466 = vmatpush.xpose.msra.mxu0 %v447
  %467 = vmatmul.f32.gmra.mxu0 %v443
  %v468 = vpop.f32.mrf.mxu0
  %v469 = vadd.f32 0.0, %v468
  %470 = vmatmul.f32.gmra.mxu0 %v445
  %v471 = vpop.f32.mrf.mxu0
  %v472 = vadd.f32 0.0, %v471
  %473 = vdwg.mxu0
  %v474 = vsel %vm281, %v469, -inf
  %475 = vmax.xlane.f32.xlu0 %v474
  %v476 = vpop.xlane.xlu0 %475
  %v477 = vsel %vm281, %v472, -inf
  %478 = vmax.xlane.f32.xlu0 %v477
  %v479 = vpop.xlane.xlu0 %478
  %v480 = vsub.f32 %v469, %v476
  %v481 = vsub.f32 %v472, %v479
  %v482 = vmul.f32 %v480, 1.442695
  %v483 = vpow.pop %v482
  %v484 = vmul.f32 %v481, 1.442695
  %v485 = vpow.pop %v484
  %v486 = vsel %vm281, %v483, 0.0
  %487 = vadd.xlane.f32.xlu0 %v486
  %v488 = vpop.xlane.xlu0 %487
  %v489 = vsel %vm281, %v485, 0.0
  %490 = vadd.xlane.f32.xlu0 %v489
  %v491 = vpop.xlane.xlu0 %490
  %v492 = vrcp.pop %v488
  %v493 = vrcp.pop %v491
  %v494 = vmul.f32 %v483, %v492
  %v495 = vmul.f32 %v485, %v493
  %496 = vrot.lane.b32.xlu0 %v234, 48
  %v497 = vpop.permute.xlu0 %496
  %498 = vrot.lane.b32.xlu0 %v237, 48
  %v499 = vpop.permute.xlu0 %498
  %v503 = vsel %vm281, %v494, 0
  %v506 = vsel %vm281, %v495, 0
  %508 = vmatpush.msra.mxu0 0.0
  %509 = vmatpush.msra.mxu0 0.0
  %510 = vmatpush.msra.mxu0 0.0
  %511 = vmatpush.msra.mxu0 0.0
  %512 = vmatpush.msra.mxu0 0.0
  %513 = vmatpush.msra.mxu0 0.0
  %514 = vmatpush.msra.mxu0 0.0
  %515 = vmatpush.msra.mxu0 0.0
  %516 = vmatpush.msra.mxu0 0.0
  %517 = vmatpush.msra.mxu0 0.0
  %518 = vmatpush.msra.mxu0 0.0
  %519 = vmatpush.msra.mxu0 0.0
  %520 = vmatpush.msra.mxu0 0.0
  %521 = vmatpush.msra.mxu0 0.0
  %522 = vmatpush.msra.mxu0 %v499
  %523 = vmatpush.msra.mxu0 %v497
  %524 = vmatmul.f32.gmra.mxu0 %v503
  %v525 = vpop.f32.mrf.mxu0
  %v526 = vadd.f32 0.0, %v525
  %527 = vmatmul.f32.gmra.mxu0 %v506
  %v528 = vpop.f32.mrf.mxu0
  %v529 = vadd.f32 0.0, %v528
  %530 = vdwg.mxu0
  %531 = vrot.lane.b32.xlu0 %v239, 104
  %v532 = vpop.permute.xlu0 %531
  %533 = vrot.lane.b32.xlu0 %v240, 104
  %v534 = vpop.permute.xlu0 %533
  %535 = vrot.lane.b32.xlu0 %v234, 72
  %v536 = vpop.permute.xlu0 %535
  %537 = vrot.lane.b32.xlu0 %v237, 72
  %v538 = vpop.permute.xlu0 %537
  %v539 = vsel %vm247, %v532, 0
  %v541 = vsel %vm247, %v534, 0
  %v543 = vsel %vm247, %v536, 0
  %v545 = vsel %vm247, %v538, 0
  %547 = vmatpush.xpose.msra.mxu0 0.0
  %548 = vmatpush.xpose.msra.mxu0 0.0
  %549 = vmatpush.xpose.msra.mxu0 0.0
  %550 = vmatpush.xpose.msra.mxu0 0.0
  %551 = vmatpush.xpose.msra.mxu0 0.0
  %552 = vmatpush.xpose.msra.mxu0 0.0
  %553 = vmatpush.xpose.msra.mxu0 0.0
  %554 = vmatpush.xpose.msra.mxu0 0.0
  %555 = vmatpush.xpose.msra.mxu0 0.0
  %556 = vmatpush.xpose.msra.mxu0 0.0
  %557 = vmatpush.xpose.msra.mxu0 0.0
  %558 = vmatpush.xpose.msra.mxu0 0.0
  %559 = vmatpush.xpose.msra.mxu0 0.0
  %560 = vmatpush.xpose.msra.mxu0 0.0
  %561 = vmatpush.xpose.msra.mxu0 %v545
  %562 = vmatpush.xpose.msra.mxu0 %v543
  %563 = vmatmul.f32.gmra.mxu0 %v539
  %v564 = vpop.f32.mrf.mxu0
  %v565 = vadd.f32 0.0, %v564
  %566 = vmatmul.f32.gmra.mxu0 %v541
  %v567 = vpop.f32.mrf.mxu0
  %v568 = vadd.f32 0.0, %v567
  %569 = vdwg.mxu0
  %v570 = vsel %vm281, %v565, -inf
  %571 = vmax.xlane.f32.xlu0 %v570
  %v572 = vpop.xlane.xlu0 %571
  %v573 = vsel %vm281, %v568, -inf
  %574 = vmax.xlane.f32.xlu0 %v573
  %v575 = vpop.xlane.xlu0 %574
  %v576 = vsub.f32 %v565, %v572
  %v577 = vsub.f32 %v568, %v575
  %v578 = vmul.f32 %v576, 1.442695
  %v579 = vpow.pop %v578
  %v580 = vmul.f32 %v577, 1.442695
  %v581 = vpow.pop %v580
  %v582 = vsel %vm281, %v579, 0.0
  %583 = vadd.xlane.f32.xlu0 %v582
  %v584 = vpop.xlane.xlu0 %583
  %v585 = vsel %vm281, %v581, 0.0
  %586 = vadd.xlane.f32.xlu0 %v585
  %v587 = vpop.xlane.xlu0 %586
  %v588 = vrcp.pop %v584
  %v589 = vrcp.pop %v587
  %v590 = vmul.f32 %v579, %v588
  %v591 = vmul.f32 %v581, %v589
  %592 = vrot.lane.b32.xlu0 %v234, 40
  %v593 = vpop.permute.xlu0 %592
  %594 = vrot.lane.b32.xlu0 %v237, 40
  %v595 = vpop.permute.xlu0 %594
  %v599 = vsel %vm281, %v590, 0
  %v602 = vsel %vm281, %v591, 0
  %604 = vmatpush.msra.mxu0 0.0
  %605 = vmatpush.msra.mxu0 0.0
  %606 = vmatpush.msra.mxu0 0.0
  %607 = vmatpush.msra.mxu0 0.0
  %608 = vmatpush.msra.mxu0 0.0
  %609 = vmatpush.msra.mxu0 0.0
  %610 = vmatpush.msra.mxu0 0.0
  %611 = vmatpush.msra.mxu0 0.0
  %612 = vmatpush.msra.mxu0 0.0
  %613 = vmatpush.msra.mxu0 0.0
  %614 = vmatpush.msra.mxu0 0.0
  %615 = vmatpush.msra.mxu0 0.0
  %616 = vmatpush.msra.mxu0 0.0
  %617 = vmatpush.msra.mxu0 0.0
  %618 = vmatpush.msra.mxu0 %v595
  %619 = vmatpush.msra.mxu0 %v593
  %620 = vmatmul.f32.gmra.mxu0 %v599
  %v621 = vpop.f32.mrf.mxu0
  %v622 = vadd.f32 0.0, %v621
  %623 = vmatmul.f32.gmra.mxu0 %v602
  %v624 = vpop.f32.mrf.mxu0
  %v625 = vadd.f32 0.0, %v624
  %626 = vdwg.mxu0
  %629 = vrot.lane.b32.xlu0 %v430, 8
  %v630 = vpop.permute.xlu0 %629
  %631 = vrot.lane.b32.xlu0 %v433, 8
  %v632 = vpop.permute.xlu0 %631
  %637 = vrot.lane.b32.xlu0 %v526, 16
  %v638 = vpop.permute.xlu0 %637
  %639 = vrot.lane.b32.xlu0 %v529, 16
  %v640 = vpop.permute.xlu0 %639
  %645 = vrot.lane.b32.xlu0 %v622, 24
  %v646 = vpop.permute.xlu0 %645
  %647 = vrot.lane.b32.xlu0 %v625, 24
  %v648 = vpop.permute.xlu0 %647
  %v651 = vsel %vm247, %v334, %v630
  %v652 = vsel %vm247, %v337, %v632
  %v653 = vsel %vm281, %v651, %v638
  %v654 = vsel %vm281, %v652, %v640
  %vm655 = vcmask 195584
  %v656 = vsel %vm655, %v653, %v646
  %v657 = vsel %vm655, %v654, %v648
  %v659 = vsel %vm145, %v656, 0
  %v662 = vsel %vm145, %v657, 0
  %664 = vmatpush.msra.mxu0 0.0
  %665 = vmatpush.msra.mxu0 0.0
  %666 = vmatpush.msra.mxu0 0.0
  %667 = vmatpush.msra.mxu0 0.0
  %668 = vmatpush.msra.mxu0 0.0
  %669 = vmatpush.msra.mxu0 0.0
  %670 = vmatpush.msra.mxu0 0.0
  %671 = vmatpush.msra.mxu0 0.0
  %672 = vmatpush.msra.mxu0 0.0
  %673 = vmatpush.msra.mxu0 0.0
  %674 = vmatpush.msra.mxu0 0.0
  %675 = vmatpush.msra.mxu0 0.0
  %676 = vmatpush.msra.mxu0 %v127
  %677 = vmatpush.msra.mxu0 %v126
  %678 = vmatpush.msra.mxu0 %v125
  %679 = vmatpush.msra.mxu0 %v124
  %680 = vmatmul.f32.gmra.mxu0 %v659
  %v681 = vpop.f32.mrf.mxu0
  %v682 = vadd.f32 0.0, %v681
  %683 = vmatmul.f32.gmra.mxu0 %v662
  %v684 = vpop.f32.mrf.mxu0
  %v685 = vadd.f32 0.0, %v684
  %686 = vdwg.mxu0
  %v687 = vadd.f32 %v115, %v682
  %v688 = vadd.f32 %v116, %v685
  %v690 = vperm.slane %v128, 0
  %v692 = vadd.f32 %v687, %v690
  %v693 = vadd.f32 %v688, %v690
  %v694 = vsel %vm145, %v692, 0.0
  %695 = vadd.xlane.f32.xlu0 %v694
  %v696 = vpop.xlane.xlu0 %695
  %v697 = vsel %vm145, %v693, 0.0
  %698 = vadd.xlane.f32.xlu0 %v697
  %v699 = vpop.xlane.xlu0 %698
  %v700 = vmul.f32 %v696, %v158
  %v701 = vmul.f32 %v699, %v158
  %v702 = vsub.f32 %v692, %v700
  %v703 = vsub.f32 %v693, %v701
  %v704 = vmul.f32 %v702, %v702
  %v705 = vmul.f32 %v703, %v703
  %v706 = vsel %vm145, %v704, 0.0
  %707 = vadd.xlane.f32.xlu0 %v706
  %v708 = vpop.xlane.xlu0 %707
  %v709 = vsel %vm145, %v705, 0.0
  %710 = vadd.xlane.f32.xlu0 %v709
  %v711 = vpop.xlane.xlu0 %710
  %v712 = vmul.f32 %v708, %v158
  %v713 = vmul.f32 %v711, %v158
  %v714 = vadd.f32 %v712, 1e-05
  %v715 = vadd.f32 %v713, 1e-05
  %v716 = vrsqrt.pop %v714
  %v717 = vmul.f32 %v716, %v714
  %v718 = vmul.f32 %v717, %v716
  %v719 = vmul.f32 0.5, %v718
  %v720 = vsub.f32 1.5, %v719
  %v721 = vmul.f32 %v716, %v720
  %vm722 = vweird.f32 %v714
  %vm723 = vweird.f32 %v716
  %vm724 = vmor %vm722, %vm723
  %v725 = vsel %vm724, %v716, %v721
  %v726 = vrsqrt.pop %v715
  %v727 = vmul.f32 %v726, %v715
  %v728 = vmul.f32 %v727, %v726
  %v729 = vmul.f32 0.5, %v728
  %v730 = vsub.f32 1.5, %v729
  %v731 = vmul.f32 %v726, %v730
  %vm732 = vweird.f32 %v715
  %vm733 = vweird.f32 %v726
  %vm734 = vmor %vm732, %vm733
  %v735 = vsel %vm734, %v726, %v731
  %v736 = vmul.f32 %v702, %v725
  %v737 = vmul.f32 %v703, %v735
  %v739 = vperm.slane %v129, 0
  %v741 = vmul.f32 %v736, %v739
  %v742 = vmul.f32 %v737, %v739
  %v744 = vperm.slane %v130, 0
  %v746 = vadd.f32 %v741, %v744
  %v747 = vadd.f32 %v742, %v744
  %v749 = vperm.slane %v135, 0
  %v752 = vsel %vm145, %v746, 0
  %v755 = vsel %vm145, %v747, 0
  %757 = vmatpush.msra.mxu0 0.0
  %758 = vmatpush.msra.mxu0 0.0
  %759 = vmatpush.msra.mxu0 0.0
  %760 = vmatpush.msra.mxu0 0.0
  %761 = vmatpush.msra.mxu0 0.0
  %762 = vmatpush.msra.mxu0 0.0
  %763 = vmatpush.msra.mxu0 0.0
  %764 = vmatpush.msra.mxu0 0.0
  %765 = vmatpush.msra.mxu0 0.0
  %766 = vmatpush.msra.mxu0 0.0
  %767 = vmatpush.msra.mxu0 0.0
  %768 = vmatpush.msra.mxu0 0.0
  %769 = vmatpush.msra.mxu0 %v134
  %770 = vmatpush.msra.mxu0 %v133
  %771 = vmatpush.msra.mxu0 %v132
  %772 = vmatpush.msra.mxu0 %v131
  %773 = vmatmul.f32.gmra.mxu0 %v752
  %v774 = vpop.f32.mrf.mxu0
  %v775 = vadd.f32 %v749, %v774
  %776 = vmatmul.f32.gmra.mxu0 %v755
  %v777 = vpop.f32.mrf.mxu0
  %v778 = vadd.f32 %v749, %v777
  %779 = vdwg.mxu0
  %v780 = vmul.f32 %v775, %v775
  %v781 = vmul.f32 %v778, %v778
  %v782 = vmul.f32 %v775, %v780
  %v783 = vmul.f32 %v778, %v781
  %v784 = vmul.f32 %v782, 0.044715
  %v785 = vmul.f32 %v783, 0.044715
  %v786 = vadd.f32 %v775, %v784
  %v787 = vadd.f32 %v778, %v785
  %v788 = vmul.f32 %v786, 0.7978846
  %v789 = vmul.f32 %v787, 0.7978846
  %v790 = vtanh.pop %v788
  %v791 = vtanh.pop %v789
  %v792 = vadd.f32 %v790, 1.0
  %v793 = vadd.f32 %v791, 1.0
  %v794 = vmul.f32 %v792, 0.5
  %v795 = vmul.f32 %v793, 0.5
  %v796 = vmul.f32 %v775, %v794
  %v797 = vmul.f32 %v778, %v795
  %vm798 = vcmask 523264
  %v800 = vsel %vm798, %v796, 0
  %v803 = vsel %vm798, %v797, 0
  %805 = vmatpush.msra.mxu0 0.0
  %806 = vmatpush.msra.mxu0 0.0
  %807 = vmatpush.msra.mxu0 0.0
  %808 = vmatpush.msra.mxu0 0.0
  %809 = vmatpush.msra.mxu0 0.0
  %810 = vmatpush.msra.mxu0 0.0
  %811 = vmatpush.msra.mxu0 0.0
  %812 = vmatpush.msra.mxu0 0.0
  %813 = vmatpush.msra.mxu0 %v143
  %814 = vmatpush.msra.mxu0 %v142
  %815 = vmatpush.msra.mxu0 %v141
  %816 = vmatpush.msra.mxu0 %v140
  %817 = vmatpush.msra.mxu0 %v139
  %818 = vmatpush.msra.mxu0 %v138
  %819 = vmatpush.msra.mxu0 %v137
  %820 = vmatpush.msra.mxu0 %v136
  %821 = vmatmul.f32.gmra.mxu0 %v800
  %v822 = vpop.f32.mrf.mxu0
  %v823 = vadd.f32 0.0, %v822
  %824 = vmatmul.f32.gmra.mxu0 %v803
  %v825 = vpop.f32.mrf.mxu0
  %v826 = vadd.f32 0.0, %v825
  %827 = vdwg.mxu0
  %v828 = vadd.f32 %v692, %v823
  %v829 = vadd.f32 %v693, %v826
  %v831 = vperm.slane %v144, 0
  %v833 = vadd.f32 %v828, %v831
  %v834 = vadd.f32 %v829, %v831
  %v835 = vld [vmem:[%s16] sm:$0x1]
  %v836 = vld [vmem:[%s17] sm:$0x1]
  %v837 = vsel %vm145, %v833, 0.0
  %838 = vadd.xlane.f32.xlu0 %v837
  %v839 = vpop.xlane.xlu0 %838
  %v840 = vsel %vm145, %v834, 0.0
  %841 = vadd.xlane.f32.xlu0 %v840
  %v842 = vpop.xlane.xlu0 %841
  %v843 = vmul.f32 %v839, %v158
  %v844 = vmul.f32 %v842, %v158
  %v845 = vsub.f32 %v833, %v843
  %v846 = vsub.f32 %v834, %v844
  %v847 = vmul.f32 %v845, %v845
  %v848 = vmul.f32 %v846, %v846
  %v849 = vsel %vm145, %v847, 0.0
  %850 = vadd.xlane.f32.xlu0 %v849
  %v851 = vpop.xlane.xlu0 %850
  %v852 = vsel %vm145, %v848, 0.0
  %853 = vadd.xlane.f32.xlu0 %v852
  %v854 = vpop.xlane.xlu0 %853
  %v855 = vmul.f32 %v851, %v158
  %v856 = vmul.f32 %v854, %v158
  %v857 = vadd.f32 %v855, 1e-05
  %v858 = vadd.f32 %v856, 1e-05
  %v859 = vrsqrt.pop %v857
  %v860 = vmul.f32 %v859, %v857
  %v861 = vmul.f32 %v860, %v859
  %v862 = vmul.f32 0.5, %v861
  %v863 = vsub.f32 1.5, %v862
  %v864 = vmul.f32 %v859, %v863
  %vm865 = vweird.f32 %v857
  %vm866 = vweird.f32 %v859
  %vm867 = vmor %vm865, %vm866
  %v868 = vsel %vm867, %v859, %v864
  %v869 = vrsqrt.pop %v858
  %v870 = vmul.f32 %v869, %v858
  %v871 = vmul.f32 %v870, %v869
  %v872 = vmul.f32 0.5, %v871
  %v873 = vsub.f32 1.5, %v872
  %v874 = vmul.f32 %v869, %v873
  %vm875 = vweird.f32 %v858
  %vm876 = vweird.f32 %v869
  %vm877 = vmor %vm875, %vm876
  %v878 = vsel %vm877, %v869, %v874
  %v879 = vmul.f32 %v845, %v868
  %v880 = vmul.f32 %v846, %v878
  %v882 = vperm.slane %v835, 0
  %v884 = vmul.f32 %v879, %v882
  %v885 = vmul.f32 %v880, %v882
  %v887 = vperm.slane %v836, 0
  %v889 = vadd.f32 %v884, %v887
  %v890 = vadd.f32 %v885, %v887
  %v891 = vld [vmem:[%s18] sm:$0xff]
  %v892 = vld [vmem:[%s18 + $0x8] sm:$0xff]
  %v893 = vld [vmem:[%s18 + $0x10] sm:$0xff]
  %v894 = vld [vmem:[%s18 + $0x18] sm:$0xff]
  %v895 = vld [vmem:[%s19] sm:$0x1]
  %v897 = vperm.slane %v895, 0
  %v900 = vsel %vm145, %v889, 0
  %v903 = vsel %vm145, %v890, 0
  %905 = vmatpush.msra.mxu0 0.0
  %906 = vmatpush.msra.mxu0 0.0
  %907 = vmatpush.msra.mxu0 0.0
  %908 = vmatpush.msra.mxu0 0.0
  %909 = vmatpush.msra.mxu0 0.0
  %910 = vmatpush.msra.mxu0 0.0
  %911 = vmatpush.msra.mxu0 0.0
  %912 = vmatpush.msra.mxu0 0.0
  %913 = vmatpush.msra.mxu0 0.0
  %914 = vmatpush.msra.mxu0 0.0
  %915 = vmatpush.msra.mxu0 0.0
  %916 = vmatpush.msra.mxu0 0.0
  %917 = vmatpush.msra.mxu0 %v894
  %918 = vmatpush.msra.mxu0 %v893
  %919 = vmatpush.msra.mxu0 %v892
  %920 = vmatpush.msra.mxu0 %v891
  %921 = vmatmul.f32.gmra.mxu0 %v900
  %v922 = vpop.f32.mrf.mxu0
  %v923 = vadd.f32 %v897, %v922
  %924 = vmatmul.f32.gmra.mxu0 %v903
  %v925 = vpop.f32.mrf.mxu0
  %v926 = vadd.f32 %v897, %v925
  %927 = vdwg.mxu0
  %v928 = vmul.f32 %v923, %v923
  %v929 = vmul.f32 %v926, %v926
  %v930 = vmul.f32 %v923, %v928
  %v931 = vmul.f32 %v926, %v929
  %v932 = vmul.f32 %v930, 0.044715
  %v933 = vmul.f32 %v931, 0.044715
  %v934 = vadd.f32 %v923, %v932
  %v935 = vadd.f32 %v926, %v933
  %v936 = vmul.f32 %v934, 0.7978846
  %v937 = vmul.f32 %v935, 0.7978846
  %v938 = vtanh.pop %v936
  %v939 = vtanh.pop %v937
  %v940 = vadd.f32 %v938, 1.0
  %v941 = vadd.f32 %v939, 1.0
  %v942 = vmul.f32 %v940, 0.5
  %v943 = vmul.f32 %v941, 0.5
  %v944 = vmul.f32 %v923, %v942
  %v945 = vmul.f32 %v926, %v943
  %v946 = vld [vmem:[%s20] sm:$0xff]
  %v947 = vld [vmem:[%s20 + $0x8] sm:$0xff]
  %v948 = vld [vmem:[%s20 + $0x10] sm:$0xff]
  %v949 = vld [vmem:[%s20 + $0x18] sm:$0xff]
  %v950 = vld [vmem:[%s21] sm:$0x1]
  %v952 = vperm.slane %v950, 0
  %v955 = vsel %vm145, %v944, 0
  %v958 = vsel %vm145, %v945, 0
  %960 = vmatpush.msra.mxu0 0.0
  %961 = vmatpush.msra.mxu0 0.0
  %962 = vmatpush.msra.mxu0 0.0
  %963 = vmatpush.msra.mxu0 0.0
  %964 = vmatpush.msra.mxu0 0.0
  %965 = vmatpush.msra.mxu0 0.0
  %966 = vmatpush.msra.mxu0 0.0
  %967 = vmatpush.msra.mxu0 0.0
  %968 = vmatpush.msra.mxu0 0.0
  %969 = vmatpush.msra.mxu0 0.0
  %970 = vmatpush.msra.mxu0 0.0
  %971 = vmatpush.msra.mxu0 0.0
  %972 = vmatpush.msra.mxu0 %v949
  %973 = vmatpush.msra.mxu0 %v948
  %974 = vmatpush.msra.mxu0 %v947
  %975 = vmatpush.msra.mxu0 %v946
  %976 = vmatmul.f32.gmra.mxu0 %v955
  %v977 = vpop.f32.mrf.mxu0
  %v978 = vadd.f32 %v952, %v977
  %979 = vmatmul.f32.gmra.mxu0 %v958
  %v980 = vpop.f32.mrf.mxu0
  %v981 = vadd.f32 %v952, %v980
  %982 = vdwg.mxu0
  %983 = vst.msk [vmem:[%s22] sm:$0xff] %vm145, %v978
  %984 = vst.msk [vmem:[%s22 + $0x8] sm:$0xff] %vm145, %v981
  // Predicated region
  $region90: #{_generate.1} parent=0 // pred_check
    _
  $region91: #{_generate.1} parent=0 // pred_check_branch
    %986 = sbr.rel (0) target = $region93
  $region92: #{_generate.1} parent=0 // pred_region
    _
  $region93: #{_generate.1} parent=0 // pred_fallthru
    _
  // Predicated region
  $region94: #{_generate.1} parent=0 // pred_check
    _
  $region95: #{_generate.1} parent=0 // pred_check_branch
    %988 = sbr.rel (0) target = $region97
  $region96: #{_generate.1} parent=0 // pred_region
    _
  $region97: #{_generate.1} parent=0 // pred_fallthru
    _

// kernel: closed_call.31
$region0: #{closed_call.31}
  #allocation0 [shape = 'u32[]', space=smem, size = 0x4, offset = 0x4, fixed_abs, tag = 'smem constant byte address 0x4 - core index']
  #allocation1 [shape = 'u32[72,128]{1,0:T(1,128)}', space=vmem, size = 0x9000, scoped, tag = 'internal scratch']
  #allocation2 [shape = 's32[1]{0:T(128)S(6)}', space=smem, size = 0x200, scoped, tag = 'scoped memory for closed_call.31']
  %s0 = inlined_call_operand.<no memory space> [shape: s32[1], index: 0, kind: input, shape index: {}]
  %s1 = inlined_call_operand.vmem [shape: f32[32,32], index: 1, kind: input, shape index: {}]
  %s2 = inlined_call_operand.vmem [shape: f32[1,32], index: 2, kind: input, shape index: {}]
  %s3 = inlined_call_operand.vmem [shape: f32[1,32], index: 3, kind: input, shape index: {}]
  %s4 = inlined_call_operand.vmem [shape: f32[32,96], index: 4, kind: input, shape index: {}]
  %s5 = inlined_call_operand.vmem [shape: f32[1,96], index: 5, kind: input, shape index: {}]
  %s6 = inlined_call_operand.vmem [shape: f32[32,32], index: 6, kind: input, shape index: {}]
  %s7 = inlined_call_operand.vmem [shape: f32[1,32], index: 7, kind: input, shape index: {}]
  %s8 = inlined_call_operand.vmem [shape: f32[1,32], index: 8, kind: input, shape index: {}]
  %s9 = inlined_call_operand.vmem [shape: f32[1,32], index: 9, kind: input, shape index: {}]
  %s10 = inlined_call_operand.vmem [shape: f32[32,64], index: 10, kind: input, shape index: {}]
  %s11 = inlined_call_operand.vmem [shape: f32[1,64], index: 11, kind: input, shape index: {}]
  %s12 = inlined_call_operand.vmem [shape: f32[64,32], index: 12, kind: input, shape index: {}]
  %s13 = inlined_call_operand.vmem [shape: f32[1,32], index: 13, kind: input, shape index: {}]
  %s14 = inlined_call_operand.vmem [shape: f32[1,32], index: 14, kind: input, shape index: {}]
  %s15 = inlined_call_operand.vmem [shape: f32[1,32], index: 15, kind: input, shape index: {}]
  %s16 = inlined_call_operand.vmem [shape: f32[32,64], index: 16, kind: input, shape index: {}]
  %s17 = inlined_call_operand.vmem [shape: f32[1,64], index: 17, kind: input, shape index: {}]
  %s18 = inlined_call_operand.vmem [shape: f32[1,64], index: 18, kind: output, shape index: {}]
  %s19 = sld [smem:[#allocation0]]
  $region82: #{closed_call.31} parent=0
    _
  %s21 = ssub.s32 1, %s19
  %s22 = scalar_select 0, %s21, %s19
  %23 = sst [smem:[#allocation2]] %s0
  // Predicated region
  $region2: #{closed_call.31} parent=0 // pred_check
    _
  $region3: #{closed_call.31} parent=0 // pred_check_branch
    %25 = sbr.rel (0) target = $region5
  $region4: #{closed_call.31} parent=0 // pred_region
    _
  $region5: #{closed_call.31} parent=0 // pred_fallthru
    _
  // Predicated region
  $region6: #{closed_call.31} parent=0 // pred_check
    _
  $region7: #{closed_call.31} parent=0 // pred_check_branch
    %27 = sbr.rel (0) target = $region9
  $region8: #{closed_call.31} parent=0 // pred_region
    _
  $region9: #{closed_call.31} parent=0 // pred_fallthru
    _
  // Predicated region
  $region10: #{closed_call.31} parent=0 // pred_check
    _
  $region11: #{closed_call.31} parent=0 // pred_check_branch
    %29 = sbr.rel (0) target = $region13
  $region12: #{closed_call.31} parent=0 // pred_region
    _
  $region13: #{closed_call.31} parent=0 // pred_fallthru
    _
  // Predicated region
  $region14: #{closed_call.31} parent=0 // pred_check
    _
  $region15: #{closed_call.31} parent=0 // pred_check_branch
    %31 = sbr.rel (0) target = $region17
  $region16: #{closed_call.31} parent=0 // pred_region
    _
  $region17: #{closed_call.31} parent=0 // pred_fallthru
    _
  // Predicated region
  $region18: #{closed_call.31} parent=0 // pred_check
    _
  $region19: #{closed_call.31} parent=0 // pred_check_branch
    %33 = sbr.rel (0) target = $region21
  $region20: #{closed_call.31} parent=0 // pred_region
    _
  $region21: #{closed_call.31} parent=0 // pred_fallthru
    _
  // Predicated region
  $region22: #{closed_call.31} parent=0 // pred_check
    _
  $region23: #{closed_call.31} parent=0 // pred_check_branch
    %35 = sbr.rel (0) target = $region25
  $region24: #{closed_call.31} parent=0 // pred_region
    _
  $region25: #{closed_call.31} parent=0 // pred_fallthru
    _
  // Predicated region
  $region26: #{closed_call.31} parent=0 // pred_check
    _
  $region27: #{closed_call.31} parent=0 // pred_check_branch
    %37 = sbr.rel (0) target = $region29
  $region28: #{closed_call.31} parent=0 // pred_region
    _
  $region29: #{closed_call.31} parent=0 // pred_fallthru
    _
  // Predicated region
  $region30: #{closed_call.31} parent=0 // pred_check
    _
  $region31: #{closed_call.31} parent=0 // pred_check_branch
    %39 = sbr.rel (0) target = $region33
  $region32: #{closed_call.31} parent=0 // pred_region
    _
  $region33: #{closed_call.31} parent=0 // pred_fallthru
    _
  // Predicated region
  $region34: #{closed_call.31} parent=0 // pred_check
    _
  $region35: #{closed_call.31} parent=0 // pred_check_branch
    %41 = sbr.rel (0) target = $region37
  $region36: #{closed_call.31} parent=0 // pred_region
    _
  $region37: #{closed_call.31} parent=0 // pred_fallthru
    _
  // Predicated region
  $region38: #{closed_call.31} parent=0 // pred_check
    _
  $region39: #{closed_call.31} parent=0 // pred_check_branch
    %43 = sbr.rel (0) target = $region41
  $region40: #{closed_call.31} parent=0 // pred_region
    _
  $region41: #{closed_call.31} parent=0 // pred_fallthru
    _
  // Predicated region
  $region42: #{closed_call.31} parent=0 // pred_check
    _
  $region43: #{closed_call.31} parent=0 // pred_check_branch
    %45 = sbr.rel (0) target = $region45
  $region44: #{closed_call.31} parent=0 // pred_region
    _
  $region45: #{closed_call.31} parent=0 // pred_fallthru
    _
  // Predicated region
  $region46: #{closed_call.31} parent=0 // pred_check
    _
  $region47: #{closed_call.31} parent=0 // pred_check_branch
    %47 = sbr.rel (0) target = $region49
  $region48: #{closed_call.31} parent=0 // pred_region
    _
  $region49: #{closed_call.31} parent=0 // pred_fallthru
    _
  // Predicated region
  $region50: #{closed_call.31} parent=0 // pred_check
    _
  $region51: #{closed_call.31} parent=0 // pred_check_branch
    %49 = sbr.rel (0) target = $region53
  $region52: #{closed_call.31} parent=0 // pred_region
    _
  $region53: #{closed_call.31} parent=0 // pred_fallthru
    _
  // Predicated region
  $region54: #{closed_call.31} parent=0 // pred_check
    _
  $region55: #{closed_call.31} parent=0 // pred_check_branch
    %51 = sbr.rel (0) target = $region57
  $region56: #{closed_call.31} parent=0 // pred_region
    _
  $region57: #{closed_call.31} parent=0 // pred_fallthru
    _
  // Predicated region
  $region58: #{closed_call.31} parent=0 // pred_check
    _
  $region59: #{closed_call.31} parent=0 // pred_check_branch
    %53 = sbr.rel (0) target = $region61
  $region60: #{closed_call.31} parent=0 // pred_region
    _
  $region61: #{closed_call.31} parent=0 // pred_fallthru
    _
  // Predicated region
  $region62: #{closed_call.31} parent=0 // pred_check
    _
  $region63: #{closed_call.31} parent=0 // pred_check_branch
    %55 = sbr.rel (0) target = $region65
  $region64: #{closed_call.31} parent=0 // pred_region
    _
  $region65: #{closed_call.31} parent=0 // pred_fallthru
    _
  // Predicated region
  $region66: #{closed_call.31} parent=0 // pred_check
    _
  $region67: #{closed_call.31} parent=0 // pred_check_branch
    %57 = sbr.rel (0) target = $region69
  $region68: #{closed_call.31} parent=0 // pred_region
    _
  $region69: #{closed_call.31} parent=0 // pred_fallthru
    _
  // Predicated region
  $region70: #{closed_call.31} parent=0 // pred_check
    _
  $region71: #{closed_call.31} parent=0 // pred_check_branch
    %59 = sbr.rel (0) target = $region73
  $region72: #{closed_call.31} parent=0 // pred_region
    _
  $region73: #{closed_call.31} parent=0 // pred_fallthru
    _
  %s60 = sld [smem:[#allocation2]]
  %v61 = vld [vmem:[%s1] sm:$0xff]
  %v62 = vld [vmem:[%s1 + $0x8] sm:$0xff]
  %v63 = vld [vmem:[%s1 + $0x10] sm:$0xff]
  %v64 = vld [vmem:[%s1 + $0x18] sm:$0xff]
  %v65 = vlaneseq
  %v66 = vshrl.u32 %v65, 7
  %v67 = vadd.s32 %v66, 8
  %v68 = vadd.s32 %v66, 16
  %v69 = vadd.s32 %v66, 24
  %v70 = vlaneseq
  %v71 = vand.u32 %v70, 127
  %vm72 = vcmp.le.s32.totalorder %v71, %v66
  %vm73 = vcmp.le.s32.totalorder %v71, %v67
  %vm74 = vcmp.le.s32.totalorder %v71, %v68
  %vm75 = vcmp.le.s32.totalorder %v71, %v69
  %v76 = vstv %s60
  %vm77 = vcmp.lt.s32.totalorder %v71, %v76
  %vm78 = vmand %vm72, %vm77
  %vm79 = vmand %vm73, %vm77
  %vm80 = vmand %vm74, %vm77
  %vm81 = vmand %vm75, %vm77
  %v82 = vsel %vm78, 0.0, -1e+09
  %v83 = vsel %vm79, 0.0, -1e+09
  %v84 = vsel %vm80, 0.0, -1e+09
  %v85 = vsel %vm81, 0.0, -1e+09
  %v86 = vld [vmem:[%s2] sm:$0x1]
  %v87 = vld [vmem:[%s3] sm:$0x1]
  %v88 = vld [vmem:[%s4] sm:$0xff]
  %v89 = vld [vmem:[%s4 + $0x8] sm:$0xff]
  %v90 = vld [vmem:[%s4 + $0x10] sm:$0xff]
  %v91 = vld [vmem:[%s4 + $0x18] sm:$0xff]
  %v92 = vld [vmem:[%s5] sm:$0x1]
  %v93 = vld [vmem:[%s6] sm:$0xff]
  %v94 = vld [vmem:[%s6 + $0x8] sm:$0xff]
  %v95 = vld [vmem:[%s6 + $0x10] sm:$0xff]
  %v96 = vld [vmem:[%s6 + $0x18] sm:$0xff]
  %v97 = vld [vmem:[%s7] sm:$0x1]
  %v98 = vld [vmem:[%s8] sm:$0x1]
  %v99 = vld [vmem:[%s9] sm:$0x1]
  %v100 = vld [vmem:[%s10] sm:$0xff]
  %v101 = vld [vmem:[%s10 + $0x8] sm:$0xff]
  %v102 = vld [vmem:[%s10 + $0x10] sm:$0xff]
  %v103 = vld [vmem:[%s10 + $0x18] sm:$0xff]
  %v104 = vld [vmem:[%s11] sm:$0x1]
  %v105 = vld [vmem:[%s12] sm:$0xff]
  %v106 = vld [vmem:[%s12 + $0x8] sm:$0xff]
  %v107 = vld [vmem:[%s12 + $0x10] sm:$0xff]
  %v108 = vld [vmem:[%s12 + $0x18] sm:$0xff]
  %v109 = vld [vmem:[%s12 + $0x20] sm:$0xff]
  %v110 = vld [vmem:[%s12 + $0x28] sm:$0xff]
  %v111 = vld [vmem:[%s12 + $0x30] sm:$0xff]
  %v112 = vld [vmem:[%s12 + $0x38] sm:$0xff]
  %v113 = vld [vmem:[%s13] sm:$0x1]
  %vm114 = vcmask 261120
  %v115 = vsel %vm114, %v61, 0.0
  %116 = vadd.xlane.f32.xlu0 %v115
  %v117 = vpop.xlane.xlu0 %116
  %v118 = vsel %vm114, %v62, 0.0
  %119 = vadd.xlane.f32.xlu0 %v118
  %v120 = vpop.xlane.xlu0 %119
  %v121 = vsel %vm114, %v63, 0.0
  %122 = vadd.xlane.f32.xlu0 %v121
  %v123 = vpop.xlane.xlu0 %122
  %v124 = vsel %vm114, %v64, 0.0
  %125 = vadd.xlane.f32.xlu0 %v124
  %v126 = vpop.xlane.xlu0 %125
  %v127 = vrcp.pop 32.0
  %v128 = vmul.f32 32.0, %v127
  %v129 = vsub.f32 1.0, %v128
  %v130 = vmul.f32 %v127, %v129
  %v131 = vadd.f32 %v127, %v130
  %vm132 = vweird.f32 %v127
  %v133 = vsel %vm132, %v127, %v131
  %v134 = vmul.f32 %v117, %v133
  %v135 = vmul.f32 %v120, %v133
  %v136 = vmul.f32 %v123, %v133
  %v137 = vmul.f32 %v126, %v133
  %v138 = vsub.f32 %v61, %v134
  %v139 = vsub.f32 %v62, %v135
  %v140 = vsub.f32 %v63, %v136
  %v141 = vsub.f32 %v64, %v137
  %v142 = vmul.f32 %v138, %v138
  %v143 = vmul.f32 %v139, %v139
  %v144 = vmul.f32 %v140, %v140
  %v145 = vmul.f32 %v141, %v141
  %v146 = vsel %vm114, %v142, 0.0
  %147 = vadd.xlane.f32.xlu0 %v146
  %v148 = vpop.xlane.xlu0 %147
  %v149 = vsel %vm114, %v143, 0.0
  %150 = vadd.xlane.f32.xlu0 %v149
  %v151 = vpop.xlane.xlu0 %150
  %v152 = vsel %vm114, %v144, 0.0
  %153 = vadd.xlane.f32.xlu0 %v152
  %v154 = vpop.xlane.xlu0 %153
  %v155 = vsel %vm114, %v145, 0.0
  %156 = vadd.xlane.f32.xlu0 %v155
  %v157 = vpop.xlane.xlu0 %156
  %v158 = vmul.f32 %v148, %v133
  %v159 = vmul.f32 %v151, %v133
  %v160 = vmul.f32 %v154, %v133
  %v161 = vmul.f32 %v157, %v133
  %v162 = vadd.f32 %v158, 1e-05
  %v163 = vadd.f32 %v159, 1e-05
  %v164 = vadd.f32 %v160, 1e-05
  %v165 = vadd.f32 %v161, 1e-05
  %v166 = vrsqrt.pop %v162
  %v167 = vmul.f32 %v166, %v162
  %v168 = vmul.f32 %v167, %v166
  %v169 = vmul.f32 0.5, %v168
  %v170 = vsub.f32 1.5, %v169
  %v171 = vmul.f32 %v166, %v170
  %vm172 = vweird.f32 %v162
  %vm173 = vweird.f32 %v166
  %vm174 = vmor %vm172, %vm173
  %v175 = vsel %vm174, %v166, %v171
  %v176 = vrsqrt.pop %v163
  %v177 = vmul.f32 %v176, %v163
  %v178 = vmul.f32 %v177, %v176
  %v179 = vmul.f32 0.5, %v178
  %v180 = vsub.f32 1.5, %v179
  %v181 = vmul.f32 %v176, %v180
  %vm182 = vweird.f32 %v163
  %vm183 = vweird.f32 %v176
  %vm184 = vmor %vm182, %vm183
  %v185 = vsel %vm184, %v176, %v181
  %v186 = vrsqrt.pop %v164
  %v187 = vmul.f32 %v186, %v164
  %v188 = vmul.f32 %v187, %v186
  %v189 = vmul.f32 0.5, %v188
  %v190 = vsub.f32 1.5, %v189
  %v191 = vmul.f32 %v186, %v190
  %vm192 = vweird.f32 %v164
  %vm193 = vweird.f32 %v186
  %vm194 = vmor %vm192, %vm193
  %v195 = vsel %vm194, %v186, %v191
  %v196 = vrsqrt.pop %v165
  %v197 = vmul.f32 %v196, %v165
  %v198 = vmul.f32 %v197, %v196
  %v199 = vmul.f32 0.5, %v198
  %v200 = vsub.f32 1.5, %v199
  %v201 = vmul.f32 %v196, %v200
  %vm202 = vweird.f32 %v165
  %vm203 = vweird.f32 %v196
  %vm204 = vmor %vm202, %vm203
  %v205 = vsel %vm204, %v196, %v201
  %v206 = vmul.f32 %v138, %v175
  %v207 = vmul.f32 %v139, %v185
  %v208 = vmul.f32 %v140, %v195
  %v209 = vmul.f32 %v141, %v205
  %v211 = vperm.slane %v86, 0
  %v213 = vmul.f32 %v206, %v211
  %v214 = vmul.f32 %v207, %v211
  %v215 = vmul.f32 %v208, %v211
  %v216 = vmul.f32 %v209, %v211
  %v218 = vperm.slane %v87, 0
  %v220 = vadd.f32 %v213, %v218
  %v221 = vadd.f32 %v214, %v218
  %v222 = vadd.f32 %v215, %v218
  %v223 = vadd.f32 %v216, %v218
  %v225 = vperm.slane %v92, 0
  %v228 = vsel %vm114, %v220, 0
  %v231 = vsel %vm114, %v221, 0
  %v234 = vsel %vm114, %v222, 0
  %v237 = vsel %vm114, %v223, 0
  %239 = vmatpush.msra.mxu0 0.0
  %240 = vmatpush.msra.mxu0 0.0
  %241 = vmatpush.msra.mxu0 0.0
  %242 = vmatpush.msra.mxu0 0.0
  %243 = vmatpush.msra.mxu0 0.0
  %244 = vmatpush.msra.mxu0 0.0
  %245 = vmatpush.msra.mxu0 0.0
  %246 = vmatpush.msra.mxu0 0.0
  %247 = vmatpush.msra.mxu0 0.0
  %248 = vmatpush.msra.mxu0 0.0
  %249 = vmatpush.msra.mxu0 0.0
  %250 = vmatpush.msra.mxu0 0.0
  %251 = vmatpush.msra.mxu0 %v91
  %252 = vmatpush.msra.mxu0 %v90
  %253 = vmatpush.msra.mxu0 %v89
  %254 = vmatpush.msra.mxu0 %v88
  %255 = vmatmul.f32.gmra.mxu0 %v228
  %v256 = vpop.f32.mrf.mxu0
  %v257 = vadd.f32 %v225, %v256
  %258 = vmatmul.f32.gmra.mxu0 %v231
  %v259 = vpop.f32.mrf.mxu0
  %v260 = vadd.f32 %v225, %v259
  %261 = vmatmul.f32.gmra.mxu0 %v234
  %v262 = vpop.f32.mrf.mxu0
  %v263 = vadd.f32 %v225, %v262
  %264 = vmatmul.f32.gmra.mxu0 %v237
  %v265 = vpop.f32.mrf.mxu0
  %v266 = vadd.f32 %v225, %v265
  %267 = vdwg.mxu0
  %v268 = vmul.f32 %v257, 0.35355338
  %v269 = vmul.f32 %v260, 0.35355338
  %v270 = vmul.f32 %v263, 0.35355338
  %v271 = vmul.f32 %v266, 0.35355338
  %276 = vrot.lane.b32.xlu0 %v257, 96
  %v277 = vpop.permute.xlu0 %276
  %278 = vrot.lane.b32.xlu0 %v260, 96
  %v279 = vpop.permute.xlu0 %278
  %280 = vrot.lane.b32.xlu0 %v263, 96
  %v281 = vpop.permute.xlu0 %280
  %282 = vrot.lane.b32.xlu0 %v266, 96
  %v283 = vpop.permute.xlu0 %282
  %vm284 = vcmask 64512
  %v286 = vsel %vm284, %v268, 0
  %v289 = vsel %vm284, %v269, 0
  %v292 = vsel %vm284, %v270, 0
  %v295 = vsel %vm284, %v271, 0
  %v297 = vsel %vm284, %v277, 0
  %v299 = vsel %vm284, %v279, 0
  %v301 = vsel %vm284, %v281, 0
  %v303 = vsel %vm284, %v283, 0
  %305 = vmatpush.xpose.msra.mxu0 0.0
  %306 = vmatpush.xpose.msra.mxu0 0.0
  %307 = vmatpush.xpose.msra.mxu0 0.0
  %308 = vmatpush.xpose.msra.mxu0 0.0
  %309 = vmatpush.xpose.msra.mxu0 0.0
  %310 = vmatpush.xpose.msra.mxu0 0.0
  %311 = vmatpush.xpose.msra.mxu0 0.0
  %312 = vmatpush.xpose.msra.mxu0 0.0
  %313 = vmatpush.xpose.msra.mxu0 0.0
  %314 = vmatpush.xpose.msra.mxu0 0.0
  %315 = vmatpush.xpose.msra.mxu0 0.0
  %316 = vmatpush.xpose.msra.mxu0 0.0
  %317 = vmatpush.xpose.msra.mxu0 %v303
  %318 = vmatpush.xpose.msra.mxu0 %v301
  %319 = vmatpush.xpose.msra.mxu0 %v299
  %320 = vmatpush.xpose.msra.mxu0 %v297
  %321 = vmatmul.f32.gmra.mxu0 %v286
  %v322 = vpop.f32.mrf.mxu0
  %v323 = vadd.f32 %v82, %v322
  %324 = vmatmul.f32.gmra.mxu0 %v289
  %v325 = vpop.f32.mrf.mxu0
  %v326 = vadd.f32 %v83, %v325
  %327 = vmatmul.f32.gmra.mxu0 %v292
  %v328 = vpop.f32.mrf.mxu0
  %v329 = vadd.f32 %v84, %v328
  %330 = vmatmul.f32.gmra.mxu0 %v295
  %v331 = vpop.f32.mrf.mxu0
  %v332 = vadd.f32 %v85, %v331
  %333 = vdwg.mxu0
  %v334 = vsel %vm114, %v323, -inf
  %335 = vmax.xlane.f32.xlu0 %v334
  %v336 = vpop.xlane.xlu0 %335
  %v337 = vsel %vm114, %v326, -inf
  %338 = vmax.xlane.f32.xlu0 %v337
  %v339 = vpop.xlane.xlu0 %338
  %v340 = vsel %vm114, %v329, -inf
  %341 = vmax.xlane.f32.xlu0 %v340
  %v342 = vpop.xlane.xlu0 %341
  %v343 = vsel %vm114, %v332, -inf
  %344 = vmax.xlane.f32.xlu0 %v343
  %v345 = vpop.xlane.xlu0 %344
  %v346 = vsub.f32 %v323, %v336
  %v347 = vsub.f32 %v326, %v339
  %v348 = vsub.f32 %v329, %v342
  %v349 = vsub.f32 %v332, %v345
  %v350 = vmul.f32 %v346, 1.442695
  %v351 = vpow.pop %v350
  %v352 = vmul.f32 %v347, 1.442695
  %v353 = vpow.pop %v352
  %v354 = vmul.f32 %v348, 1.442695
  %v355 = vpow.pop %v354
  %v356 = vmul.f32 %v349, 1.442695
  %v357 = vpow.pop %v356
  %v358 = vsel %vm114, %v351, 0.0
  %359 = vadd.xlane.f32.xlu0 %v358
  %v360 = vpop.xlane.xlu0 %359
  %v361 = vsel %vm114, %v353, 0.0
  %362 = vadd.xlane.f32.xlu0 %v361
  %v363 = vpop.xlane.xlu0 %362
  %v364 = vsel %vm114, %v355, 0.0
  %365 = vadd.xlane.f32.xlu0 %v364
  %v366 = vpop.xlane.xlu0 %365
  %v367 = vsel %vm114, %v357, 0.0
  %368 = vadd.xlane.f32.xlu0 %v367
  %v369 = vpop.xlane.xlu0 %368
  %v370 = vrcp.pop %v360
  %v371 = vrcp.pop %v363
  %v372 = vrcp.pop %v366
  %v373 = vrcp.pop %v369
  %v374 = vmul.f32 %v351, %v370
  %v375 = vmul.f32 %v353, %v371
  %v376 = vmul.f32 %v355, %v372
  %v377 = vmul.f32 %v357, %v373
  %378 = vrot.lane.b32.xlu0 %v257, 64
  %v379 = vpop.permute.xlu0 %378
  %380 = vrot.lane.b32.xlu0 %v260, 64
  %v381 = vpop.permute.xlu0 %380
  %382 = vrot.lane.b32.xlu0 %v263, 64
  %v383 = vpop.permute.xlu0 %382
  %384 = vrot.lane.b32.xlu0 %v266, 64
  %v385 = vpop.permute.xlu0 %384
  %v391 = vsel %vm114, %v374, 0
  %v394 = vsel %vm114, %v375, 0
  %v397 = vsel %vm114, %v376, 0
  %v400 = vsel %vm114, %v377, 0
  %402 = vmatpush.msra.mxu0 0.0
  %403 = vmatpush.msra.mxu0 0.0
  %404 = vmatpush.msra.mxu0 0.0
  %405 = vmatpush.msra.mxu0 0.0
  %406 = vmatpush.msra.mxu0 0.0
  %407 = vmatpush.msra.mxu0 0.0
  %408 = vmatpush.msra.mxu0 0.0
  %409 = vmatpush.msra.mxu0 0.0
  %410 = vmatpush.msra.mxu0 0.0
  %411 = vmatpush.msra.mxu0 0.0
  %412 = vmatpush.msra.mxu0 0.0
  %413 = vmatpush.msra.mxu0 0.0
  %414 = vmatpush.msra.mxu0 %v385
  %415 = vmatpush.msra.mxu0 %v383
  %416 = vmatpush.msra.mxu0 %v381
  %417 = vmatpush.msra.mxu0 %v379
  %418 = vmatmul.f32.gmra.mxu0 %v391
  %v419 = vpop.f32.mrf.mxu0
  %v420 = vadd.f32 0.0, %v419
  %421 = vmatmul.f32.gmra.mxu0 %v394
  %v422 = vpop.f32.mrf.mxu0
  %v423 = vadd.f32 0.0, %v422
  %424 = vmatmul.f32.gmra.mxu0 %v397
  %v425 = vpop.f32.mrf.mxu0
  %v426 = vadd.f32 0.0, %v425
  %427 = vmatmul.f32.gmra.mxu0 %v400
  %v428 = vpop.f32.mrf.mxu0
  %v429 = vadd.f32 0.0, %v428
  %430 = vdwg.mxu0
  %431 = vrot.lane.b32.xlu0 %v268, 120
  %v432 = vpop.permute.xlu0 %431
  %433 = vrot.lane.b32.xlu0 %v269, 120
  %v434 = vpop.permute.xlu0 %433
  %435 = vrot.lane.b32.xlu0 %v270, 120
  %v436 = vpop.permute.xlu0 %435
  %437 = vrot.lane.b32.xlu0 %v271, 120
  %v438 = vpop.permute.xlu0 %437
  %439 = vrot.lane.b32.xlu0 %v257, 88
  %v440 = vpop.permute.xlu0 %439
  %441 = vrot.lane.b32.xlu0 %v260, 88
  %v442 = vpop.permute.xlu0 %441
  %443 = vrot.lane.b32.xlu0 %v263, 88
  %v444 = vpop.permute.xlu0 %443
  %445 = vrot.lane.b32.xlu0 %v266, 88
  %v446 = vpop.permute.xlu0 %445
  %v447 = vsel %vm284, %v432, 0
  %v449 = vsel %vm284, %v434, 0
  %v451 = vsel %vm284, %v436, 0
  %v453 = vsel %vm284, %v438, 0
  %v455 = vsel %vm284, %v440, 0
  %v457 = vsel %vm284, %v442, 0
  %v459 = vsel %vm284, %v444, 0
  %v461 = vsel %vm284, %v446, 0
  %463 = vmatpush.xpose.msra.mxu0 0.0
  %464 = vmatpush.xpose.msra.mxu0 0.0
  %465 = vmatpush.xpose.msra.mxu0 0.0
  %466 = vmatpush.xpose.msra.mxu0 0.0
  %467 = vmatpush.xpose.msra.mxu0 0.0
  %468 = vmatpush.xpose.msra.mxu0 0.0
  %469 = vmatpush.xpose.msra.mxu0 0.0
  %470 = vmatpush.xpose.msra.mxu0 0.0
  %471 = vmatpush.xpose.msra.mxu0 0.0
  %472 = vmatpush.xpose.msra.mxu0 0.0
  %473 = vmatpush.xpose.msra.mxu0 0.0
  %474 = vmatpush.xpose.msra.mxu0 0.0
  %475 = vmatpush.xpose.msra.mxu0 %v461
  %476 = vmatpush.xpose.msra.mxu0 %v459
  %477 = vmatpush.xpose.msra.mxu0 %v457
  %478 = vmatpush.xpose.msra.mxu0 %v455
  %479 = vmatmul.f32.gmra.mxu0 %v447
  %v480 = vpop.f32.mrf.mxu0
  %v481 = vadd.f32 %v82, %v480
  %482 = vmatmul.f32.gmra.mxu0 %v449
  %v483 = vpop.f32.mrf.mxu0
  %v484 = vadd.f32 %v83, %v483
  %485 = vmatmul.f32.gmra.mxu0 %v451
  %v486 = vpop.f32.mrf.mxu0
  %v487 = vadd.f32 %v84, %v486
  %488 = vmatmul.f32.gmra.mxu0 %v453
  %v489 = vpop.f32.mrf.mxu0
  %v490 = vadd.f32 %v85, %v489
  %491 = vdwg.mxu0
  %v492 = vsel %vm114, %v481, -inf
  %493 = vmax.xlane.f32.xlu0 %v492
  %v494 = vpop.xlane.xlu0 %493
  %v495 = vsel %vm114, %v484, -inf
  %496 = vmax.xlane.f32.xlu0 %v495
  %v497 = vpop.xlane.xlu0 %496
  %v498 = vsel %vm114, %v487, -inf
  %499 = vmax.xlane.f32.xlu0 %v498
  %v500 = vpop.xlane.xlu0 %499
  %v501 = vsel %vm114, %v490, -inf
  %502 = vmax.xlane.f32.xlu0 %v501
  %v503 = vpop.xlane.xlu0 %502
  %v504 = vsub.f32 %v481, %v494
  %v505 = vsub.f32 %v484, %v497
  %v506 = vsub.f32 %v487, %v500
  %v507 = vsub.f32 %v490, %v503
  %v508 = vmul.f32 %v504, 1.442695
  %v509 = vpow.pop %v508
  %v510 = vmul.f32 %v505, 1.442695
  %v511 = vpow.pop %v510
  %v512 = vmul.f32 %v506, 1.442695
  %v513 = vpow.pop %v512
  %v514 = vmul.f32 %v507, 1.442695
  %v515 = vpow.pop %v514
  %v516 = vsel %vm114, %v509, 0.0
  %517 = vadd.xlane.f32.xlu0 %v516
  %v518 = vpop.xlane.xlu0 %517
  %v519 = vsel %vm114, %v511, 0.0
  %520 = vadd.xlane.f32.xlu0 %v519
  %v521 = vpop.xlane.xlu0 %520
  %v522 = vsel %vm114, %v513, 0.0
  %523 = vadd.xlane.f32.xlu0 %v522
  %v524 = vpop.xlane.xlu0 %523
  %v525 = vsel %vm114, %v515, 0.0
  %526 = vadd.xlane.f32.xlu0 %v525
  %v527 = vpop.xlane.xlu0 %526
  %v528 = vrcp.pop %v518
  %v529 = vrcp.pop %v521
  %v530 = vrcp.pop %v524
  %v531 = vrcp.pop %v527
  %v532 = vmul.f32 %v509, %v528
  %v533 = vmul.f32 %v511, %v529
  %v534 = vmul.f32 %v513, %v530
  %v535 = vmul.f32 %v515, %v531
  %536 = vrot.lane.b32.xlu0 %v257, 56
  %v537 = vpop.permute.xlu0 %536
  %538 = vrot.lane.b32.xlu0 %v260, 56
  %v539 = vpop.permute.xlu0 %538
  %540 = vrot.lane.b32.xlu0 %v263, 56
  %v541 = vpop.permute.xlu0 %540
  %542 = vrot.lane.b32.xlu0 %v266, 56
  %v543 = vpop.permute.xlu0 %542
  %v549 = vsel %vm114, %v532, 0
  %v552 = vsel %vm114, %v533, 0
  %v555 = vsel %vm114, %v534, 0
  %v558 = vsel %vm114, %v535, 0
  %560 = vmatpush.msra.mxu0 0.0
  %561 = vmatpush.msra.mxu0 0.0
  %562 = vmatpush.msra.mxu0 0.0
  %563 = vmatpush.msra.mxu0 0.0
  %564 = vmatpush.msra.mxu0 0.0
  %565 = vmatpush.msra.mxu0 0.0
  %566 = vmatpush.msra.mxu0 0.0
  %567 = vmatpush.msra.mxu0 0.0
  %568 = vmatpush.msra.mxu0 0.0
  %569 = vmatpush.msra.mxu0 0.0
  %570 = vmatpush.msra.mxu0 0.0
  %571 = vmatpush.msra.mxu0 0.0
  %572 = vmatpush.msra.mxu0 %v543
  %573 = vmatpush.msra.mxu0 %v541
  %574 = vmatpush.msra.mxu0 %v539
  %575 = vmatpush.msra.mxu0 %v537
  %576 = vmatmul.f32.gmra.mxu0 %v549
  %v577 = vpop.f32.mrf.mxu0
  %v578 = vadd.f32 0.0, %v577
  %579 = vmatmul.f32.gmra.mxu0 %v552
  %v580 = vpop.f32.mrf.mxu0
  %v581 = vadd.f32 0.0, %v580
  %582 = vmatmul.f32.gmra.mxu0 %v555
  %v583 = vpop.f32.mrf.mxu0
  %v584 = vadd.f32 0.0, %v583
  %585 = vmatmul.f32.gmra.mxu0 %v558
  %v586 = vpop.f32.mrf.mxu0
  %v587 = vadd.f32 0.0, %v586
  %588 = vdwg.mxu0
  %589 = vrot.lane.b32.xlu0 %v268, 112
  %v590 = vpop.permute.xlu0 %589
  %591 = vrot.lane.b32.xlu0 %v269, 112
  %v592 = vpop.permute.xlu0 %591
  %593 = vrot.lane.b32.xlu0 %v270, 112
  %v594 = vpop.permute.xlu0 %593
  %595 = vrot.lane.b32.xlu0 %v271, 112
  %v596 = vpop.permute.xlu0 %595
  %597 = vrot.lane.b32.xlu0 %v257, 80
  %v598 = vpop.permute.xlu0 %597
  %599 = vrot.lane.b32.xlu0 %v260, 80
  %v600 = vpop.permute.xlu0 %599
  %601 = vrot.lane.b32.xlu0 %v263, 80
  %v602 = vpop.permute.xlu0 %601
  %603 = vrot.lane.b32.xlu0 %v266, 80
  %v604 = vpop.permute.xlu0 %603
  %v605 = vsel %vm284, %v590, 0
  %v607 = vsel %vm284, %v592, 0
  %v609 = vsel %vm284, %v594, 0
  %v611 = vsel %vm284, %v596, 0
  %v613 = vsel %vm284, %v598, 0
  %v615 = vsel %vm284, %v600, 0
  %v617 = vsel %vm284, %v602, 0
  %v619 = vsel %vm284, %v604, 0
  %621 = vmatpush.xpose.msra.mxu0 0.0
  %622 = vmatpush.xpose.msra.mxu0 0.0
  %623 = vmatpush.xpose.msra.mxu0 0.0
  %624 = vmatpush.xpose.msra.mxu0 0.0
  %625 = vmatpush.xpose.msra.mxu0 0.0
  %626 = vmatpush.xpose.msra.mxu0 0.0
  %627 = vmatpush.xpose.msra.mxu0 0.0
  %628 = vmatpush.xpose.msra.mxu0 0.0
  %629 = vmatpush.xpose.msra.mxu0 0.0
  %630 = vmatpush.xpose.msra.mxu0 0.0
  %631 = vmatpush.xpose.msra.mxu0 0.0
  %632 = vmatpush.xpose.msra.mxu0 0.0
  %633 = vmatpush.xpose.msra.mxu0 %v619
  %634 = vmatpush.xpose.msra.mxu0 %v617
  %635 = vmatpush.xpose.msra.mxu0 %v615
  %636 = vmatpush.xpose.msra.mxu0 %v613
  %637 = vmatmul.f32.gmra.mxu0 %v605
  %v638 = vpop.f32.mrf.mxu0
  %v639 = vadd.f32 %v82, %v638
  %640 = vmatmul.f32.gmra.mxu0 %v607
  %v641 = vpop.f32.mrf.mxu0
  %v642 = vadd.f32 %v83, %v641
  %643 = vmatmul.f32.gmra.mxu0 %v609
  %v644 = vpop.f32.mrf.mxu0
  %v645 = vadd.f32 %v84, %v644
  %646 = vmatmul.f32.gmra.mxu0 %v611
  %v647 = vpop.f32.mrf.mxu0
  %v648 = vadd.f32 %v85, %v647
  %649 = vdwg.mxu0
  %v650 = vsel %vm114, %v639, -inf
  %651 = vmax.xlane.f32.xlu0 %v650
  %v652 = vpop.xlane.xlu0 %651
  %v653 = vsel %vm114, %v642, -inf
  %654 = vmax.xlane.f32.xlu0 %v653
  %v655 = vpop.xlane.xlu0 %654
  %v656 = vsel %vm114, %v645, -inf
  %657 = vmax.xlane.f32.xlu0 %v656
  %v658 = vpop.xlane.xlu0 %657
  %v659 = vsel %vm114, %v648, -inf
  %660 = vmax.xlane.f32.xlu0 %v659
  %v661 = vpop.xlane.xlu0 %660
  %v662 = vsub.f32 %v639, %v652
  %v663 = vsub.f32 %v642, %v655
  %v664 = vsub.f32 %v645, %v658
  %v665 = vsub.f32 %v648, %v661
  %v666 = vmul.f32 %v662, 1.442695
  %v667 = vpow.pop %v666
  %v668 = vmul.f32 %v663, 1.442695
  %v669 = vpow.pop %v668
  %v670 = vmul.f32 %v664, 1.442695
  %v671 = vpow.pop %v670
  %v672 = vmul.f32 %v665, 1.442695
  %v673 = vpow.pop %v672
  %v674 = vsel %vm114, %v667, 0.0
  %675 = vadd.xlane.f32.xlu0 %v674
  %v676 = vpop.xlane.xlu0 %675
  %v677 = vsel %vm114, %v669, 0.0
  %678 = vadd.xlane.f32.xlu0 %v677
  %v679 = vpop.xlane.xlu0 %678
  %v680 = vsel %vm114, %v671, 0.0
  %681 = vadd.xlane.f32.xlu0 %v680
  %v682 = vpop.xlane.xlu0 %681
  %v683 = vsel %vm114, %v673, 0.0
  %684 = vadd.xlane.f32.xlu0 %v683
  %v685 = vpop.xlane.xlu0 %684
  %v686 = vrcp.pop %v676
  %v687 = vrcp.pop %v679
  %v688 = vrcp.pop %v682
  %v689 = vrcp.pop %v685
  %v690 = vmul.f32 %v667, %v686
  %v691 = vmul.f32 %v669, %v687
  %v692 = vmul.f32 %v671, %v688
  %v693 = vmul.f32 %v673, %v689
  %694 = vrot.lane.b32.xlu0 %v257, 48
  %v695 = vpop.permute.xlu0 %694
  %696 = vrot.lane.b32.xlu0 %v260, 48
  %v697 = vpop.permute.xlu0 %696
  %698 = vrot.lane.b32.xlu0 %v263, 48
  %v699 = vpop.permute.xlu0 %698
  %700 = vrot.lane.b32.xlu0 %v266, 48
  %v701 = vpop.permute.xlu0 %700
  %v707 = vsel %vm114, %v690, 0
  %v710 = vsel %vm114, %v691, 0
  %v713 = vsel %vm114, %v692, 0
  %v716 = vsel %vm114, %v693, 0
  %718 = vmatpush.msra.mxu0 0.0
  %719 = vmatpush.msra.mxu0 0.0
  %720 = vmatpush.msra.mxu0 0.0
  %721 = vmatpush.msra.mxu0 0.0
  %722 = vmatpush.msra.mxu0 0.0
  %723 = vmatpush.msra.mxu0 0.0
  %724 = vmatpush.msra.mxu0 0.0
  %725 = vmatpush.msra.mxu0 0.0
  %726 = vmatpush.msra.mxu0 0.0
  %727 = vmatpush.msra.mxu0 0.0
  %728 = vmatpush.msra.mxu0 0.0
  %729 = vmatpush.msra.mxu0 0.0
  %730 = vmatpush.msra.mxu0 %v701
  %731 = vmatpush.msra.mxu0 %v699
  %732 = vmatpush.msra.mxu0 %v697
  %733 = vmatpush.msra.mxu0 %v695
  %734 = vmatmul.f32.gmra.mxu0 %v707
  %v735 = vpop.f32.mrf.mxu0
  %v736 = vadd.f32 0.0, %v735
  %737 = vmatmul.f32.gmra.mxu0 %v710
  %v738 = vpop.f32.mrf.mxu0
  %v739 = vadd.f32 0.0, %v738
  %740 = vmatmul.f32.gmra.mxu0 %v713
  %v741 = vpop.f32.mrf.mxu0
  %v742 = vadd.f32 0.0, %v741
  %743 = vmatmul.f32.gmra.mxu0 %v716
  %v744 = vpop.f32.mrf.mxu0
  %v745 = vadd.f32 0.0, %v744
  %746 = vdwg.mxu0
  %747 = vrot.lane.b32.xlu0 %v268, 104
  %v748 = vpop.permute.xlu0 %747
  %749 = vrot.lane.b32.xlu0 %v269, 104
  %v750 = vpop.permute.xlu0 %749
  %751 = vrot.lane.b32.xlu0 %v270, 104
  %v752 = vpop.permute.xlu0 %751
  %753 = vrot.lane.b32.xlu0 %v271, 104
  %v754 = vpop.permute.xlu0 %753
  %755 = vrot.lane.b32.xlu0 %v257, 72
  %v756 = vpop.permute.xlu0 %755
  %757 = vrot.lane.b32.xlu0 %v260, 72
  %v758 = vpop.permute.xlu0 %757
  %759 = vrot.lane.b32.xlu0 %v263, 72
  %v760 = vpop.permute.xlu0 %759
  %761 = vrot.lane.b32.xlu0 %v266, 72
  %v762 = vpop.permute.xlu0 %761
  %v763 = vsel %vm284, %v748, 0
  %v765 = vsel %vm284, %v750, 0
  %v767 = vsel %vm284, %v752, 0
  %v769 = vsel %vm284, %v754, 0
  %v771 = vsel %vm284, %v756, 0
  %v773 = vsel %vm284, %v758, 0
  %v775 = vsel %vm284, %v760, 0
  %v777 = vsel %vm284, %v762, 0
  %779 = vmatpush.xpose.msra.mxu0 0.0
  %780 = vmatpush.xpose.msra.mxu0 0.0
  %781 = vmatpush.xpose.msra.mxu0 0.0
  %782 = vmatpush.xpose.msra.mxu0 0.0
  %783 = vmatpush.xpose.msra.mxu0 0.0
  %784 = vmatpush.xpose.msra.mxu0 0.0
  %785 = vmatpush.xpose.msra.mxu0 0.0
  %786 = vmatpush.xpose.msra.mxu0 0.0
  %787 = vmatpush.xpose.msra.mxu0 0.0
  %788 = vmatpush.xpose.msra.mxu0 0.0
  %789 = vmatpush.xpose.msra.mxu0 0.0
  %790 = vmatpush.xpose.msra.mxu0 0.0
  %791 = vmatpush.xpose.msra.mxu0 %v777
  %792 = vmatpush.xpose.msra.mxu0 %v775
  %793 = vmatpush.xpose.msra.mxu0 %v773
  %794 = vmatpush.xpose.msra.mxu0 %v771
  %795 = vmatmul.f32.gmra.mxu0 %v763
  %v796 = vpop.f32.mrf.mxu0
  %v797 = vadd.f32 %v82, %v796
  %798 = vmatmul.f32.gmra.mxu0 %v765
  %v799 = vpop.f32.mrf.mxu0
  %v800 = vadd.f32 %v83, %v799
  %801 = vmatmul.f32.gmra.mxu0 %v767
  %v802 = vpop.f32.mrf.mxu0
  %v803 = vadd.f32 %v84, %v802
  %804 = vmatmul.f32.gmra.mxu0 %v769
  %v805 = vpop.f32.mrf.mxu0
  %v806 = vadd.f32 %v85, %v805
  %807 = vdwg.mxu0
  %v808 = vsel %vm114, %v797, -inf
  %809 = vmax.xlane.f32.xlu0 %v808
  %v810 = vpop.xlane.xlu0 %809
  %v811 = vsel %vm114, %v800, -inf
  %812 = vmax.xlane.f32.xlu0 %v811
  %v813 = vpop.xlane.xlu0 %812
  %v814 = vsel %vm114, %v803, -inf
  %815 = vmax.xlane.f32.xlu0 %v814
  %v816 = vpop.xlane.xlu0 %815
  %v817 = vsel %vm114, %v806, -inf
  %818 = vmax.xlane.f32.xlu0 %v817
  %v819 = vpop.xlane.xlu0 %818
  %v820 = vsub.f32 %v797, %v810
  %v821 = vsub.f32 %v800, %v813
  %v822 = vsub.f32 %v803, %v816
  %v823 = vsub.f32 %v806, %v819
  %v824 = vmul.f32 %v820, 1.442695
  %v825 = vpow.pop %v824
  %v826 = vmul.f32 %v821, 1.442695
  %v827 = vpow.pop %v826
  %v828 = vmul.f32 %v822, 1.442695
  %v829 = vpow.pop %v828
  %v830 = vmul.f32 %v823, 1.442695
  %v831 = vpow.pop %v830
  %v832 = vsel %vm114, %v825, 0.0
  %833 = vadd.xlane.f32.xlu0 %v832
  %v834 = vpop.xlane.xlu0 %833
  %v835 = vsel %vm114, %v827, 0.0
  %836 = vadd.xlane.f32.xlu0 %v835
  %v837 = vpop.xlane.xlu0 %836
  %v838 = vsel %vm114, %v829, 0.0
  %839 = vadd.xlane.f32.xlu0 %v838
  %v840 = vpop.xlane.xlu0 %839
  %v841 = vsel %vm114, %v831, 0.0
  %842 = vadd.xlane.f32.xlu0 %v841
  %v843 = vpop.xlane.xlu0 %842
  %v844 = vrcp.pop %v834
  %v845 = vrcp.pop %v837
  %v846 = vrcp.pop %v840
  %v847 = vrcp.pop %v843
  %v848 = vmul.f32 %v825, %v844
  %v849 = vmul.f32 %v827, %v845
  %v850 = vmul.f32 %v829, %v846
  %v851 = vmul.f32 %v831, %v847
  %852 = vrot.lane.b32.xlu0 %v257, 40
  %v853 = vpop.permute.xlu0 %852
  %854 = vrot.lane.b32.xlu0 %v260, 40
  %v855 = vpop.permute.xlu0 %854
  %856 = vrot.lane.b32.xlu0 %v263, 40
  %v857 = vpop.permute.xlu0 %856
  %858 = vrot.lane.b32.xlu0 %v266, 40
  %v859 = vpop.permute.xlu0 %858
  %v865 = vsel %vm114, %v848, 0
  %v868 = vsel %vm114, %v849, 0
  %v871 = vsel %vm114, %v850, 0
  %v874 = vsel %vm114, %v851, 0
  %876 = vmatpush.msra.mxu0 0.0
  %877 = vmatpush.msra.mxu0 0.0
  %878 = vmatpush.msra.mxu0 0.0
  %879 = vmatpush.msra.mxu0 0.0
  %880 = vmatpush.msra.mxu0 0.0
  %881 = vmatpush.msra.mxu0 0.0
  %882 = vmatpush.msra.mxu0 0.0
  %883 = vmatpush.msra.mxu0 0.0
  %884 = vmatpush.msra.mxu0 0.0
  %885 = vmatpush.msra.mxu0 0.0
  %886 = vmatpush.msra.mxu0 0.0
  %887 = vmatpush.msra.mxu0 0.0
  %888 = vmatpush.msra.mxu0 %v859
  %889 = vmatpush.msra.mxu0 %v857
  %890 = vmatpush.msra.mxu0 %v855
  %891 = vmatpush.msra.mxu0 %v853
  %892 = vmatmul.f32.gmra.mxu0 %v865
  %v893 = vpop.f32.mrf.mxu0
  %v894 = vadd.f32 0.0, %v893
  %895 = vmatmul.f32.gmra.mxu0 %v868
  %v896 = vpop.f32.mrf.mxu0
  %v897 = vadd.f32 0.0, %v896
  %898 = vmatmul.f32.gmra.mxu0 %v871
  %v899 = vpop.f32.mrf.mxu0
  %v900 = vadd.f32 0.0, %v899
  %901 = vmatmul.f32.gmra.mxu0 %v874
  %v902 = vpop.f32.mrf.mxu0
  %v903 = vadd.f32 0.0, %v902
  %904 = vdwg.mxu0
  %909 = vrot.lane.b32.xlu0 %v578, 8
  %v910 = vpop.permute.xlu0 %909
  %911 = vrot.lane.b32.xlu0 %v581, 8
  %v912 = vpop.permute.xlu0 %911
  %913 = vrot.lane.b32.xlu0 %v584, 8
  %v914 = vpop.permute.xlu0 %913
  %915 = vrot.lane.b32.xlu0 %v587, 8
  %v916 = vpop.permute.xlu0 %915
  %925 = vrot.lane.b32.xlu0 %v736, 16
  %v926 = vpop.permute.xlu0 %925
  %927 = vrot.lane.b32.xlu0 %v739, 16
  %v928 = vpop.permute.xlu0 %927
  %929 = vrot.lane.b32.xlu0 %v742, 16
  %v930 = vpop.permute.xlu0 %929
  %931 = vrot.lane.b32.xlu0 %v745, 16
  %v932 = vpop.permute.xlu0 %931
  %941 = vrot.lane.b32.xlu0 %v894, 24
  %v942 = vpop.permute.xlu0 %941
  %943 = vrot.lane.b32.xlu0 %v897, 24
  %v944 = vpop.permute.xlu0 %943
  %945 = vrot.lane.b32.xlu0 %v900, 24
  %v946 = vpop.permute.xlu0 %945
  %947 = vrot.lane.b32.xlu0 %v903, 24
  %v948 = vpop.permute.xlu0 %947
  %v953 = vsel %vm284, %v420, %v910
  %v954 = vsel %vm284, %v423, %v912
  %v955 = vsel %vm284, %v426, %v914
  %v956 = vsel %vm284, %v429, %v916
  %vm957 = vcmask 130048
  %v958 = vsel %vm957, %v953, %v926
  %v959 = vsel %vm957, %v954, %v928
  %v960 = vsel %vm957, %v955, %v930
  %v961 = vsel %vm957, %v956, %v932
  %vm962 = vcmask 195584
  %v963 = vsel %vm962, %v958, %v942
  %v964 = vsel %vm962, %v959, %v944
  %v965 = vsel %vm962, %v960, %v946
  %v966 = vsel %vm962, %v961, %v948
  %v968 = vsel %vm114, %v963, 0
  %v971 = vsel %vm114, %v964, 0
  %v974 = vsel %vm114, %v965, 0
  %v977 = vsel %vm114, %v966, 0
  %979 = vmatpush.msra.mxu0 0.0
  %980 = vmatpush.msra.mxu0 0.0
  %981 = vmatpush.msra.mxu0 0.0
  %982 = vmatpush.msra.mxu0 0.0
  %983 = vmatpush.msra.mxu0 0.0
  %984 = vmatpush.msra.mxu0 0.0
  %985 = vmatpush.msra.mxu0 0.0
  %986 = vmatpush.msra.mxu0 0.0
  %987 = vmatpush.msra.mxu0 0.0
  %988 = vmatpush.msra.mxu0 0.0
  %989 = vmatpush.msra.mxu0 0.0
  %990 = vmatpush.msra.mxu0 0.0
  %991 = vmatpush.msra.mxu0 %v96
  %992 = vmatpush.msra.mxu0 %v95
  %993 = vmatpush.msra.mxu0 %v94
  %994 = vmatpush.msra.mxu0 %v93
  %995 = vmatmul.f32.gmra.mxu0 %v968
  %v996 = vpop.f32.mrf.mxu0
  %v997 = vadd.f32 0.0, %v996
  %998 = vmatmul.f32.gmra.mxu0 %v971
  %v999 = vpop.f32.mrf.mxu0
  %v1000 = vadd.f32 0.0, %v999
  %1001 = vmatmul.f32.gmra.mxu0 %v974
  %v1002 = vpop.f32.mrf.mxu0
  %v1003 = vadd.f32 0.0, %v1002
  %1004 = vmatmul.f32.gmra.mxu0 %v977
  %v1005 = vpop.f32.mrf.mxu0
  %v1006 = vadd.f32 0.0, %v1005
  %1007 = vdwg.mxu0
  %v1008 = vadd.f32 %v61, %v997
  %v1009 = vadd.f32 %v62, %v1000
  %v1010 = vadd.f32 %v63, %v1003
  %v1011 = vadd.f32 %v64, %v1006
  %v1013 = vperm.slane %v97, 0
  %v1015 = vadd.f32 %v1008, %v1013
  %v1016 = vadd.f32 %v1009, %v1013
  %v1017 = vadd.f32 %v1010, %v1013
  %v1018 = vadd.f32 %v1011, %v1013
  %v1019 = vsel %vm114, %v1015, 0.0
  %1020 = vadd.xlane.f32.xlu0 %v1019
  %v1021 = vpop.xlane.xlu0 %1020
  %v1022 = vsel %vm114, %v1016, 0.0
  %1023 = vadd.xlane.f32.xlu0 %v1022
  %v1024 = vpop.xlane.xlu0 %1023
  %v1025 = vsel %vm114, %v1017, 0.0
  %1026 = vadd.xlane.f32.xlu0 %v1025
  %v1027 = vpop.xlane.xlu0 %1026
  %v1028 = vsel %vm114, %v1018, 0.0
  %1029 = vadd.xlane.f32.xlu0 %v1028
  %v1030 = vpop.xlane.xlu0 %1029
  %v1031 = vmul.f32 %v1021, %v133
  %v1032 = vmul.f32 %v1024, %v133
  %v1033 = vmul.f32 %v1027, %v133
  %v1034 = vmul.f32 %v1030, %v133
  %v1035 = vsub.f32 %v1015, %v1031
  %v1036 = vsub.f32 %v1016, %v1032
  %v1037 = vsub.f32 %v1017, %v1033
  %v1038 = vsub.f32 %v1018, %v1034
  %v1039 = vmul.f32 %v1035, %v1035
  %v1040 = vmul.f32 %v1036, %v1036
  %v1041 = vmul.f32 %v1037, %v1037
  %v1042 = vmul.f32 %v1038, %v1038
  %v1043 = vsel %vm114, %v1039, 0.0
  %1044 = vadd.xlane.f32.xlu0 %v1043
  %v1045 = vpop.xlane.xlu0 %1044
  %v1046 = vsel %vm114, %v1040, 0.0
  %1047 = vadd.xlane.f32.xlu0 %v1046
  %v1048 = vpop.xlane.xlu0 %1047
  %v1049 = vsel %vm114, %v1041, 0.0
  %1050 = vadd.xlane.f32.xlu0 %v1049
  %v1051 = vpop.xlane.xlu0 %1050
  %v1052 = vsel %vm114, %v1042, 0.0
  %1053 = vadd.xlane.f32.xlu0 %v1052
  %v1054 = vpop.xlane.xlu0 %1053
  %v1055 = vmul.f32 %v1045, %v133
  %v1056 = vmul.f32 %v1048, %v133
  %v1057 = vmul.f32 %v1051, %v133
  %v1058 = vmul.f32 %v1054, %v133
  %v1059 = vadd.f32 %v1055, 1e-05
  %v1060 = vadd.f32 %v1056, 1e-05
  %v1061 = vadd.f32 %v1057, 1e-05
  %v1062 = vadd.f32 %v1058, 1e-05
  %v1063 = vrsqrt.pop %v1059
  %v1064 = vmul.f32 %v1063, %v1059
  %v1065 = vmul.f32 %v1064, %v1063
  %v1066 = vmul.f32 0.5, %v1065
  %v1067 = vsub.f32 1.5, %v1066
  %v1068 = vmul.f32 %v1063, %v1067
  %vm1069 = vweird.f32 %v1059
  %vm1070 = vweird.f32 %v1063
  %vm1071 = vmor %vm1069, %vm1070
  %v1072 = vsel %vm1071, %v1063, %v1068
  %v1073 = vrsqrt.pop %v1060
  %v1074 = vmul.f32 %v1073, %v1060
  %v1075 = vmul.f32 %v1074, %v1073
  %v1076 = vmul.f32 0.5, %v1075
  %v1077 = vsub.f32 1.5, %v1076
  %v1078 = vmul.f32 %v1073, %v1077
  %vm1079 = vweird.f32 %v1060
  %vm1080 = vweird.f32 %v1073
  %vm1081 = vmor %vm1079, %vm1080
  %v1082 = vsel %vm1081, %v1073, %v1078
  %v1083 = vrsqrt.pop %v1061
  %v1084 = vmul.f32 %v1083, %v1061
  %v1085 = vmul.f32 %v1084, %v1083
  %v1086 = vmul.f32 0.5, %v1085
  %v1087 = vsub.f32 1.5, %v1086
  %v1088 = vmul.f32 %v1083, %v1087
  %vm1089 = vweird.f32 %v1061
  %vm1090 = vweird.f32 %v1083
  %vm1091 = vmor %vm1089, %vm1090
  %v1092 = vsel %vm1091, %v1083, %v1088
  %v1093 = vrsqrt.pop %v1062
  %v1094 = vmul.f32 %v1093, %v1062
  %v1095 = vmul.f32 %v1094, %v1093
  %v1096 = vmul.f32 0.5, %v1095
  %v1097 = vsub.f32 1.5, %v1096
  %v1098 = vmul.f32 %v1093, %v1097
  %vm1099 = vweird.f32 %v1062
  %vm1100 = vweird.f32 %v1093
  %vm1101 = vmor %vm1099, %vm1100
  %v1102 = vsel %vm1101, %v1093, %v1098
  %v1103 = vmul.f32 %v1035, %v1072
  %v1104 = vmul.f32 %v1036, %v1082
  %v1105 = vmul.f32 %v1037, %v1092
  %v1106 = vmul.f32 %v1038, %v1102
  %v1108 = vperm.slane %v98, 0
  %v1110 = vmul.f32 %v1103, %v1108
  %v1111 = vmul.f32 %v1104, %v1108
  %v1112 = vmul.f32 %v1105, %v1108
  %v1113 = vmul.f32 %v1106, %v1108
  %v1115 = vperm.slane %v99, 0
  %v1117 = vadd.f32 %v1110, %v1115
  %v1118 = vadd.f32 %v1111, %v1115
  %v1119 = vadd.f32 %v1112, %v1115
  %v1120 = vadd.f32 %v1113, %v1115
  %v1122 = vperm.slane %v104, 0
  %v1125 = vsel %vm114, %v1117, 0
  %v1128 = vsel %vm114, %v1118, 0
  %v1131 = vsel %vm114, %v1119, 0
  %v1134 = vsel %vm114, %v1120, 0
  %1136 = vmatpush.msra.mxu0 0.0
  %1137 = vmatpush.msra.mxu0 0.0
  %1138 = vmatpush.msra.mxu0 0.0
  %1139 = vmatpush.msra.mxu0 0.0
  %1140 = vmatpush.msra.mxu0 0.0
  %1141 = vmatpush.msra.mxu0 0.0
  %1142 = vmatpush.msra.mxu0 0.0
  %1143 = vmatpush.msra.mxu0 0.0
  %1144 = vmatpush.msra.mxu0 0.0
  %1145 = vmatpush.msra.mxu0 0.0
  %1146 = vmatpush.msra.mxu0 0.0
  %1147 = vmatpush.msra.mxu0 0.0
  %1148 = vmatpush.msra.mxu0 %v103
  %1149 = vmatpush.msra.mxu0 %v102
  %1150 = vmatpush.msra.mxu0 %v101
  %1151 = vmatpush.msra.mxu0 %v100
  %1152 = vmatmul.f32.gmra.mxu0 %v1125
  %v1153 = vpop.f32.mrf.mxu0
  %v1154 = vadd.f32 %v1122, %v1153
  %1155 = vmatmul.f32.gmra.mxu0 %v1128
  %v1156 = vpop.f32.mrf.mxu0
  %v1157 = vadd.f32 %v1122, %v1156
  %1158 = vmatmul.f32.gmra.mxu0 %v1131
  %v1159 = vpop.f32.mrf.mxu0
  %v1160 = vadd.f32 %v1122, %v1159
  %1161 = vmatmul.f32.gmra.mxu0 %v1134
  %v1162 = vpop.f32.mrf.mxu0
  %v1163 = vadd.f32 %v1122, %v1162
  %1164 = vdwg.mxu0
  %v1165 = vmul.f32 %v1154, %v1154
  %v1166 = vmul.f32 %v1157, %v1157
  %v1167 = vmul.f32 %v1160, %v1160
  %v1168 = vmul.f32 %v1163, %v1163
  %v1169 = vmul.f32 %v1154, %v1165
  %v1170 = vmul.f32 %v1157, %v1166
  %v1171 = vmul.f32 %v1160, %v1167
  %v1172 = vmul.f32 %v1163, %v1168
  %v1173 = vmul.f32 %v1169, 0.044715
  %v1174 = vmul.f32 %v1170, 0.044715
  %v1175 = vmul.f32 %v1171, 0.044715
  %v1176 = vmul.f32 %v1172, 0.044715
  %v1177 = vadd.f32 %v1154, %v1173
  %v1178 = vadd.f32 %v1157, %v1174
  %v1179 = vadd.f32 %v1160, %v1175
  %v1180 = vadd.f32 %v1163, %v1176
  %v1181 = vmul.f32 %v1177, 0.7978846
  %v1182 = vmul.f32 %v1178, 0.7978846
  %v1183 = vmul.f32 %v1179, 0.7978846
  %v1184 = vmul.f32 %v1180, 0.7978846
  %v1185 = vtanh.pop %v1181
  %v1186 = vtanh.pop %v1182
  %v1187 = vtanh.pop %v1183
  %v1188 = vtanh.pop %v1184
  %v1189 = vadd.f32 %v1185, 1.0
  %v1190 = vadd.f32 %v1186, 1.0
  %v1191 = vadd.f32 %v1187, 1.0
  %v1192 = vadd.f32 %v1188, 1.0
  %v1193 = vmul.f32 %v1189, 0.5
  %v1194 = vmul.f32 %v1190, 0.5
  %v1195 = vmul.f32 %v1191, 0.5
  %v1196 = vmul.f32 %v1192, 0.5
  %v1197 = vmul.f32 %v1154, %v1193
  %v1198 = vmul.f32 %v1157, %v1194
  %v1199 = vmul.f32 %v1160, %v1195
  %v1200 = vmul.f32 %v1163, %v1196
  %vm1201 = vcmask 523264
  %v1203 = vsel %vm1201, %v1197, 0
  %v1206 = vsel %vm1201, %v1198, 0
  %v1209 = vsel %vm1201, %v1199, 0
  %v1212 = vsel %vm1201, %v1200, 0
  %1214 = vmatpush.msra.mxu0 0.0
  %1215 = vmatpush.msra.mxu0 0.0
  %1216 = vmatpush.msra.mxu0 0.0
  %1217 = vmatpush.msra.mxu0 0.0
  %1218 = vmatpush.msra.mxu0 0.0
  %1219 = vmatpush.msra.mxu0 0.0
  %1220 = vmatpush.msra.mxu0 0.0
  %1221 = vmatpush.msra.mxu0 0.0
  %1222 = vmatpush.msra.mxu0 %v112
  %1223 = vmatpush.msra.mxu0 %v111
  %1224 = vmatpush.msra.mxu0 %v110
  %1225 = vmatpush.msra.mxu0 %v109
  %1226 = vmatpush.msra.mxu0 %v108
  %1227 = vmatpush.msra.mxu0 %v107
  %1228 = vmatpush.msra.mxu0 %v106
  %1229 = vmatpush.msra.mxu0 %v105
  %1230 = vmatmul.f32.gmra.mxu0 %v1203
  %v1231 = vpop.f32.mrf.mxu0
  %v1232 = vadd.f32 0.0, %v1231
  %1233 = vmatmul.f32.gmra.mxu0 %v1206
  %v1234 = vpop.f32.mrf.mxu0
  %v1235 = vadd.f32 0.0, %v1234
  %1236 = vmatmul.f32.gmra.mxu0 %v1209
  %v1237 = vpop.f32.mrf.mxu0
  %v1238 = vadd.f32 0.0, %v1237
  %1239 = vmatmul.f32.gmra.mxu0 %v1212
  %v1240 = vpop.f32.mrf.mxu0
  %v1241 = vadd.f32 0.0, %v1240
  %1242 = vdwg.mxu0
  %v1243 = vadd.f32 %v1015, %v1232
  %v1244 = vadd.f32 %v1016, %v1235
  %v1245 = vadd.f32 %v1017, %v1238
  %v1246 = vadd.f32 %v1018, %v1241
  %v1248 = vperm.slane %v113, 0
  %v1250 = vadd.f32 %v1243, %v1248
  %v1251 = vadd.f32 %v1244, %v1248
  %v1252 = vadd.f32 %v1245, %v1248
  %v1253 = vadd.f32 %v1246, %v1248
  %v1254 = vld [vmem:[%s14] sm:$0x1]
  %v1255 = vld [vmem:[%s15] sm:$0x1]
  %v1256 = vsel %vm114, %v1250, 0.0
  %1257 = vadd.xlane.f32.xlu0 %v1256
  %v1258 = vpop.xlane.xlu0 %1257
  %v1259 = vsel %vm114, %v1251, 0.0
  %1260 = vadd.xlane.f32.xlu0 %v1259
  %v1261 = vpop.xlane.xlu0 %1260
  %v1262 = vsel %vm114, %v1252, 0.0
  %1263 = vadd.xlane.f32.xlu0 %v1262
  %v1264 = vpop.xlane.xlu0 %1263
  %v1265 = vsel %vm114, %v1253, 0.0
  %1266 = vadd.xlane.f32.xlu0 %v1265
  %v1267 = vpop.xlane.xlu0 %1266
  %v1268 = vmul.f32 %v1258, %v133
  %v1269 = vmul.f32 %v1261, %v133
  %v1270 = vmul.f32 %v1264, %v133
  %v1271 = vmul.f32 %v1267, %v133
  %v1272 = vsub.f32 %v1250, %v1268
  %v1273 = vsub.f32 %v1251, %v1269
  %v1274 = vsub.f32 %v1252, %v1270
  %v1275 = vsub.f32 %v1253, %v1271
  %v1276 = vmul.f32 %v1272, %v1272
  %v1277 = vmul.f32 %v1273, %v1273
  %v1278 = vmul.f32 %v1274, %v1274
  %v1279 = vmul.f32 %v1275, %v1275
  %v1280 = vsel %vm114, %v1276, 0.0
  %1281 = vadd.xlane.f32.xlu0 %v1280
  %v1282 = vpop.xlane.xlu0 %1281
  %v1283 = vsel %vm114, %v1277, 0.0
  %1284 = vadd.xlane.f32.xlu0 %v1283
  %v1285 = vpop.xlane.xlu0 %1284
  %v1286 = vsel %vm114, %v1278, 0.0
  %1287 = vadd.xlane.f32.xlu0 %v1286
  %v1288 = vpop.xlane.xlu0 %1287
  %v1289 = vsel %vm114, %v1279, 0.0
  %1290 = vadd.xlane.f32.xlu0 %v1289
  %v1291 = vpop.xlane.xlu0 %1290
  %v1292 = vmul.f32 %v1282, %v133
  %v1293 = vmul.f32 %v1285, %v133
  %v1294 = vmul.f32 %v1288, %v133
  %v1295 = vmul.f32 %v1291, %v133
  %v1296 = vadd.f32 %v1292, 1e-05
  %v1297 = vadd.f32 %v1293, 1e-05
  %v1298 = vadd.f32 %v1294, 1e-05
  %v1299 = vadd.f32 %v1295, 1e-05
  %v1300 = vrsqrt.pop %v1296
  %v1301 = vmul.f32 %v1300, %v1296
  %v1302 = vmul.f32 %v1301, %v1300
  %v1303 = vmul.f32 0.5, %v1302
  %v1304 = vsub.f32 1.5, %v1303
  %v1305 = vmul.f32 %v1300, %v1304
  %vm1306 = vweird.f32 %v1296
  %vm1307 = vweird.f32 %v1300
  %vm1308 = vmor %vm1306, %vm1307
  %v1309 = vsel %vm1308, %v1300, %v1305
  %v1310 = vrsqrt.pop %v1297
  %v1311 = vmul.f32 %v1310, %v1297
  %v1312 = vmul.f32 %v1311, %v1310
  %v1313 = vmul.f32 0.5, %v1312
  %v1314 = vsub.f32 1.5, %v1313
  %v1315 = vmul.f32 %v1310, %v1314
  %vm1316 = vweird.f32 %v1297
  %vm1317 = vweird.f32 %v1310
  %vm1318 = vmor %vm1316, %vm1317
  %v1319 = vsel %vm1318, %v1310, %v1315
  %v1320 = vrsqrt.pop %v1298
  %v1321 = vmul.f32 %v1320, %v1298
  %v1322 = vmul.f32 %v1321, %v1320
  %v1323 = vmul.f32 0.5, %v1322
  %v1324 = vsub.f32 1.5, %v1323
  %v1325 = vmul.f32 %v1320, %v1324
  %vm1326 = vweird.f32 %v1298
  %vm1327 = vweird.f32 %v1320
  %vm1328 = vmor %vm1326, %vm1327
  %v1329 = vsel %vm1328, %v1320, %v1325
  %v1330 = vrsqrt.pop %v1299
  %v1331 = vmul.f32 %v1330, %v1299
  %v1332 = vmul.f32 %v1331, %v1330
  %v1333 = vmul.f32 0.5, %v1332
  %v1334 = vsub.f32 1.5, %v1333
  %v1335 = vmul.f32 %v1330, %v1334
  %vm1336 = vweird.f32 %v1299
  %vm1337 = vweird.f32 %v1330
  %vm1338 = vmor %vm1336, %vm1337
  %v1339 = vsel %vm1338, %v1330, %v1335
  %v1340 = vmul.f32 %v1272, %v1309
  %v1341 = vmul.f32 %v1273, %v1319
  %v1342 = vmul.f32 %v1274, %v1329
  %v1343 = vmul.f32 %v1275, %v1339
  %v1345 = vperm.slane %v1254, 0
  %v1347 = vmul.f32 %v1340, %v1345
  %v1348 = vmul.f32 %v1341, %v1345
  %v1349 = vmul.f32 %v1342, %v1345
  %v1350 = vmul.f32 %v1343, %v1345
  %v1352 = vperm.slane %v1255, 0
  %v1354 = vadd.f32 %v1347, %v1352
  %v1355 = vadd.f32 %v1348, %v1352
  %v1356 = vadd.f32 %v1349, %v1352
  %v1357 = vadd.f32 %v1350, %v1352
  %s1358 = ssub.s32 %s60, 1
  %v1359 = vstv %s1358
  %vm1360 = vcmp.eq.s32.totalorder %v66, %v1359
  %vm1361 = vcmp.eq.s32.totalorder %v67, %v1359
  %vm1362 = vcmp.eq.s32.totalorder %v68, %v1359
  %vm1363 = vcmp.eq.s32.totalorder %v69, %v1359
  %v1364 = vsel %vm1360, 1, 0
  %v1365 = vsel %vm1361, 1, 0
  %v1366 = vsel %vm1362, 1, 0
  %v1367 = vsel %vm1363, 1, 0
  %v1368 = vcvt.s32.f32 %v1364
  %v1369 = vcvt.s32.f32 %v1365
  %v1370 = vcvt.s32.f32 %v1366
  %v1371 = vcvt.s32.f32 %v1367
  %v1372 = vmul.f32 %v1354, %v1368
  %v1373 = vmul.f32 %v1355, %v1369
  %v1374 = vmul.f32 %v1356, %v1370
  %v1375 = vmul.f32 %v1357, %v1371
  %v1376 = vsel %vm114, %v1372, 0.0
  %v1377 = vsel %vm114, %v1373, 0.0
  %v1378 = vadd.f32 %v1376, %v1377
  %v1379 = vsel %vm114, %v1374, 0.0
  %v1380 = vadd.f32 %v1378, %v1379
  %v1381 = vsel %vm114, %v1375, 0.0
  %v1382 = vadd.f32 %v1380, %v1381
  %v1383 = vrot.slane %v1382, 4
  %v1384 = vadd.f32 %v1382, %v1383
  %v1385 = vrot.slane %v1384, 2
  %v1386 = vadd.f32 %v1384, %v1385
  %v1387 = vrot.slane %v1386, 1
  %v1388 = vadd.f32 %v1386, %v1387
  %v1389 = vld [vmem:[%s16] sm:$0xff]
  %v1390 = vld [vmem:[%s16 + $0x8] sm:$0xff]
  %v1391 = vld [vmem:[%s16 + $0x10] sm:$0xff]
  %v1392 = vld [vmem:[%s16 + $0x18] sm:$0xff]
  %v1393 = vld [vmem:[%s17] sm:$0x1]
  %v1395 = vsel %vm114, %v1388, 0
  %1397 = vmatpush.msra.mxu0 0.0
  %1398 = vmatpush.msra.mxu0 0.0
  %1399 = vmatpush.msra.mxu0 0.0
  %1400 = vmatpush.msra.mxu0 0.0
  %1401 = vmatpush.msra.mxu0 0.0
  %1402 = vmatpush.msra.mxu0 0.0
  %1403 = vmatpush.msra.mxu0 0.0
  %1404 = vmatpush.msra.mxu0 0.0
  %1405 = vmatpush.msra.mxu0 0.0
  %1406 = vmatpush.msra.mxu0 0.0
  %1407 = vmatpush.msra.mxu0 0.0
  %1408 = vmatpush.msra.mxu0 0.0
  %1409 = vmatpush.msra.mxu0 %v1392
  %1410 = vmatpush.msra.mxu0 %v1391
  %1411 = vmatpush.msra.mxu0 %v1390
  %1412 = vmatpush.msra.mxu0 %v1389
  %1413 = vmatmul.f32.gmra.mxu0 %v1395
  %v1414 = vpop.f32.mrf.mxu0
  %v1415 = vadd.f32 %v1393, %v1414
  %1416 = vdwg.mxu0
  %vm1417 = vcmask 516096
  %1418 = vst.msk [vmem:[%s18] sm:$0x1] %vm1417, %v1415
  // Predicated region
  $region74: #{closed_call.31} parent=0 // pred_check
    _
  $region75: #{closed_call.31} parent=0 // pred_check_branch
    %1420 = sbr.rel (0) target = $region77
  $region76: #{closed_call.31} parent=0 // pred_region
    _
  $region77: #{closed_call.31} parent=0 // pred_fallthru
    _
  // Predicated region
  $region78: #{closed_call.31} parent=0 // pred_check
    _
  $region79: #{closed_call.31} parent=0 // pred_check_branch
    %1422 = sbr.rel (0) target = $region81
  $region80: #{closed_call.31} parent=0 // pred_region
    _
  $region81: #{closed_call.31} parent=0 // pred_fallthru
    _

</llo_original>
